<compile_context>
chip_gen: v6e
topology: v6e:2x2x1
jax: 0.10.0
libtpu: 0.0.40
codegen_flags: <defaults>
</compile_context>

<pallas_src>
import jax
import jax.numpy as jnp
from jax import lax
from jax.experimental import pallas as pl
from jax.experimental.pallas import tpu as pltpu


# ----------------------------------------------------------------------------
# Pallas kernel: full SEBottleneck forward for a block of Bt batch images.
# ----------------------------------------------------------------------------
def se_bottleneck_kernel(x_ref, w1_ref, b1_ref, w2_ref, b2_ref,
                         w3_ref, b3_ref, wse1_ref, wse2_ref,
                         o_ref, pad_ref):
    Bt, H, W, Cin = x_ref.shape            # Cin is the lane-padded channel dim
    HW = H * W
    M = Bt * HW
    Cw = w2_ref.shape[1]                   # padded conv2 width
    Co = w3_ref.shape[1]                   # padded output channels
    halo = (pad_ref.shape[0] - M) // 2     # zero rows above/below h1 in scratch

    # ---- conv1 (1x1, BN scale pre-folded into w1) + bias + relu --------------
    x2d = x_ref[...].reshape(M, Cin)                       # bf16, lane-dense
    h1 = jnp.dot(x2d, w1_ref[...], preferred_element_type=jnp.float32)
    h1 = jnp.maximum(h1 + b1_ref[...], 0.0)                # (M, Cw) f32

    # ---- conv2 (3x3, pad=1) as ONE fused im2col matmul ------------------------
    # Spatial shifts come from offset reads of a flat halo scratch (pure
    # load-slot work, no MXU); boundary / cross-image rows are zeroed with
    # iota-derived masks; the 9 taps are lane-concatenated into an (M, 9*Cw)
    # buffer and hit the MXU once with K = 9*Cw.
    pad_ref[pl.ds(0, halo), :] = jnp.zeros((halo, Cw), jnp.float32)
    pad_ref[pl.ds(halo + M, halo), :] = jnp.zeros((halo, Cw), jnp.float32)
    pad_ref[pl.ds(halo, M), :] = h1

    # Per-row (h, w) indices, computed in f32 (exact for these magnitudes).
    posf = jax.lax.broadcasted_iota(jnp.int32, (M, 1), 0).astype(jnp.float32)
    rowf = jnp.floor(posf / float(W))                      # b*H + h
    wwf = posf - rowf * float(W)                           # w in [0, W)
    hhf = rowf - jnp.floor(rowf / float(H)) * float(H)     # h in [0, H)

    taps = []
    for dy in (-1, 0, 1):                  # tap order matches w2 packing (kh major)
        for dx in (-1, 0, 1):
            off = dy * W + dx
            if off == 0:
                t_val = h1                                  # center tap: reuse h1
            else:
                t_val = pad_ref[pl.ds(halo + off, M), :]
            conds = []
            if dy < 0:
                conds.append(hhf >= float(-dy))
            if dy > 0:
                conds.append(hhf < float(H - dy))
            if dx < 0:
                conds.append(wwf >= float(-dx))
            if dx > 0:
                conds.append(wwf < float(W - dx))
            if conds:
                v = conds[0]
                for c in conds[1:]:
                    v = jnp.logical_and(v, c)
                t_val = jnp.where(v, t_val, 0.0)
            taps.append(t_val.astype(jnp.bfloat16))
    im2col = jnp.concatenate(taps, axis=1)                  # (M, 9*Cw) bf16

    h2 = jnp.dot(im2col, w2_ref[...], preferred_element_type=jnp.float32)
    h2 = jnp.maximum(h2 + b2_ref[...], 0.0).astype(jnp.bfloat16)

    # ---- conv3 (1x1, BN scale pre-folded into w3) + bias ----------------------
    out3 = jnp.dot(h2, w3_ref[...], preferred_element_type=jnp.float32)
    out3 = out3 + b3_ref[...]                               # (M, Co) f32

    # ---- SE: per-image global avg pool -> fc -> relu -> fc -> sigmoid ---------
    out3_b = out3.reshape(Bt, HW, Co)
    pooled = jnp.mean(out3_b, axis=1)                       # (Bt, Co)
    y = jnp.dot(pooled.astype(jnp.bfloat16), wse1_ref[...],
                preferred_element_type=jnp.float32)
    y = jnp.maximum(y, 0.0)
    y = jax.nn.sigmoid(jnp.dot(y.astype(jnp.bfloat16), wse2_ref[...],
                               preferred_element_type=jnp.float32))
    # (Padded SE lanes give sigmoid(0)=0.5 but multiply zero activations — OK.)

    # ---- channel-wise rescale + residual add + relu, bf16 lane-dense store ----
    res = x2d.astype(jnp.float32).reshape(Bt, HW, Cin)      # reuse loaded x block
    out = out3_b * y[:, None, :] + res
    o_ref[...] = jnp.maximum(out, 0.0).reshape(Bt, H, W, Co).astype(o_ref.dtype)


# ----------------------------------------------------------------------------
# Wrapper helpers: lane padding, BN folding, w2 im2col packing.
# ----------------------------------------------------------------------------
def _round_up(n, m=128):
    return ((n + m - 1) // m) * m


def _pad2d(a, rows, cols):
    return jnp.pad(a, ((0, rows - a.shape[0]), (0, cols - a.shape[1])))


def fold_and_pad_params(raw):
    """Fold BN (eval) into conv weights/biases, pad channel dims to multiples
    of 128 for lane density, pack w2 as a (9*Cw_p, Cw_p) im2col weight, cast
    matmul weights to bf16."""
    eps = raw["eps"]

    def fold(bn):
        g, b, m, v = bn
        scale = g / jnp.sqrt(v + eps)
        return scale, b - m * scale

    s1, b1 = fold(raw["bn1"])
    s2, b2 = fold(raw["bn2"])
    s3, b3 = fold(raw["bn3"])

    width = raw["w2_oihw"].shape[0]
    w1 = jnp.transpose(raw["w1_oihw"][:, :, 0, 0], (1, 0)) * s1[None, :]
    w2 = (jnp.transpose(raw["w2_oihw"], (2, 3, 1, 0)).reshape(9, width, width)
          * s2[None, None, :])                                # tap t = kh*3 + kw
    w3 = jnp.transpose(raw["w3_oihw"][:, :, 0, 0], (1, 0)) * s3[None, :]
    wse1 = raw["wfc1"].T                   # (Cout, Cr)
    wse2 = raw["wfc2"].T                   # (Cr, Cout)

    Cin, _ = w1.shape
    Cout = w3.shape[1]
    Cr = wse1.shape[1]
    Cin_p, Wd_p, Co_p, Cr_p = (_round_up(Cin), _round_up(width),
                               _round_up(Cout), _round_up(Cr))

    # Pack the 3x3 weights for the fused K = 9*Cw matmul (tap-major along K,
    # each tap block padded to Wd_p rows to match the kernel's lane concat).
    w2_packed = jnp.concatenate([_pad2d(w2[t], Wd_p, Wd_p) for t in range(9)],
                                axis=0).astype(jnp.bfloat16)   # (9*Wd_p, Wd_p)

    return dict(
        w1=_pad2d(w1, Cin_p, Wd_p).astype(jnp.bfloat16),
        b1=_pad2d(b1[None, :], 1, Wd_p),
        w2=w2_packed,
        b2=_pad2d(b2[None, :], 1, Wd_p),
        w3=_pad2d(w3, Wd_p, Co_p).astype(jnp.bfloat16),
        b3=_pad2d(b3[None, :], 1, Co_p),
        wse1=_pad2d(wse1, Co_p, Cr_p).astype(jnp.bfloat16),
        wse2=_pad2d(wse2, Cr_p, Co_p).astype(jnp.bfloat16),
        cout=Cout,
    )


# ----------------------------------------------------------------------------
# Wrapper: NCHW in / NCHW out (PyTorch convention); kernel runs padded NHWC.
# ----------------------------------------------------------------------------
def se_bottleneck_forward(x_nchw, kp):
    B, Cin, H, W = x_nchw.shape
    Cin_p, Wd_p = kp["w1"].shape
    Co_p = kp["w3"].shape[1]
    Cr_p = kp["wse1"].shape[1]
    Cout = kp["cout"]
    # downsample=None path: residual is added elementwise.
    assert Cin == Cout, "SEBottleneck with downsample=None needs inplanes == planes*4"

    # NCHW -> NHWC, zero-pad channels to a lane-dense multiple of 128, bf16.
    x = jnp.transpose(x_nchw, (0, 2, 3, 1))
    x = jnp.pad(x, ((0, 0), (0, 0), (0, 0), (0, Cin_p - Cin))).astype(jnp.bfloat16)

    # Fold several images into the matmul M dimension per grid step.
    # Target ~1024 rows per step to feed the 256-wide MXUs (v6e/v7x), but keep
    # the grid >= 2 steps whenever B >= 2 so v7x's two TensorCores both work.
    HW = H * W
    target_rows = 1024
    max_bt = max(1, target_rows // HW)
    if B >= 2:
        max_bt = min(max_bt, B // 2)
    Bt = 1
    for d in range(1, B + 1):
        if B % d == 0 and d <= max_bt:
            Bt = d
    M = Bt * HW
    halo = ((W + 1 + 7) // 8) * 8          # >= W+1, multiple of 8 (aligned stores)

    grid_spec = pltpu.PrefetchScalarGridSpec(
        num_scalar_prefetch=0,
        grid=(B // Bt,),
        in_specs=[
            pl.BlockSpec((Bt, H, W, Cin_p), lambda b: (b, 0, 0, 0)),
            pl.BlockSpec((Cin_p, Wd_p), lambda b: (0, 0)),
            pl.BlockSpec((1, Wd_p), lambda b: (0, 0)),
            pl.BlockSpec((9 * Wd_p, Wd_p), lambda b: (0, 0)),
            pl.BlockSpec((1, Wd_p), lambda b: (0, 0)),
            pl.BlockSpec((Wd_p, Co_p), lambda b: (0, 0)),
            pl.BlockSpec((1, Co_p), lambda b: (0, 0)),
            pl.BlockSpec((Co_p, Cr_p), lambda b: (0, 0)),
            pl.BlockSpec((Cr_p, Co_p), lambda b: (0, 0)),
        ],
        out_specs=pl.BlockSpec((Bt, H, W, Co_p), lambda b: (b, 0, 0, 0)),
        scratch_shapes=[pltpu.VMEM((M + 2 * halo, Wd_p), jnp.float32)],
    )

    out = pl.pallas_call(
        se_bottleneck_kernel,
        out_shape=jax.ShapeDtypeStruct((B, H, W, Co_p), jnp.bfloat16),
        grid_spec=grid_spec,
        compiler_params=pltpu.CompilerParams(
            dimension_semantics=("parallel",),
            # VMEM use is linear in M now; 32 MiB keeps headroom even on
            # v7x's 64 MiB physical / 32 MiB default-scoped budget.
            vmem_limit_bytes=32 * 1024 * 1024),
    )(x, kp["w1"], kp["b1"], kp["w2"], kp["b2"],
      kp["w3"], kp["b3"], kp["wse1"], kp["wse2"])

    # Drop channel padding, back to NCHW, f32 at the PyTorch-facing boundary.
    return jnp.transpose(out[..., :Cout].astype(jnp.float32), (0, 3, 1, 2))


# ----------------------------------------------------------------------------
# Deterministic parameter construction (PyTorch layouts, f32).
# ----------------------------------------------------------------------------
def make_params(key, inplanes, planes, base_width=64, groups=1, reduction=16):
    width = int(planes * (base_width / 64.0)) * groups
    cout = planes * 4
    cr = cout // reduction
    eps = 1e-5

    ks = jax.random.split(key, 20)

    def conv_w(k, shape, fan_in):
        return jax.random.normal(k, shape, jnp.float32) / jnp.sqrt(float(fan_in))

    w1_oihw = conv_w(ks[0], (width, inplanes, 1, 1), inplanes)
    w2_oihw = conv_w(ks[1], (width, width, 3, 3), width * 9)
    w3_oihw = conv_w(ks[2], (cout, width, 1, 1), width)
    wfc1 = conv_w(ks[3], (cr, cout), cout)      # Linear(cout -> cr), no bias
    wfc2 = conv_w(ks[4], (cout, cr), cr)        # Linear(cr -> cout), no bias

    def bn(kg, kb, km, kv, c):
        gamma = 1.0 + 0.1 * jax.random.normal(kg, (c,), jnp.float32)
        beta = 0.1 * jax.random.normal(kb, (c,), jnp.float32)
        mean = 0.1 * jax.random.normal(km, (c,), jnp.float32)
        var = jax.nn.softplus(jax.random.normal(kv, (c,), jnp.float32)) + 0.5
        return gamma, beta, mean, var

    return dict(
        w1_oihw=w1_oihw, w2_oihw=w2_oihw, w3_oihw=w3_oihw,
        wfc1=wfc1, wfc2=wfc2,
        bn1=bn(ks[5], ks[6], ks[7], ks[8], width),
        bn2=bn(ks[9], ks[10], ks[11], ks[12], width),
        bn3=bn(ks[13], ks[14], ks[15], ks[16], cout),
        eps=eps,
    )


# ----------------------------------------------------------------------------
# Pure-JAX f32 reference (lax.conv, NCHW) for correctness checking.
# ----------------------------------------------------------------------------
def ref_forward(x, raw):
    eps = raw["eps"]
    dn = ("NCHW", "OIHW", "NCHW")

    def bn_apply(y, p):
        g, b, m, v = [t.reshape(1, -1, 1, 1) for t in p]
        return (y - m) / jnp.sqrt(v + eps) * g + b

    out = lax.conv_general_dilated(x, raw["w1_oihw"], (1, 1), "VALID",
                                   dimension_numbers=dn)
    out = jax.nn.relu(bn_apply(out, raw["bn1"]))
    out = lax.conv_general_dilated(out, raw["w2_oihw"], (1, 1),
                                   ((1, 1), (1, 1)), dimension_numbers=dn)
    out = jax.nn.relu(bn_apply(out, raw["bn2"]))
    out = lax.conv_general_dilated(out, raw["w3_oihw"], (1, 1), "VALID",
                                   dimension_numbers=dn)
    out = bn_apply(out, raw["bn3"])
    y = jnp.mean(out, axis=(2, 3))                       # (B, Cout)
    y = jax.nn.relu(y @ raw["wfc1"].T)
    y = jax.nn.sigmoid(y @ raw["wfc2"].T)
    out = out * y[:, :, None, None]
    return jax.nn.relu(out + x)


if __name__ == "__main__":
    # inplanes must equal planes*4 since downsample=None (residual add).
    B, inplanes, planes, H, W = 2, 64, 16, 16, 16

    key = jax.random.PRNGKey(0)
    kx, kparam = jax.random.split(key)
    x = jax.random.normal(kx, (B, inplanes, H, W), jnp.float32)

    raw = make_params(kparam, inplanes, planes)
    kp = fold_and_pad_params(raw)

    out = jax.block_until_ready(se_bottleneck_forward(x, kp))
    ref = jax.block_until_ready(ref_forward(x, raw))

    assert out.shape == ref.shape == (B, planes * 4, H, W)
    # bf16 MXU operands + bf16 output store => a few-percent tolerance
    # (reference is pure f32).
    assert jnp.allclose(out, ref, rtol=5e-2, atol=5e-2), (
        float(jnp.max(jnp.abs(out - ref))))

    print("KERNEL_OK")
</pallas_src>

<mosaic_0001>
module attributes {stable_mosaic.version = 11 : i64} {
  func.func @se_bottleneck_kernel(%arg0: i32, %arg1: memref<1x16x16x128xbf16, #tpu.memory_space<vmem>>, %arg2: memref<128x128xbf16, #tpu.memory_space<vmem>>, %arg3: memref<1x128xf32, #tpu.memory_space<vmem>>, %arg4: memref<1152x128xbf16, #tpu.memory_space<vmem>>, %arg5: memref<1x128xf32, #tpu.memory_space<vmem>>, %arg6: memref<128x128xbf16, #tpu.memory_space<vmem>>, %arg7: memref<1x128xf32, #tpu.memory_space<vmem>>, %arg8: memref<128x128xbf16, #tpu.memory_space<vmem>>, %arg9: memref<128x128xbf16, #tpu.memory_space<vmem>>, %arg10: memref<1x16x16x128xbf16, #tpu.memory_space<vmem>>, %arg11: memref<304x128xf32, #tpu.memory_space<vmem>>) attributes {dimension_semantics = [#tpu.dimension_semantics<parallel>], iteration_bounds = array<i64: 2>, scalar_prefetch = 0 : i64, scratch_operands = 1 : i64, tpu.core_type = #tpu.core_type<tc>, window_params = [{transform_indices = @transform_0, window_bounds = array<i64: 1, 16, 16, 128>}, {pipeline_mode = #tpu.pipeline_mode<synchronous>, transform_indices = @transform_1, window_bounds = array<i64: 128, 128>}, {pipeline_mode = #tpu.pipeline_mode<synchronous>, transform_indices = @transform_2, window_bounds = array<i64: 1, 128>}, {pipeline_mode = #tpu.pipeline_mode<synchronous>, transform_indices = @transform_3, window_bounds = array<i64: 1152, 128>}, {pipeline_mode = #tpu.pipeline_mode<synchronous>, transform_indices = @transform_4, window_bounds = array<i64: 1, 128>}, {pipeline_mode = #tpu.pipeline_mode<synchronous>, transform_indices = @transform_5, window_bounds = array<i64: 128, 128>}, {pipeline_mode = #tpu.pipeline_mode<synchronous>, transform_indices = @transform_6, window_bounds = array<i64: 1, 128>}, {pipeline_mode = #tpu.pipeline_mode<synchronous>, transform_indices = @transform_7, window_bounds = array<i64: 128, 128>}, {pipeline_mode = #tpu.pipeline_mode<synchronous>, transform_indices = @transform_8, window_bounds = array<i64: 128, 128>}, {transform_indices = @transform_9, window_bounds = array<i64: 1, 16, 16, 128>}]} {
    %c0 = arith.constant 0 : index
    %c0_0 = arith.constant 0 : index
    %c0_1 = arith.constant 0 : index
    %c0_2 = arith.constant 0 : index
    %0 = vector.load %arg1[%c0, %c0_0, %c0_1, %c0_2] : memref<1x16x16x128xbf16, #tpu.memory_space<vmem>>, vector<1x16x16x128xbf16>
    %1 = vector.shape_cast %0 : vector<1x16x16x128xbf16> to vector<256x128xbf16>
    %c0_3 = arith.constant 0 : index
    %c0_4 = arith.constant 0 : index
    %2 = vector.load %arg2[%c0_3, %c0_4] : memref<128x128xbf16, #tpu.memory_space<vmem>>, vector<128x128xbf16>
    %cst = arith.constant dense<0.000000e+00> : vector<256x128xf32>
    %3 = tpu.matmul %1, %2, %cst {dimension_numbers = #tpu.dot_dimension_numbers<[1], [0], [0], [1], [0, 0, 1, 1], [], []>} : vector<256x128xbf16>, vector<128x128xbf16>, vector<256x128xf32> -> vector<256x128xf32>
    %c0_5 = arith.constant 0 : index
    %c0_6 = arith.constant 0 : index
    %4 = vector.load %arg3[%c0_5, %c0_6] : memref<1x128xf32, #tpu.memory_space<vmem>>, vector<1x128xf32>
    %5 = vector.broadcast %4 : vector<1x128xf32> to vector<256x128xf32>
    %6 = arith.addf %3, %5 : vector<256x128xf32>
    %cst_7 = arith.constant 0.000000e+00 : f32
    %7 = vector.broadcast %cst_7 : f32 to vector<256x128xf32>
    %8 = arith.maximumf %6, %7 : vector<256x128xf32>
    %cst_8 = arith.constant 0.000000e+00 : f32
    %9 = vector.broadcast %cst_8 : f32 to vector<24x128xf32>
    %c0_9 = arith.constant 0 : index
    %c0_10 = arith.constant 0 : index
    %10 = vector.load %arg11[%c0_9, %c0_10] : memref<304x128xf32, #tpu.memory_space<vmem>>, vector<24x128xf32>
    tpu.vector_store %arg11[%c0_9, %c0_10], %9 {strides = array<i32>} : memref<304x128xf32, #tpu.memory_space<vmem>>, vector<24x128xf32>,
    %cst_11 = arith.constant 0.000000e+00 : f32
    %11 = vector.broadcast %cst_11 : f32 to vector<24x128xf32>
    %c280 = arith.constant 280 : index
    %c0_12 = arith.constant 0 : index
    %12 = vector.load %arg11[%c280, %c0_12] : memref<304x128xf32, #tpu.memory_space<vmem>>, vector<24x128xf32>
    tpu.vector_store %arg11[%c280, %c0_12], %11 {strides = array<i32>} : memref<304x128xf32, #tpu.memory_space<vmem>>, vector<24x128xf32>,
    %c24 = arith.constant 24 : index
    %c0_13 = arith.constant 0 : index
    %13 = vector.load %arg11[%c24, %c0_13] : memref<304x128xf32, #tpu.memory_space<vmem>>, vector<256x128xf32>
    tpu.vector_store %arg11[%c24, %c0_13], %8 {strides = array<i32>} : memref<304x128xf32, #tpu.memory_space<vmem>>, vector<256x128xf32>,
    %14 = tpu.iota {dimensions = array<i32: 0>} : vector<256x1xi32>
    %15 = arith.sitofp %14 : vector<256x1xi32> to vector<256x1xf32>
    %cst_14 = arith.constant 1.600000e+01 : f32
    %16 = vector.broadcast %cst_14 : f32 to vector<256x1xf32>
    %17 = arith.divf %15, %16 : vector<256x1xf32>
    %18 = math.floor %17 : vector<256x1xf32>
    %cst_15 = arith.constant 1.600000e+01 : f32
    %19 = vector.broadcast %cst_15 : f32 to vector<256x1xf32>
    %20 = arith.mulf %18, %19 : vector<256x1xf32>
    %21 = arith.subf %15, %20 : vector<256x1xf32>
    %cst_16 = arith.constant 1.600000e+01 : f32
    %22 = vector.broadcast %cst_16 : f32 to vector<256x1xf32>
    %23 = arith.divf %18, %22 : vector<256x1xf32>
    %24 = math.floor %23 : vector<256x1xf32>
    %cst_17 = arith.constant 1.600000e+01 : f32
    %25 = vector.broadcast %cst_17 : f32 to vector<256x1xf32>
    %26 = arith.mulf %24, %25 : vector<256x1xf32>
    %27 = arith.subf %18, %26 : vector<256x1xf32>
    %c7 = arith.constant 7 : index
    %c0_18 = arith.constant 0 : index
    %28 = vector.load %arg11[%c7, %c0_18] : memref<304x128xf32, #tpu.memory_space<vmem>>, vector<256x128xf32>
    %cst_19 = arith.constant 1.000000e+00 : f32
    %29 = vector.broadcast %cst_19 : f32 to vector<256x1xf32>
    %30 = arith.cmpf oge, %27, %29 : vector<256x1xf32>
    %cst_20 = arith.constant 1.000000e+00 : f32
    %31 = vector.broadcast %cst_20 : f32 to vector<256x1xf32>
    %32 = arith.cmpf oge, %21, %31 : vector<256x1xf32>
    %33 = arith.andi %30, %32 : vector<256x1xi1>
    %cst_21 = arith.constant 0.000000e+00 : f32
    %34 = vector.shape_cast %33 : vector<256x1xi1> to vector<256x1xi1>
    %35 = vector.broadcast %34 : vector<256x1xi1> to vector<256x128xi1>
    %36 = vector.broadcast %cst_21 : f32 to vector<256x128xf32>
    %37 = arith.select %35, %28, %36 : vector<256x128xi1>, vector<256x128xf32>
    %38 = arith.truncf %37 : vector<256x128xf32> to vector<256x128xbf16>
    %c8 = arith.constant 8 : index
    %c0_22 = arith.constant 0 : index
    %39 = vector.load %arg11[%c8, %c0_22] : memref<304x128xf32, #tpu.memory_space<vmem>>, vector<256x128xf32>
    %cst_23 = arith.constant 1.000000e+00 : f32
    %40 = vector.broadcast %cst_23 : f32 to vector<256x1xf32>
    %41 = arith.cmpf oge, %27, %40 : vector<256x1xf32>
    %cst_24 = arith.constant 0.000000e+00 : f32
    %42 = vector.shape_cast %41 : vector<256x1xi1> to vector<256x1xi1>
    %43 = vector.broadcast %42 : vector<256x1xi1> to vector<256x128xi1>
    %44 = vector.broadcast %cst_24 : f32 to vector<256x128xf32>
    %45 = arith.select %43, %39, %44 : vector<256x128xi1>, vector<256x128xf32>
    %46 = arith.truncf %45 : vector<256x128xf32> to vector<256x128xbf16>
    %c9 = arith.constant 9 : index
    %c0_25 = arith.constant 0 : index
    %47 = vector.load %arg11[%c9, %c0_25] : memref<304x128xf32, #tpu.memory_space<vmem>>, vector<256x128xf32>
    %cst_26 = arith.constant 1.000000e+00 : f32
    %48 = vector.broadcast %cst_26 : f32 to vector<256x1xf32>
    %49 = arith.cmpf oge, %27, %48 : vector<256x1xf32>
    %cst_27 = arith.constant 1.500000e+01 : f32
    %50 = vector.broadcast %cst_27 : f32 to vector<256x1xf32>
    %51 = arith.cmpf olt, %21, %50 : vector<256x1xf32>
    %52 = arith.andi %49, %51 : vector<256x1xi1>
    %cst_28 = arith.constant 0.000000e+00 : f32
    %53 = vector.shape_cast %52 : vector<256x1xi1> to vector<256x1xi1>
    %54 = vector.broadcast %53 : vector<256x1xi1> to vector<256x128xi1>
    %55 = vector.broadcast %cst_28 : f32 to vector<256x128xf32>
    %56 = arith.select %54, %47, %55 : vector<256x128xi1>, vector<256x128xf32>
    %57 = arith.truncf %56 : vector<256x128xf32> to vector<256x128xbf16>
    %c23 = arith.constant 23 : index
    %c0_29 = arith.constant 0 : index
    %58 = vector.load %arg11[%c23, %c0_29] : memref<304x128xf32, #tpu.memory_space<vmem>>, vector<256x128xf32>
    %cst_30 = arith.constant 1.000000e+00 : f32
    %59 = vector.broadcast %cst_30 : f32 to vector<256x1xf32>
    %60 = arith.cmpf oge, %21, %59 : vector<256x1xf32>
    %cst_31 = arith.constant 0.000000e+00 : f32
    %61 = vector.shape_cast %60 : vector<256x1xi1> to vector<256x1xi1>
    %62 = vector.broadcast %61 : vector<256x1xi1> to vector<256x128xi1>
    %63 = vector.broadcast %cst_31 : f32 to vector<256x128xf32>
    %64 = arith.select %62, %58, %63 : vector<256x128xi1>, vector<256x128xf32>
    %65 = arith.truncf %64 : vector<256x128xf32> to vector<256x128xbf16>
    %66 = arith.truncf %8 : vector<256x128xf32> to vector<256x128xbf16>
    %c25 = arith.constant 25 : index
    %c0_32 = arith.constant 0 : index
    %67 = vector.load %arg11[%c25, %c0_32] : memref<304x128xf32, #tpu.memory_space<vmem>>, vector<256x128xf32>
    %cst_33 = arith.constant 1.500000e+01 : f32
    %68 = vector.broadcast %cst_33 : f32 to vector<256x1xf32>
    %69 = arith.cmpf olt, %21, %68 : vector<256x1xf32>
    %cst_34 = arith.constant 0.000000e+00 : f32
    %70 = vector.shape_cast %69 : vector<256x1xi1> to vector<256x1xi1>
    %71 = vector.broadcast %70 : vector<256x1xi1> to vector<256x128xi1>
    %72 = vector.broadcast %cst_34 : f32 to vector<256x128xf32>
    %73 = arith.select %71, %67, %72 : vector<256x128xi1>, vector<256x128xf32>
    %74 = arith.truncf %73 : vector<256x128xf32> to vector<256x128xbf16>
    %c39 = arith.constant 39 : index
    %c0_35 = arith.constant 0 : index
    %75 = vector.load %arg11[%c39, %c0_35] : memref<304x128xf32, #tpu.memory_space<vmem>>, vector<256x128xf32>
    %cst_36 = arith.constant 1.500000e+01 : f32
    %76 = vector.broadcast %cst_36 : f32 to vector<256x1xf32>
    %77 = arith.cmpf olt, %27, %76 : vector<256x1xf32>
    %cst_37 = arith.constant 1.000000e+00 : f32
    %78 = vector.broadcast %cst_37 : f32 to vector<256x1xf32>
    %79 = arith.cmpf oge, %21, %78 : vector<256x1xf32>
    %80 = arith.andi %77, %79 : vector<256x1xi1>
    %cst_38 = arith.constant 0.000000e+00 : f32
    %81 = vector.shape_cast %80 : vector<256x1xi1> to vector<256x1xi1>
    %82 = vector.broadcast %81 : vector<256x1xi1> to vector<256x128xi1>
    %83 = vector.broadcast %cst_38 : f32 to vector<256x128xf32>
    %84 = arith.select %82, %75, %83 : vector<256x128xi1>, vector<256x128xf32>
    %85 = arith.truncf %84 : vector<256x128xf32> to vector<256x128xbf16>
    %c40 = arith.constant 40 : index
    %c0_39 = arith.constant 0 : index
    %86 = vector.load %arg11[%c40, %c0_39] : memref<304x128xf32, #tpu.memory_space<vmem>>, vector<256x128xf32>
    %cst_40 = arith.constant 1.500000e+01 : f32
    %87 = vector.broadcast %cst_40 : f32 to vector<256x1xf32>
    %88 = arith.cmpf olt, %27, %87 : vector<256x1xf32>
    %cst_41 = arith.constant 0.000000e+00 : f32
    %89 = vector.shape_cast %88 : vector<256x1xi1> to vector<256x1xi1>
    %90 = vector.broadcast %89 : vector<256x1xi1> to vector<256x128xi1>
    %91 = vector.broadcast %cst_41 : f32 to vector<256x128xf32>
    %92 = arith.select %90, %86, %91 : vector<256x128xi1>, vector<256x128xf32>
    %93 = arith.truncf %92 : vector<256x128xf32> to vector<256x128xbf16>
    %c41 = arith.constant 41 : index
    %c0_42 = arith.constant 0 : index
    %94 = vector.load %arg11[%c41, %c0_42] : memref<304x128xf32, #tpu.memory_space<vmem>>, vector<256x128xf32>
    %cst_43 = arith.constant 1.500000e+01 : f32
    %95 = vector.broadcast %cst_43 : f32 to vector<256x1xf32>
    %96 = arith.cmpf olt, %27, %95 : vector<256x1xf32>
    %cst_44 = arith.constant 1.500000e+01 : f32
    %97 = vector.broadcast %cst_44 : f32 to vector<256x1xf32>
    %98 = arith.cmpf olt, %21, %97 : vector<256x1xf32>
    %99 = arith.andi %96, %98 : vector<256x1xi1>
    %cst_45 = arith.constant 0.000000e+00 : f32
    %100 = vector.shape_cast %99 : vector<256x1xi1> to vector<256x1xi1>
    %101 = vector.broadcast %100 : vector<256x1xi1> to vector<256x128xi1>
    %102 = vector.broadcast %cst_45 : f32 to vector<256x128xf32>
    %103 = arith.select %101, %94, %102 : vector<256x128xi1>, vector<256x128xf32>
    %104 = arith.truncf %103 : vector<256x128xf32> to vector<256x128xbf16>
    %105 = tpu.concatenate %38, %46, %57, %65, %66, %74, %85, %93, %104 in 1 : vector<256x128xbf16>, vector<256x128xbf16>, vector<256x128xbf16>, vector<256x128xbf16>, vector<256x128xbf16>, vector<256x128xbf16>, vector<256x128xbf16>, vector<256x128xbf16>, vector<256x128xbf16> -> vector<256x1152xbf16>
    %c0_46 = arith.constant 0 : index
    %c0_47 = arith.constant 0 : index
    %106 = vector.load %arg4[%c0_46, %c0_47] : memref<1152x128xbf16, #tpu.memory_space<vmem>>, vector<1152x128xbf16>
    %cst_48 = arith.constant dense<0.000000e+00> : vector<256x128xf32>
    %107 = tpu.matmul %105, %106, %cst_48 {dimension_numbers = #tpu.dot_dimension_numbers<[1], [0], [0], [1], [0, 0, 1, 1], [], []>} : vector<256x1152xbf16>, vector<1152x128xbf16>, vector<256x128xf32> -> vector<256x128xf32>
    %c0_49 = arith.constant 0 : index
    %c0_50 = arith.constant 0 : index
    %108 = vector.load %arg5[%c0_49, %c0_50] : memref<1x128xf32, #tpu.memory_space<vmem>>, vector<1x128xf32>
    %109 = vector.broadcast %108 : vector<1x128xf32> to vector<256x128xf32>
    %110 = arith.addf %107, %109 : vector<256x128xf32>
    %cst_51 = arith.constant 0.000000e+00 : f32
    %111 = vector.broadcast %cst_51 : f32 to vector<256x128xf32>
    %112 = arith.maximumf %110, %111 : vector<256x128xf32>
    %113 = arith.truncf %112 : vector<256x128xf32> to vector<256x128xbf16>
    %c0_52 = arith.constant 0 : index
    %c0_53 = arith.constant 0 : index
    %114 = vector.load %arg6[%c0_52, %c0_53] : memref<128x128xbf16, #tpu.memory_space<vmem>>, vector<128x128xbf16>
    %cst_54 = arith.constant dense<0.000000e+00> : vector<256x128xf32>
    %115 = tpu.matmul %113, %114, %cst_54 {dimension_numbers = #tpu.dot_dimension_numbers<[1], [0], [0], [1], [0, 0, 1, 1], [], []>} : vector<256x128xbf16>, vector<128x128xbf16>, vector<256x128xf32> -> vector<256x128xf32>
    %c0_55 = arith.constant 0 : index
    %c0_56 = arith.constant 0 : index
    %116 = vector.load %arg7[%c0_55, %c0_56] : memref<1x128xf32, #tpu.memory_space<vmem>>, vector<1x128xf32>
    %117 = vector.broadcast %116 : vector<1x128xf32> to vector<256x128xf32>
    %118 = arith.addf %115, %117 : vector<256x128xf32>
    %119 = vector.shape_cast %118 : vector<256x128xf32> to vector<1x256x128xf32>
    %cst_57 = arith.constant dense<0.000000e+00> : vector<1x128xf32>
    %120 = vector.multi_reduction <add>, %119, %cst_57 [1] : vector<1x256x128xf32> to vector<1x128xf32>
    %cst_58 = arith.constant 2.560000e+02 : f32
    %121 = vector.broadcast %cst_58 : f32 to vector<1x128xf32>
    %122 = arith.divf %120, %121 : vector<1x128xf32>
    %123 = arith.truncf %122 : vector<1x128xf32> to vector<1x128xbf16>
    %c0_59 = arith.constant 0 : index
    %c0_60 = arith.constant 0 : index
    %124 = vector.load %arg8[%c0_59, %c0_60] : memref<128x128xbf16, #tpu.memory_space<vmem>>, vector<128x128xbf16>
    %cst_61 = arith.constant dense<0.000000e+00> : vector<1x128xf32>
    %125 = tpu.matmul %123, %124, %cst_61 {dimension_numbers = #tpu.dot_dimension_numbers<[1], [0], [0], [1], [0, 0, 1, 1], [], []>} : vector<1x128xbf16>, vector<128x128xbf16>, vector<1x128xf32> -> vector<1x128xf32>
    %cst_62 = arith.constant 0.000000e+00 : f32
    %126 = vector.broadcast %cst_62 : f32 to vector<1x128xf32>
    %127 = arith.maximumf %125, %126 : vector<1x128xf32>
    %128 = arith.truncf %127 : vector<1x128xf32> to vector<1x128xbf16>
    %c0_63 = arith.constant 0 : index
    %c0_64 = arith.constant 0 : index
    %129 = vector.load %arg9[%c0_63, %c0_64] : memref<128x128xbf16, #tpu.memory_space<vmem>>, vector<128x128xbf16>
    %cst_65 = arith.constant dense<0.000000e+00> : vector<1x128xf32>
    %130 = tpu.matmul %128, %129, %cst_65 {dimension_numbers = #tpu.dot_dimension_numbers<[1], [0], [0], [1], [0, 0, 1, 1], [], []>} : vector<1x128xbf16>, vector<128x128xbf16>, vector<1x128xf32> -> vector<1x128xf32>
    %131 = arith.negf %130 : vector<1x128xf32>
    %132 = math.exp %131 : vector<1x128xf32>
    %cst_66 = arith.constant 1.000000e+00 : f32
    %133 = vector.broadcast %cst_66 : f32 to vector<1x128xf32>
    %134 = arith.addf %133, %132 : vector<1x128xf32>
    %135 = arith.divf %133, %134 : vector<1x128xf32>
    %136 = arith.extf %1 : vector<256x128xbf16> to vector<256x128xf32>
    %137 = vector.shape_cast %136 : vector<256x128xf32> to vector<1x256x128xf32>
    %138 = vector.shape_cast %135 : vector<1x128xf32> to vector<1x1x128xf32>
    %139 = vector.broadcast %138 : vector<1x1x128xf32> to vector<1x256x128xf32>
    %140 = arith.mulf %119, %139 : vector<1x256x128xf32>
    %141 = arith.addf %140, %137 : vector<1x256x128xf32>
    %cst_67 = arith.constant 0.000000e+00 : f32
    %142 = vector.broadcast %cst_67 : f32 to vector<1x256x128xf32>
    %143 = arith.maximumf %141, %142 : vector<1x256x128xf32>
    %144 = vector.shape_cast %143 : vector<1x256x128xf32> to vector<1x16x16x128xf32>
    %145 = arith.truncf %144 : vector<1x16x16x128xf32> to vector<1x16x16x128xbf16>
    %c0_68 = arith.constant 0 : index
    %c0_69 = arith.constant 0 : index
    %c0_70 = arith.constant 0 : index
    %c0_71 = arith.constant 0 : index
    %146 = vector.load %arg10[%c0_68, %c0_69, %c0_70, %c0_71] : memref<1x16x16x128xbf16, #tpu.memory_space<vmem>>, vector<1x16x16x128xbf16>
    tpu.vector_store %arg10[%c0_68, %c0_69, %c0_70, %c0_71], %145 {strides = array<i32>} : memref<1x16x16x128xbf16, #tpu.memory_space<vmem>>, vector<1x16x16x128xbf16>,
    return
  }
  func.func @transform_0(%arg0: i32) -> (i32, i32, i32, i32) {
    %c0_i32 = arith.constant 0 : i32
    %c0_i32_0 = arith.constant 0 : i32
    %c0_i32_1 = arith.constant 0 : i32
    %c0_i32_2 = arith.constant 0 : i32
    return %arg0, %c0_i32, %c0_i32_0, %c0_i32_1 : i32, i32, i32, i32
  }
  func.func @transform_1(%arg0: i32) -> (i32, i32) {
    %c0_i32 = arith.constant 0 : i32
    %c0_i32_0 = arith.constant 0 : i32
    %c0_i32_1 = arith.constant 0 : i32
    return %c0_i32, %c0_i32_0 : i32, i32
  }
  func.func @transform_2(%arg0: i32) -> (i32, i32) {
    %c0_i32 = arith.constant 0 : i32
    %c0_i32_0 = arith.constant 0 : i32
    %c0_i32_1 = arith.constant 0 : i32
    return %c0_i32, %c0_i32_0 : i32, i32
  }
  func.func @transform_3(%arg0: i32) -> (i32, i32) {
    %c0_i32 = arith.constant 0 : i32
    %c0_i32_0 = arith.constant 0 : i32
    %c0_i32_1 = arith.constant 0 : i32
    return %c0_i32, %c0_i32_0 : i32, i32
  }
  func.func @transform_4(%arg0: i32) -> (i32, i32) {
    %c0_i32 = arith.constant 0 : i32
    %c0_i32_0 = arith.constant 0 : i32
    %c0_i32_1 = arith.constant 0 : i32
    return %c0_i32, %c0_i32_0 : i32, i32
  }
  func.func @transform_5(%arg0: i32) -> (i32, i32) {
    %c0_i32 = arith.constant 0 : i32
    %c0_i32_0 = arith.constant 0 : i32
    %c0_i32_1 = arith.constant 0 : i32
    return %c0_i32, %c0_i32_0 : i32, i32
  }
  func.func @transform_6(%arg0: i32) -> (i32, i32) {
    %c0_i32 = arith.constant 0 : i32
    %c0_i32_0 = arith.constant 0 : i32
    %c0_i32_1 = arith.constant 0 : i32
    return %c0_i32, %c0_i32_0 : i32, i32
  }
  func.func @transform_7(%arg0: i32) -> (i32, i32) {
    %c0_i32 = arith.constant 0 : i32
    %c0_i32_0 = arith.constant 0 : i32
    %c0_i32_1 = arith.constant 0 : i32
    return %c0_i32, %c0_i32_0 : i32, i32
  }
  func.func @transform_8(%arg0: i32) -> (i32, i32) {
    %c0_i32 = arith.constant 0 : i32
    %c0_i32_0 = arith.constant 0 : i32
    %c0_i32_1 = arith.constant 0 : i32
    return %c0_i32, %c0_i32_0 : i32, i32
  }
  func.func @transform_9(%arg0: i32) -> (i32, i32, i32, i32) {
    %c0_i32 = arith.constant 0 : i32
    %c0_i32_0 = arith.constant 0 : i32
    %c0_i32_1 = arith.constant 0 : i32
    %c0_i32_2 = arith.constant 0 : i32
    return %arg0, %c0_i32, %c0_i32_0, %c0_i32_1 : i32, i32, i32, i32
  }
}

</mosaic_0001>

<llo_original>
// kernel: tpu_custom_call.1
$region0: #{tpu_custom_call.1}
  #allocation0 [shape = 'u32[]', space=smem, size = 0x4, offset = 0x4, fixed_abs, tag = 'smem constant byte address 0x4 - core index']
  #allocation1 [shape = 'u32[144,128]{1,0:T(1,128)}', space=vmem, size = 0x12000, scoped, tag = 'internal scratch']
  #allocation2 [shape = 'f32[304,128]{1,0:T(8,128)}', space=vmem, size = 0x26000, scoped, tag = 'scratch operand']
  %s0 = inlined_call_operand.hbm [shape: bf16[2,16,16,128], index: 0, kind: input, shape index: {}]
  %s1 = inlined_call_operand.hbm [shape: bf16[128,128], index: 1, kind: input, shape index: {}]
  %s2 = inlined_call_operand.vmem [shape: f32[1,128], index: 2, kind: input, shape index: {}]
  %s3 = inlined_call_operand.hbm [shape: bf16[1152,128], index: 3, kind: input, shape index: {}]
  %s4 = inlined_call_operand.vmem [shape: f32[1,128], index: 4, kind: input, shape index: {}]
  %s5 = inlined_call_operand.hbm [shape: bf16[128,128], index: 5, kind: input, shape index: {}]
  %s6 = inlined_call_operand.vmem [shape: f32[1,128], index: 6, kind: input, shape index: {}]
  %s7 = inlined_call_operand.hbm [shape: bf16[128,128], index: 7, kind: input, shape index: {}]
  %s8 = inlined_call_operand.hbm [shape: bf16[128,128], index: 8, kind: input, shape index: {}]
  %s9 = inlined_call_operand.hbm [shape: bf16[2,16,16,128], index: 9, kind: output, shape index: {}]
  %s10 = sld [smem:[#allocation0]]
  $region93: #{tpu_custom_call.1} parent=0
    _
  %s12 = ssub.s32 1, %s10
  %s13 = scalar_select 0, %s12, %s10
  $region1: #{tpu_custom_call.1} parent=0
    #allocation3 [shape = 'u8[131072]{0}', space=vmem, size = 0x20000, scoped, tag = 'input window, operand 0']
    #allocation4 [shape = 's32[2]{0}', space=sflag, size = 0x8, scoped, tag = 'scoped memory for tpu_custom_call.1']
    #allocation5 [shape = 's32[2]{0}', space=sflag, size = 0x8, scoped, tag = 'scoped memory for tpu_custom_call.1']
    #allocation6 [shape = 'u8[32768]{0}', space=vmem, size = 0x8000, scoped, tag = 'input window, operand 1, single buffered']
    #allocation7 [shape = 's32[1]{0}', space=sflag, size = 0x4, scoped, tag = 'scoped memory for tpu_custom_call.1']
    #allocation8 [shape = 'u8[294912]{0}', space=vmem, size = 0x48000, scoped, tag = 'input window, operand 3, single buffered']
    #allocation9 [shape = 'u8[32768]{0}', space=vmem, size = 0x8000, scoped, tag = 'input window, operand 5, single buffered']
    #allocation10 [shape = 's32[1]{0}', space=sflag, size = 0x4, scoped, tag = 'scoped memory for tpu_custom_call.1']
    #allocation11 [shape = 'u8[32768]{0}', space=vmem, size = 0x8000, scoped, tag = 'input window, operand 7, single buffered']
    #allocation12 [shape = 'u8[32768]{0}', space=vmem, size = 0x8000, scoped, tag = 'input window, operand 8, single buffered']
    #allocation13 [shape = 's32[1]{0}', space=sflag, size = 0x4, scoped, tag = 'scoped memory for tpu_custom_call.1']
    #allocation14 [shape = 'u8[131072]{0}', space=vmem, size = 0x20000, scoped, tag = 'output window, operand 0']
    %14 = vsyncpa [#allocation4], 0
    %s15 = scalar_lea.sflag [#allocation4], 1
    %16 = vsyncpa %s15, 0
    %17 = vsyncpa [#allocation7], 0
    %18 = vsyncpa [#allocation10], 0
    %19 = vsyncpa [#allocation13], 0
    %20 = vsyncpa [#allocation5], 0
    %s21 = scalar_lea.sflag [#allocation5], 1
    %22 = vsyncpa %s21, 0
    loop: start=0, step=1, limit=4
    $region2: #{tpu_custom_call.1} parent=1 // loop_pre_header
      _
    $region3: #{tpu_custom_call.1} parent=1 // loop_header
      %s24 = sphi 0, %s28
      %p25 = scmp.ge.s32.totalorder %s24, 4
      %s34 = sphi 0, %s36
      %s37 = sphi 0, %s34
      %s38 = sphi 0, %s37
      %s54 = sphi 0, %s38
      %s58 = sphi 0, %s58
      %s60 = sphi 0, %s58
      %s61 = sphi 0, %s60
      %s75 = sphi 0, %s61
      %s79 = sphi 0, %s79
      %s81 = sphi 0, %s79
      %s82 = sphi 0, %s81
      %s96 = sphi 0, %s82
      %s100 = sphi 0, %s100
      %s102 = sphi 0, %s100
      %s103 = sphi 0, %s102
      %s117 = sphi 0, %s103
      %s121 = sphi 0, %s121
      %s123 = sphi 0, %s121
      %s124 = sphi 0, %s123
      %s138 = sphi 0, %s124
      %s142 = sphi 0, %s142
      %s144 = sphi 0, %s142
      %s145 = sphi 0, %s144
      %s159 = sphi 0, %s145
      %s163 = sphi 0, %s163
      %s165 = sphi 0, %s163
      %s166 = sphi 0, %s165
      %s180 = sphi 0, %s166
      %s184 = sphi 0, %s184
      %s186 = sphi 0, %s184
      %s187 = sphi 0, %s186
      %s201 = sphi 0, %s187
      %s205 = sphi 0, %s205
      %s207 = sphi 0, %s205
      %s208 = sphi 0, %s207
      %s222 = sphi 0, %s208
      %s228 = sphi 0, %s230
      %s231 = sphi 0, %s228
      %s232 = sphi 0, %s231
      %s248 = sphi 0, %s232
    $region4: #{tpu_custom_call.1} parent=1 // loop_header_branch
      %27 = sbr.rel (%p25) target = $region8
    $region5: #{tpu_custom_call.1} parent=1 // loop_body
      %s29 = ssub.s32 %s24, 1
      %s30 = ssub.s32 %s24, 2
      %s31 = sadd.s32 %s24, 1
      %s32 = ssub.s32 %s24, %s31
      %p33 = scmp.eq.s32.totalorder %s32, 0
      %s35 = sadd.s32 %s34, 1
      %s36 = scalar_select %p33, %s34, %s35
      %p39 = pneg %p33
      %p40 = scmp.eq.s32.totalorder %s24, 1
      %p41 = por %p39, %p40
      %p42 = scmp.ne.s32.totalorder %s34, %s37
      %p43 = scmp.eq.s32.totalorder %s24, 0
      %p44 = por %p42, %p43
      %p45 = scmp.ne.s32.totalorder %s34, %s37
      %p46 = scmp.eq.s32.totalorder %s29, 1
      %p47 = por %p45, %p46
      %p48 = scmp.ne.s32.totalorder %s37, %s38
      %p49 = scmp.eq.s32.totalorder %s29, 0
      %p50 = por %p48, %p49
      %p51 = scmp.ne.s32.totalorder %s37, %s38
      %p52 = scmp.eq.s32.totalorder %s30, 1
      %p53 = por %p51, %p52
      %p55 = scmp.ne.s32.totalorder %s38, %s54
      %p56 = scmp.eq.s32.totalorder %s30, 0
      %p57 = por %p55, %p56
      %s59 = sadd.s32 %s58, 1
      %p62 = scmp.eq.s32.totalorder %s24, 1
      %p63 = scmp.ne.s32.totalorder %s58, %s60
      %p64 = scmp.eq.s32.totalorder %s24, 0
      %p65 = por %p63, %p64
      %p66 = scmp.ne.s32.totalorder %s58, %s60
      %p67 = scmp.eq.s32.totalorder %s29, 1
      %p68 = por %p66, %p67
      %p69 = scmp.ne.s32.totalorder %s60, %s61
      %p70 = scmp.eq.s32.totalorder %s29, 0
      %p71 = por %p69, %p70
      %p72 = scmp.ne.s32.totalorder %s60, %s61
      %p73 = scmp.eq.s32.totalorder %s30, 1
      %p74 = por %p72, %p73
      %p76 = scmp.ne.s32.totalorder %s61, %s75
      %p77 = scmp.eq.s32.totalorder %s30, 0
      %p78 = por %p76, %p77
      %s80 = sadd.s32 %s79, 1
      %p83 = scmp.eq.s32.totalorder %s24, 1
      %p84 = scmp.ne.s32.totalorder %s79, %s81
      %p85 = scmp.eq.s32.totalorder %s24, 0
      %p86 = por %p84, %p85
      %p87 = scmp.ne.s32.totalorder %s79, %s81
      %p88 = scmp.eq.s32.totalorder %s29, 1
      %p89 = por %p87, %p88
      %p90 = scmp.ne.s32.totalorder %s81, %s82
      %p91 = scmp.eq.s32.totalorder %s29, 0
      %p92 = por %p90, %p91
      %p93 = scmp.ne.s32.totalorder %s81, %s82
      %p94 = scmp.eq.s32.totalorder %s30, 1
      %p95 = por %p93, %p94
      %p97 = scmp.ne.s32.totalorder %s82, %s96
      %p98 = scmp.eq.s32.totalorder %s30, 0
      %p99 = por %p97, %p98
      %s101 = sadd.s32 %s100, 1
      %p104 = scmp.eq.s32.totalorder %s24, 1
      %p105 = scmp.ne.s32.totalorder %s100, %s102
      %p106 = scmp.eq.s32.totalorder %s24, 0
      %p107 = por %p105, %p106
      %p108 = scmp.ne.s32.totalorder %s100, %s102
      %p109 = scmp.eq.s32.totalorder %s29, 1
      %p110 = por %p108, %p109
      %p111 = scmp.ne.s32.totalorder %s102, %s103
      %p112 = scmp.eq.s32.totalorder %s29, 0
      %p113 = por %p111, %p112
      %p114 = scmp.ne.s32.totalorder %s102, %s103
      %p115 = scmp.eq.s32.totalorder %s30, 1
      %p116 = por %p114, %p115
      %p118 = scmp.ne.s32.totalorder %s103, %s117
      %p119 = scmp.eq.s32.totalorder %s30, 0
      %p120 = por %p118, %p119
      %s122 = sadd.s32 %s121, 1
      %p125 = scmp.eq.s32.totalorder %s24, 1
      %p126 = scmp.ne.s32.totalorder %s121, %s123
      %p127 = scmp.eq.s32.totalorder %s24, 0
      %p128 = por %p126, %p127
      %p129 = scmp.ne.s32.totalorder %s121, %s123
      %p130 = scmp.eq.s32.totalorder %s29, 1
      %p131 = por %p129, %p130
      %p132 = scmp.ne.s32.totalorder %s123, %s124
      %p133 = scmp.eq.s32.totalorder %s29, 0
      %p134 = por %p132, %p133
      %p135 = scmp.ne.s32.totalorder %s123, %s124
      %p136 = scmp.eq.s32.totalorder %s30, 1
      %p137 = por %p135, %p136
      %p139 = scmp.ne.s32.totalorder %s124, %s138
      %p140 = scmp.eq.s32.totalorder %s30, 0
      %p141 = por %p139, %p140
      %s143 = sadd.s32 %s142, 1
      %p146 = scmp.eq.s32.totalorder %s24, 1
      %p147 = scmp.ne.s32.totalorder %s142, %s144
      %p148 = scmp.eq.s32.totalorder %s24, 0
      %p149 = por %p147, %p148
      %p150 = scmp.ne.s32.totalorder %s142, %s144
      %p151 = scmp.eq.s32.totalorder %s29, 1
      %p152 = por %p150, %p151
      %p153 = scmp.ne.s32.totalorder %s144, %s145
      %p154 = scmp.eq.s32.totalorder %s29, 0
      %p155 = por %p153, %p154
      %p156 = scmp.ne.s32.totalorder %s144, %s145
      %p157 = scmp.eq.s32.totalorder %s30, 1
      %p158 = por %p156, %p157
      %p160 = scmp.ne.s32.totalorder %s145, %s159
      %p161 = scmp.eq.s32.totalorder %s30, 0
      %p162 = por %p160, %p161
      %s164 = sadd.s32 %s163, 1
      %p167 = scmp.eq.s32.totalorder %s24, 1
      %p168 = scmp.ne.s32.totalorder %s163, %s165
      %p169 = scmp.eq.s32.totalorder %s24, 0
      %p170 = por %p168, %p169
      %p171 = scmp.ne.s32.totalorder %s163, %s165
      %p172 = scmp.eq.s32.totalorder %s29, 1
      %p173 = por %p171, %p172
      %p174 = scmp.ne.s32.totalorder %s165, %s166
      %p175 = scmp.eq.s32.totalorder %s29, 0
      %p176 = por %p174, %p175
      %p177 = scmp.ne.s32.totalorder %s165, %s166
      %p178 = scmp.eq.s32.totalorder %s30, 1
      %p179 = por %p177, %p178
      %p181 = scmp.ne.s32.totalorder %s166, %s180
      %p182 = scmp.eq.s32.totalorder %s30, 0
      %p183 = por %p181, %p182
      %s185 = sadd.s32 %s184, 1
      %p188 = scmp.eq.s32.totalorder %s24, 1
      %p189 = scmp.ne.s32.totalorder %s184, %s186
      %p190 = scmp.eq.s32.totalorder %s24, 0
      %p191 = por %p189, %p190
      %p192 = scmp.ne.s32.totalorder %s184, %s186
      %p193 = scmp.eq.s32.totalorder %s29, 1
      %p194 = por %p192, %p193
      %p195 = scmp.ne.s32.totalorder %s186, %s187
      %p196 = scmp.eq.s32.totalorder %s29, 0
      %p197 = por %p195, %p196
      %p198 = scmp.ne.s32.totalorder %s186, %s187
      %p199 = scmp.eq.s32.totalorder %s30, 1
      %p200 = por %p198, %p199
      %p202 = scmp.ne.s32.totalorder %s187, %s201
      %p203 = scmp.eq.s32.totalorder %s30, 0
      %p204 = por %p202, %p203
      %s206 = sadd.s32 %s205, 1
      %p209 = scmp.eq.s32.totalorder %s24, 1
      %p210 = scmp.ne.s32.totalorder %s205, %s207
      %p211 = scmp.eq.s32.totalorder %s24, 0
      %p212 = por %p210, %p211
      %p213 = scmp.ne.s32.totalorder %s205, %s207
      %p214 = scmp.eq.s32.totalorder %s29, 1
      %p215 = por %p213, %p214
      %p216 = scmp.ne.s32.totalorder %s207, %s208
      %p217 = scmp.eq.s32.totalorder %s29, 0
      %p218 = por %p216, %p217
      %p219 = scmp.ne.s32.totalorder %s207, %s208
      %p220 = scmp.eq.s32.totalorder %s30, 1
      %p221 = por %p219, %p220
      %p223 = scmp.ne.s32.totalorder %s208, %s222
      %p224 = scmp.eq.s32.totalorder %s30, 0
      %p225 = por %p223, %p224
      %s226 = ssub.s32 %s24, %s31
      %p227 = scmp.eq.s32.totalorder %s226, 0
      %s229 = sadd.s32 %s228, 1
      %s230 = scalar_select %p227, %s228, %s229
      %p233 = pneg %p227
      %p234 = scmp.eq.s32.totalorder %s24, 1
      %p235 = por %p233, %p234
      %p236 = scmp.ne.s32.totalorder %s228, %s231
      %p237 = scmp.eq.s32.totalorder %s24, 0
      %p238 = por %p236, %p237
      %p239 = scmp.ne.s32.totalorder %s228, %s231
      %p240 = scmp.eq.s32.totalorder %s29, 1
      %p241 = por %p239, %p240
      %p242 = scmp.ne.s32.totalorder %s231, %s232
      %p243 = scmp.eq.s32.totalorder %s29, 0
      %p244 = por %p242, %p243
      %p245 = scmp.ne.s32.totalorder %s231, %s232
      %p246 = scmp.eq.s32.totalorder %s30, 1
      %p247 = por %p245, %p246
      %p249 = scmp.ne.s32.totalorder %s232, %s248
      %p250 = scmp.eq.s32.totalorder %s30, 0
      %p251 = por %p249, %p250
      %p252 = scmp.le.s32.totalorder 1, %s24
      %p253 = scmp.lt.s32.totalorder %s24, 3
      %p254 = pnand %p252, %p253
      %p255 = pneg %p254
      // Predicated region
      $region9: #{tpu_custom_call.1} parent=5 // pred_check
        _
      $region10: #{tpu_custom_call.1} parent=5 // pred_check_branch
        %257 = sbr.rel (%p254) target = $region12
      $region11: #{tpu_custom_call.1} parent=5 // pred_region
        %s258 = ssub.s32 %s24, 1
        // Predicated region
        $region13: #{tpu_custom_call.1} parent=11 // pred_check
          %p259 = pneg %p71
        $region14: #{tpu_custom_call.1} parent=11 // pred_check_branch
          %261 = sbr.rel (%p259) target = $region16
        $region15: #{tpu_custom_call.1} parent=11 // pred_region
          %s263 = ssub.s32 1024, 1024
          %264 = vsyncadd [#allocation7], %s263
          %s265 = sshll.u32 [#allocation6], 4
          %s266 = int_to_ptr.vmem [resolvable:$true] %s265
          %271 = dma.hbm_to_vmem [thread:$0]  %s1, 1024, %s266, [#allocation7], 64, 64, 4
        $region16: #{tpu_custom_call.1} parent=11 // pred_fallthru
          _
        // Predicated region
        $region17: #{tpu_custom_call.1} parent=11 // pred_check
          %p272 = pneg %p92
        $region18: #{tpu_custom_call.1} parent=11 // pred_check_branch
          %274 = sbr.rel (%p272) target = $region20
        $region19: #{tpu_custom_call.1} parent=11 // pred_region
          _
        $region20: #{tpu_custom_call.1} parent=11 // pred_fallthru
          _
        // Predicated region
        $region21: #{tpu_custom_call.1} parent=11 // pred_check
          %p275 = pneg %p113
        $region22: #{tpu_custom_call.1} parent=11 // pred_check_branch
          %277 = sbr.rel (%p275) target = $region24
        $region23: #{tpu_custom_call.1} parent=11 // pred_region
          %s279 = ssub.s32 9216, 9216
          %280 = vsyncadd [#allocation7], %s279
          %s281 = sshll.u32 [#allocation8], 4
          %s282 = int_to_ptr.vmem [resolvable:$true] %s281
          %287 = dma.hbm_to_vmem [thread:$0]  %s3, 9216, %s282, [#allocation7], 64, 64, 4
        $region24: #{tpu_custom_call.1} parent=11 // pred_fallthru
          _
        // Predicated region
        $region25: #{tpu_custom_call.1} parent=11 // pred_check
          %p288 = pneg %p134
        $region26: #{tpu_custom_call.1} parent=11 // pred_check_branch
          %290 = sbr.rel (%p288) target = $region28
        $region27: #{tpu_custom_call.1} parent=11 // pred_region
          _
        $region28: #{tpu_custom_call.1} parent=11 // pred_fallthru
          _
        // Predicated region
        $region29: #{tpu_custom_call.1} parent=11 // pred_check
          %p291 = pneg %p155
        $region30: #{tpu_custom_call.1} parent=11 // pred_check_branch
          %293 = sbr.rel (%p291) target = $region32
        $region31: #{tpu_custom_call.1} parent=11 // pred_region
          %s295 = ssub.s32 1024, 1024
          %296 = vsyncadd [#allocation10], %s295
          %s297 = sshll.u32 [#allocation9], 4
          %s298 = int_to_ptr.vmem [resolvable:$true] %s297
          %303 = dma.hbm_to_vmem [thread:$0]  %s5, 1024, %s298, [#allocation10], 64, 64, 4
        $region32: #{tpu_custom_call.1} parent=11 // pred_fallthru
          _
        // Predicated region
        $region33: #{tpu_custom_call.1} parent=11 // pred_check
          %p304 = pneg %p176
        $region34: #{tpu_custom_call.1} parent=11 // pred_check_branch
          %306 = sbr.rel (%p304) target = $region36
        $region35: #{tpu_custom_call.1} parent=11 // pred_region
          _
        $region36: #{tpu_custom_call.1} parent=11 // pred_fallthru
          _
        // Predicated region
        $region37: #{tpu_custom_call.1} parent=11 // pred_check
          %p307 = pneg %p197
        $region38: #{tpu_custom_call.1} parent=11 // pred_check_branch
          %309 = sbr.rel (%p307) target = $region40
        $region39: #{tpu_custom_call.1} parent=11 // pred_region
          %s311 = ssub.s32 1024, 1024
          %312 = vsyncadd [#allocation10], %s311
          %s313 = sshll.u32 [#allocation11], 4
          %s314 = int_to_ptr.vmem [resolvable:$true] %s313
          %319 = dma.hbm_to_vmem [thread:$0]  %s7, 1024, %s314, [#allocation10], 64, 64, 4
        $region40: #{tpu_custom_call.1} parent=11 // pred_fallthru
          _
        // Predicated region
        $region41: #{tpu_custom_call.1} parent=11 // pred_check
          %p320 = pneg %p218
        $region42: #{tpu_custom_call.1} parent=11 // pred_check_branch
          %322 = sbr.rel (%p320) target = $region44
        $region43: #{tpu_custom_call.1} parent=11 // pred_region
          %s324 = ssub.s32 1024, 1024
          %325 = vsyncadd [#allocation13], %s324
          %s326 = sshll.u32 [#allocation12], 4
          %s327 = int_to_ptr.vmem [resolvable:$true] %s326
          %332 = dma.hbm_to_vmem [thread:$0]  %s8, 1024, %s327, [#allocation13], 64, 64, 4
        $region44: #{tpu_custom_call.1} parent=11 // pred_fallthru
          _
      $region12: #{tpu_custom_call.1} parent=5 // pred_fallthru
        _
      %p333 = scmp.lt.s32.totalorder %s24, 2
      // Predicated region
      $region45: #{tpu_custom_call.1} parent=5 // pred_check
        %p334 = pneg %p333
      $region46: #{tpu_custom_call.1} parent=5 // pred_check_branch
        %336 = sbr.rel (%p334) target = $region48
      $region47: #{tpu_custom_call.1} parent=5 // pred_region
        // Predicated region
        $region49: #{tpu_custom_call.1} parent=47 // pred_check
          %p337 = pneg %p44
        $region50: #{tpu_custom_call.1} parent=47 // pred_check_branch
          %339 = sbr.rel (%p337) target = $region52
        $region51: #{tpu_custom_call.1} parent=47 // pred_region
          %s340 = sand.u32 %s34, 1
          %s341 = scalar_lea.sflag [#allocation4], %s340
          %s342 = sand.u32 %s34, 1
          %s343 = smul.addr %s342, 128
          %s344 = scalar_lea.vmem [#allocation3], %s343
          %s346 = ssub.s32 2048, 2048
          %347 = vsyncadd %s341, %s346
          %s348 = smul.addr %s24, 32
          %s349 = smul.addr %s348, 64
          %s350 = scalar_lea.hbm %s0, %s349
          %s351 = sshll.u32 %s344, 4
          %s352 = int_to_ptr.vmem [resolvable:$true] %s351
          %357 = dma.hbm_to_vmem [thread:$0]  %s350, 2048, %s352, %s341, 64, 64, 4
        $region52: #{tpu_custom_call.1} parent=47 // pred_fallthru
          _
      $region48: #{tpu_custom_call.1} parent=5 // pred_fallthru
        _
      %p358 = scmp.le.s32.totalorder 1, %s24
      %p359 = scmp.lt.s32.totalorder %s24, 3
      %p360 = pnand %p358, %p359
      %p361 = pneg %p360
      // Predicated region
      $region53: #{tpu_custom_call.1} parent=5 // pred_check
        _
      $region54: #{tpu_custom_call.1} parent=5 // pred_check_branch
        %363 = sbr.rel (%p360) target = $region56
      $region55: #{tpu_custom_call.1} parent=5 // pred_region
        %s364 = ssub.s32 %s24, 1
        %s365 = sand.u32 %s37, 1
        %s366 = scalar_lea.sflag [#allocation4], %s365
        %s367 = sand.u32 %s37, 1
        %s368 = smul.addr %s367, 128
        %s369 = scalar_lea.vmem [#allocation3], %s368
        // Predicated region
        $region57: #{tpu_custom_call.1} parent=55 // pred_check
          %p370 = pneg %p50
        $region58: #{tpu_custom_call.1} parent=55 // pred_check_branch
          %372 = sbr.rel (%p370) target = $region60
        $region59: #{tpu_custom_call.1} parent=55 // pred_region
          %373 = dma.done %s366, 2048
        $region60: #{tpu_custom_call.1} parent=55 // pred_fallthru
          _
        // Predicated region
        $region61: #{tpu_custom_call.1} parent=55 // pred_check
          %p374 = pneg %p71
        $region62: #{tpu_custom_call.1} parent=55 // pred_check_branch
          %376 = sbr.rel (%p374) target = $region64
        $region63: #{tpu_custom_call.1} parent=55 // pred_region
          %377 = dma.done [#allocation7], 1024
        $region64: #{tpu_custom_call.1} parent=55 // pred_fallthru
          _
        // Predicated region
        $region65: #{tpu_custom_call.1} parent=55 // pred_check
          %p378 = pneg %p113
        $region66: #{tpu_custom_call.1} parent=55 // pred_check_branch
          %380 = sbr.rel (%p378) target = $region68
        $region67: #{tpu_custom_call.1} parent=55 // pred_region
          %381 = dma.done [#allocation7], 9216
        $region68: #{tpu_custom_call.1} parent=55 // pred_fallthru
          _
        // Predicated region
        $region69: #{tpu_custom_call.1} parent=55 // pred_check
          %p382 = pneg %p155
        $region70: #{tpu_custom_call.1} parent=55 // pred_check_branch
          %384 = sbr.rel (%p382) target = $region72
        $region71: #{tpu_custom_call.1} parent=55 // pred_region
          %385 = dma.done [#allocation10], 1024
        $region72: #{tpu_custom_call.1} parent=55 // pred_fallthru
          _
        // Predicated region
        $region73: #{tpu_custom_call.1} parent=55 // pred_check
          %p386 = pneg %p197
        $region74: #{tpu_custom_call.1} parent=55 // pred_check_branch
          %388 = sbr.rel (%p386) target = $region76
        $region75: #{tpu_custom_call.1} parent=55 // pred_region
          %389 = dma.done [#allocation10], 1024
        $region76: #{tpu_custom_call.1} parent=55 // pred_fallthru
          _
        // Predicated region
        $region77: #{tpu_custom_call.1} parent=55 // pred_check
          %p390 = pneg %p218
        $region78: #{tpu_custom_call.1} parent=55 // pred_check_branch
          %392 = sbr.rel (%p390) target = $region80
        $region79: #{tpu_custom_call.1} parent=55 // pred_region
          %393 = dma.done [#allocation13], 1024
        $region80: #{tpu_custom_call.1} parent=55 // pred_fallthru
          _
        %s394 = sand.u32 %s37, 1
        %s395 = scalar_lea.sflag [#allocation4], %s394
        %s396 = sand.u32 %s37, 1
        %s397 = smul.addr %s396, 128
        %s398 = scalar_lea.vmem [#allocation3], %s397
        %p399 = pneg %p50
        %p400 = pneg %p47
        %p401 = pneg %p71
        %p402 = pneg %p68
        %p403 = pneg %p92
        %p404 = pneg %p89
        %p405 = pneg %p113
        %p406 = pneg %p110
        %p407 = pneg %p134
        %p408 = pneg %p131
        %p409 = pneg %p155
        %p410 = pneg %p152
        %p411 = pneg %p176
        %p412 = pneg %p173
        %p413 = pneg %p197
        %p414 = pneg %p194
        %p415 = pneg %p218
        %p416 = pneg %p215
        %p417 = pneg %p244
        %p418 = pneg %p241
        %s419 = sand.u32 %s231, 1
        %s420 = scalar_lea.sflag [#allocation5], %s419
        %s421 = sand.u32 %s231, 1
        %s422 = smul.addr %s421, 128
        %s423 = scalar_lea.vmem [#allocation14], %s422
        %v425 = vld [vmem:[%s369] sm:$0xf]
        %v426 = vld [vmem:[%s369 + $0x4] sm:$0xf]
        %v427 = vld [vmem:[%s369 + $0x8] sm:$0xf]
        %v428 = vld [vmem:[%s369 + $0xc] sm:$0xf]
        %v429 = vld [vmem:[%s369 + $0x10] sm:$0xf]
        %v430 = vld [vmem:[%s369 + $0x14] sm:$0xf]
        %v431 = vld [vmem:[%s369 + $0x18] sm:$0xf]
        %v432 = vld [vmem:[%s369 + $0x1c] sm:$0xf]
        %v433 = vld [vmem:[%s369 + $0x20] sm:$0xf]
        %v434 = vld [vmem:[%s369 + $0x24] sm:$0xf]
        %v435 = vld [vmem:[%s369 + $0x28] sm:$0xf]
        %v436 = vld [vmem:[%s369 + $0x2c] sm:$0xf]
        %v437 = vld [vmem:[%s369 + $0x30] sm:$0xf]
        %v438 = vld [vmem:[%s369 + $0x34] sm:$0xf]
        %v439 = vld [vmem:[%s369 + $0x38] sm:$0xf]
        %v440 = vld [vmem:[%s369 + $0x3c] sm:$0xf]
        %v441 = vld [vmem:[%s369 + $0x40] sm:$0xf]
        %v442 = vld [vmem:[%s369 + $0x44] sm:$0xf]
        %v443 = vld [vmem:[%s369 + $0x48] sm:$0xf]
        %v444 = vld [vmem:[%s369 + $0x4c] sm:$0xf]
        %v445 = vld [vmem:[%s369 + $0x50] sm:$0xf]
        %v446 = vld [vmem:[%s369 + $0x54] sm:$0xf]
        %v447 = vld [vmem:[%s369 + $0x58] sm:$0xf]
        %v448 = vld [vmem:[%s369 + $0x5c] sm:$0xf]
        %v449 = vld [vmem:[%s369 + $0x60] sm:$0xf]
        %v450 = vld [vmem:[%s369 + $0x64] sm:$0xf]
        %v451 = vld [vmem:[%s369 + $0x68] sm:$0xf]
        %v452 = vld [vmem:[%s369 + $0x6c] sm:$0xf]
        %v453 = vld [vmem:[%s369 + $0x70] sm:$0xf]
        %v454 = vld [vmem:[%s369 + $0x74] sm:$0xf]
        %v455 = vld [vmem:[%s369 + $0x78] sm:$0xf]
        %v456 = vld [vmem:[%s369 + $0x7c] sm:$0xf]
        %v457 = vld [vmem:[#allocation6] sm:$0xf]
        %v458 = vld [vmem:[#allocation6 + $0x4] sm:$0xf]
        %v459 = vld [vmem:[#allocation6 + $0x8] sm:$0xf]
        %v460 = vld [vmem:[#allocation6 + $0xc] sm:$0xf]
        %v461 = vld [vmem:[#allocation6 + $0x10] sm:$0xf]
        %v462 = vld [vmem:[#allocation6 + $0x14] sm:$0xf]
        %v463 = vld [vmem:[#allocation6 + $0x18] sm:$0xf]
        %v464 = vld [vmem:[#allocation6 + $0x1c] sm:$0xf]
        %v465 = vld [vmem:[#allocation6 + $0x20] sm:$0xf]
        %v466 = vld [vmem:[#allocation6 + $0x24] sm:$0xf]
        %v467 = vld [vmem:[#allocation6 + $0x28] sm:$0xf]
        %v468 = vld [vmem:[#allocation6 + $0x2c] sm:$0xf]
        %v469 = vld [vmem:[#allocation6 + $0x30] sm:$0xf]
        %v470 = vld [vmem:[#allocation6 + $0x34] sm:$0xf]
        %v471 = vld [vmem:[#allocation6 + $0x38] sm:$0xf]
        %v472 = vld [vmem:[#allocation6 + $0x3c] sm:$0xf]
        %v473 = vld [vmem:[%s2] sm:$0x1]
        %v475 = vlaneseq
        %v476 = vshrl.u32 %v475, 7
        %v477 = vsub.s32 0, %v476
        %v478 = vrot.slane %v473, %v477
        %v512 = vunpack.c.l.b16 %v425
        %v513 = vunpack.c.l.b16 %v426
        %v514 = vunpack.c.l.b16 %v427
        %v515 = vunpack.c.l.b16 %v428
        %v516 = vunpack.c.l.b16 %v429
        %v517 = vunpack.c.l.b16 %v430
        %v518 = vunpack.c.l.b16 %v431
        %v519 = vunpack.c.l.b16 %v432
        %v520 = vunpack.c.l.b16 %v433
        %v521 = vunpack.c.l.b16 %v434
        %v522 = vunpack.c.l.b16 %v435
        %v523 = vunpack.c.l.b16 %v436
        %v524 = vunpack.c.l.b16 %v437
        %v525 = vunpack.c.l.b16 %v438
        %v526 = vunpack.c.l.b16 %v439
        %v527 = vunpack.c.l.b16 %v440
        %v528 = vunpack.c.l.b16 %v441
        %v529 = vunpack.c.l.b16 %v442
        %v530 = vunpack.c.l.b16 %v443
        %v531 = vunpack.c.l.b16 %v444
        %v532 = vunpack.c.l.b16 %v445
        %v533 = vunpack.c.l.b16 %v446
        %v534 = vunpack.c.l.b16 %v447
        %v535 = vunpack.c.l.b16 %v448
        %v536 = vunpack.c.l.b16 %v449
        %v537 = vunpack.c.l.b16 %v450
        %v538 = vunpack.c.l.b16 %v451
        %v539 = vunpack.c.l.b16 %v452
        %v540 = vunpack.c.l.b16 %v453
        %v541 = vunpack.c.l.b16 %v454
        %v542 = vunpack.c.l.b16 %v455
        %v543 = vunpack.c.l.b16 %v456
        %v544 = vpack.c.b16 %v513, %v512
        %v545 = vpack.c.b16 %v515, %v514
        %v546 = vpack.c.b16 %v517, %v516
        %v547 = vpack.c.b16 %v519, %v518
        %v548 = vpack.c.b16 %v521, %v520
        %v549 = vpack.c.b16 %v523, %v522
        %v550 = vpack.c.b16 %v525, %v524
        %v551 = vpack.c.b16 %v527, %v526
        %v552 = vpack.c.b16 %v529, %v528
        %v553 = vpack.c.b16 %v531, %v530
        %v554 = vpack.c.b16 %v533, %v532
        %v555 = vpack.c.b16 %v535, %v534
        %v556 = vpack.c.b16 %v537, %v536
        %v557 = vpack.c.b16 %v539, %v538
        %v558 = vpack.c.b16 %v541, %v540
        %v559 = vpack.c.b16 %v543, %v542
        %v592 = vunpack.c.l.b16 %v457
        %v593 = vunpack.c.l.b16 %v458
        %v594 = vunpack.c.l.b16 %v459
        %v595 = vunpack.c.l.b16 %v460
        %v596 = vunpack.c.l.b16 %v461
        %v597 = vunpack.c.l.b16 %v462
        %v598 = vunpack.c.l.b16 %v463
        %v599 = vunpack.c.l.b16 %v464
        %v600 = vunpack.c.l.b16 %v465
        %v601 = vunpack.c.l.b16 %v466
        %v602 = vunpack.c.l.b16 %v467
        %v603 = vunpack.c.l.b16 %v468
        %v604 = vunpack.c.l.b16 %v469
        %v605 = vunpack.c.l.b16 %v470
        %v606 = vunpack.c.l.b16 %v471
        %v607 = vunpack.c.l.b16 %v472
        %v608 = vpack.c.b16 %v593, %v592
        %v609 = vpack.c.b16 %v595, %v594
        %v610 = vpack.c.b16 %v597, %v596
        %v611 = vpack.c.b16 %v599, %v598
        %v612 = vpack.c.b16 %v601, %v600
        %v613 = vpack.c.b16 %v603, %v602
        %v614 = vpack.c.b16 %v605, %v604
        %v615 = vpack.c.b16 %v607, %v606
        %624 = vmatprep.subr.bf16.mxu0 0
        %625 = vmatpush1.bf16.msra.mxu0 %v615
        %626 = vmatprep.subr.bf16.mxu0 0
        %627 = vmatpush1.bf16.msra.mxu0 %v614
        %628 = vmatprep.subr.bf16.mxu0 0
        %629 = vmatpush1.bf16.msra.mxu0 %v613
        %630 = vmatprep.subr.bf16.mxu0 0
        %631 = vmatpush1.bf16.msra.mxu0 %v612
        %632 = vmatprep.subr.bf16.mxu0 0
        %633 = vmatpush1.bf16.msra.mxu0 %v611
        %634 = vmatprep.subr.bf16.mxu0 0
        %635 = vmatpush1.bf16.msra.mxu0 %v610
        %636 = vmatprep.subr.bf16.mxu0 0
        %637 = vmatpush1.bf16.msra.mxu0 %v609
        %638 = vmatprep.subr.bf16.mxu0 0
        %639 = vmatpush1.bf16.msra.mxu0 %v608
        %640 = vmatprep.subr.bf16.mxu0 0
        %641 = vmatpush2.bf16.msra.mxu0 0
        %642 = vmatprep.subr.bf16.mxu0 0
        %643 = vmatpush2.bf16.msra.mxu0 0
        %644 = vmatprep.subr.bf16.mxu0 0
        %645 = vmatpush2.bf16.msra.mxu0 0
        %646 = vmatprep.subr.bf16.mxu0 0
        %647 = vmatpush2.bf16.msra.mxu0 0
        %648 = vmatprep.subr.bf16.mxu0 0
        %649 = vmatpush2.bf16.msra.mxu0 0
        %650 = vmatprep.subr.bf16.mxu0 0
        %651 = vmatpush2.bf16.msra.mxu0 0
        %652 = vmatprep.subr.bf16.mxu0 0
        %653 = vmatpush2.bf16.msra.mxu0 0
        %654 = vmatprep.subr.bf16.mxu0 0
        %655 = vmatpush2.bf16.msra.mxu0 0
        %656 = vmatprep.mubr.bf16.mxu0 0
        %657 = vmatmul.mubr.bf16.gmra.mxu0 %v544
        %v658 = vpop.f32.mrf.mxu0
        %v659 = vadd.f32 %v478, %v658
        %v660 = vpop.f32.mrf.mxu0
        %v661 = vpop.f32.mrf.mxu0
        %v662 = vadd.f32 %v478, %v661
        %v663 = vpop.f32.mrf.mxu0
        %664 = vmatprep.mubr.bf16.mxu0 0
        %665 = vmatmul.mubr.bf16.gmra.mxu0 %v545
        %v666 = vpop.f32.mrf.mxu0
        %v667 = vadd.f32 %v478, %v666
        %v668 = vpop.f32.mrf.mxu0
        %v669 = vpop.f32.mrf.mxu0
        %v670 = vadd.f32 %v478, %v669
        %v671 = vpop.f32.mrf.mxu0
        %672 = vmatprep.mubr.bf16.mxu0 0
        %673 = vmatmul.mubr.bf16.gmra.mxu0 %v546
        %v674 = vpop.f32.mrf.mxu0
        %v675 = vadd.f32 %v478, %v674
        %v676 = vpop.f32.mrf.mxu0
        %v677 = vpop.f32.mrf.mxu0
        %v678 = vadd.f32 %v478, %v677
        %v679 = vpop.f32.mrf.mxu0
        %680 = vmatprep.mubr.bf16.mxu0 0
        %681 = vmatmul.mubr.bf16.gmra.mxu0 %v547
        %v682 = vpop.f32.mrf.mxu0
        %v683 = vadd.f32 %v478, %v682
        %v684 = vpop.f32.mrf.mxu0
        %v685 = vpop.f32.mrf.mxu0
        %v686 = vadd.f32 %v478, %v685
        %v687 = vpop.f32.mrf.mxu0
        %688 = vmatprep.mubr.bf16.mxu0 0
        %689 = vmatmul.mubr.bf16.gmra.mxu0 %v548
        %v690 = vpop.f32.mrf.mxu0
        %v691 = vadd.f32 %v478, %v690
        %v692 = vpop.f32.mrf.mxu0
        %v693 = vpop.f32.mrf.mxu0
        %v694 = vadd.f32 %v478, %v693
        %v695 = vpop.f32.mrf.mxu0
        %696 = vmatprep.mubr.bf16.mxu0 0
        %697 = vmatmul.mubr.bf16.gmra.mxu0 %v549
        %v698 = vpop.f32.mrf.mxu0
        %v699 = vadd.f32 %v478, %v698
        %v700 = vpop.f32.mrf.mxu0
        %v701 = vpop.f32.mrf.mxu0
        %v702 = vadd.f32 %v478, %v701
        %v703 = vpop.f32.mrf.mxu0
        %704 = vmatprep.mubr.bf16.mxu0 0
        %705 = vmatmul.mubr.bf16.gmra.mxu0 %v550
        %v706 = vpop.f32.mrf.mxu0
        %v707 = vadd.f32 %v478, %v706
        %v708 = vpop.f32.mrf.mxu0
        %v709 = vpop.f32.mrf.mxu0
        %v710 = vadd.f32 %v478, %v709
        %v711 = vpop.f32.mrf.mxu0
        %712 = vmatprep.mubr.bf16.mxu0 0
        %713 = vmatmul.mubr.bf16.gmra.mxu0 %v551
        %v714 = vpop.f32.mrf.mxu0
        %v715 = vadd.f32 %v478, %v714
        %v716 = vpop.f32.mrf.mxu0
        %v717 = vpop.f32.mrf.mxu0
        %v718 = vadd.f32 %v478, %v717
        %v719 = vpop.f32.mrf.mxu0
        %720 = vmatprep.mubr.bf16.mxu0 0
        %721 = vmatmul.mubr.bf16.gmra.mxu0 %v552
        %v722 = vpop.f32.mrf.mxu0
        %v723 = vadd.f32 %v478, %v722
        %v724 = vpop.f32.mrf.mxu0
        %v725 = vpop.f32.mrf.mxu0
        %v726 = vadd.f32 %v478, %v725
        %v727 = vpop.f32.mrf.mxu0
        %728 = vmatprep.mubr.bf16.mxu0 0
        %729 = vmatmul.mubr.bf16.gmra.mxu0 %v553
        %v730 = vpop.f32.mrf.mxu0
        %v731 = vadd.f32 %v478, %v730
        %v732 = vpop.f32.mrf.mxu0
        %v733 = vpop.f32.mrf.mxu0
        %v734 = vadd.f32 %v478, %v733
        %v735 = vpop.f32.mrf.mxu0
        %736 = vmatprep.mubr.bf16.mxu0 0
        %737 = vmatmul.mubr.bf16.gmra.mxu0 %v554
        %v738 = vpop.f32.mrf.mxu0
        %v739 = vadd.f32 %v478, %v738
        %v740 = vpop.f32.mrf.mxu0
        %v741 = vpop.f32.mrf.mxu0
        %v742 = vadd.f32 %v478, %v741
        %v743 = vpop.f32.mrf.mxu0
        %744 = vmatprep.mubr.bf16.mxu0 0
        %745 = vmatmul.mubr.bf16.gmra.mxu0 %v555
        %v746 = vpop.f32.mrf.mxu0
        %v747 = vadd.f32 %v478, %v746
        %v748 = vpop.f32.mrf.mxu0
        %v749 = vpop.f32.mrf.mxu0
        %v750 = vadd.f32 %v478, %v749
        %v751 = vpop.f32.mrf.mxu0
        %752 = vmatprep.mubr.bf16.mxu0 0
        %753 = vmatmul.mubr.bf16.gmra.mxu0 %v556
        %v754 = vpop.f32.mrf.mxu0
        %v755 = vadd.f32 %v478, %v754
        %v756 = vpop.f32.mrf.mxu0
        %v757 = vpop.f32.mrf.mxu0
        %v758 = vadd.f32 %v478, %v757
        %v759 = vpop.f32.mrf.mxu0
        %760 = vmatprep.mubr.bf16.mxu0 0
        %761 = vmatmul.mubr.bf16.gmra.mxu0 %v557
        %v762 = vpop.f32.mrf.mxu0
        %v763 = vadd.f32 %v478, %v762
        %v764 = vpop.f32.mrf.mxu0
        %v765 = vpop.f32.mrf.mxu0
        %v766 = vadd.f32 %v478, %v765
        %v767 = vpop.f32.mrf.mxu0
        %768 = vmatprep.mubr.bf16.mxu0 0
        %769 = vmatmul.mubr.bf16.gmra.mxu0 %v558
        %v770 = vpop.f32.mrf.mxu0
        %v771 = vadd.f32 %v478, %v770
        %v772 = vpop.f32.mrf.mxu0
        %v773 = vpop.f32.mrf.mxu0
        %v774 = vadd.f32 %v478, %v773
        %v775 = vpop.f32.mrf.mxu0
        %776 = vmatprep.mubr.bf16.mxu0 0
        %777 = vmatmul.mubr.bf16.gmra.mxu0 %v559
        %v778 = vpop.f32.mrf.mxu0
        %v779 = vadd.f32 %v478, %v778
        %v780 = vpop.f32.mrf.mxu0
        %v781 = vpop.f32.mrf.mxu0
        %v782 = vadd.f32 %v478, %v781
        %v783 = vpop.f32.mrf.mxu0
        %784 = vdwg.mxu0
        %v785 = vmax.f32 %v659, 0.0
        %v786 = vmax.f32 %v662, 0.0
        %v787 = vmax.f32 %v667, 0.0
        %v788 = vmax.f32 %v670, 0.0
        %v789 = vmax.f32 %v675, 0.0
        %v790 = vmax.f32 %v678, 0.0
        %v791 = vmax.f32 %v683, 0.0
        %v792 = vmax.f32 %v686, 0.0
        %v793 = vmax.f32 %v691, 0.0
        %v794 = vmax.f32 %v694, 0.0
        %v795 = vmax.f32 %v699, 0.0
        %v796 = vmax.f32 %v702, 0.0
        %v797 = vmax.f32 %v707, 0.0
        %v798 = vmax.f32 %v710, 0.0
        %v799 = vmax.f32 %v715, 0.0
        %v800 = vmax.f32 %v718, 0.0
        %v801 = vmax.f32 %v723, 0.0
        %v802 = vmax.f32 %v726, 0.0
        %v803 = vmax.f32 %v731, 0.0
        %v804 = vmax.f32 %v734, 0.0
        %v805 = vmax.f32 %v739, 0.0
        %v806 = vmax.f32 %v742, 0.0
        %v807 = vmax.f32 %v747, 0.0
        %v808 = vmax.f32 %v750, 0.0
        %v809 = vmax.f32 %v755, 0.0
        %v810 = vmax.f32 %v758, 0.0
        %v811 = vmax.f32 %v763, 0.0
        %v812 = vmax.f32 %v766, 0.0
        %v813 = vmax.f32 %v771, 0.0
        %v814 = vmax.f32 %v774, 0.0
        %v815 = vmax.f32 %v779, 0.0
        %v816 = vmax.f32 %v782, 0.0
        %817 = vst [vmem:[#allocation2] sm:$0xff] 0.0
        %818 = vst [vmem:[#allocation2 + $0x8] sm:$0xff] 0.0
        %819 = vst [vmem:[#allocation2 + $0x10] sm:$0xff] 0.0
        %820 = vst [vmem:[#allocation2 + $0x118] sm:$0xff] 0.0
        %821 = vst [vmem:[#allocation2 + $0x120] sm:$0xff] 0.0
        %822 = vst [vmem:[#allocation2 + $0x128] sm:$0xff] 0.0
        %823 = vst [vmem:[#allocation2 + $0x18] sm:$0xff] %v785
        %824 = vst [vmem:[#allocation2 + $0x20] sm:$0xff] %v786
        %825 = vst [vmem:[#allocation2 + $0x28] sm:$0xff] %v787
        %826 = vst [vmem:[#allocation2 + $0x30] sm:$0xff] %v788
        %827 = vst [vmem:[#allocation2 + $0x38] sm:$0xff] %v789
        %828 = vst [vmem:[#allocation2 + $0x40] sm:$0xff] %v790
        %829 = vst [vmem:[#allocation2 + $0x48] sm:$0xff] %v791
        %830 = vst [vmem:[#allocation2 + $0x50] sm:$0xff] %v792
        %831 = vst [vmem:[#allocation2 + $0x58] sm:$0xff] %v793
        %832 = vst [vmem:[#allocation2 + $0x60] sm:$0xff] %v794
        %833 = vst [vmem:[#allocation2 + $0x68] sm:$0xff] %v795
        %834 = vst [vmem:[#allocation2 + $0x70] sm:$0xff] %v796
        %835 = vst [vmem:[#allocation2 + $0x78] sm:$0xff] %v797
        %836 = vst [vmem:[#allocation2 + $0x80] sm:$0xff] %v798
        %837 = vst [vmem:[#allocation2 + $0x88] sm:$0xff] %v799
        %838 = vst [vmem:[#allocation2 + $0x90] sm:$0xff] %v800
        %839 = vst [vmem:[#allocation2 + $0x98] sm:$0xff] %v801
        %840 = vst [vmem:[#allocation2 + $0xa0] sm:$0xff] %v802
        %841 = vst [vmem:[#allocation2 + $0xa8] sm:$0xff] %v803
        %842 = vst [vmem:[#allocation2 + $0xb0] sm:$0xff] %v804
        %843 = vst [vmem:[#allocation2 + $0xb8] sm:$0xff] %v805
        %844 = vst [vmem:[#allocation2 + $0xc0] sm:$0xff] %v806
        %845 = vst [vmem:[#allocation2 + $0xc8] sm:$0xff] %v807
        %846 = vst [vmem:[#allocation2 + $0xd0] sm:$0xff] %v808
        %847 = vst [vmem:[#allocation2 + $0xd8] sm:$0xff] %v809
        %848 = vst [vmem:[#allocation2 + $0xe0] sm:$0xff] %v810
        %849 = vst [vmem:[#allocation2 + $0xe8] sm:$0xff] %v811
        %850 = vst [vmem:[#allocation2 + $0xf0] sm:$0xff] %v812
        %851 = vst [vmem:[#allocation2 + $0xf8] sm:$0xff] %v813
        %852 = vst [vmem:[#allocation2 + $0x100] sm:$0xff] %v814
        %853 = vst [vmem:[#allocation2 + $0x108] sm:$0xff] %v815
        %854 = vst [vmem:[#allocation2 + $0x110] sm:$0xff] %v816
        %v855 = vlaneseq
        %v856 = vshrl.u32 %v855, 7
        %v857 = vadd.s32 %v856, 8
        %v858 = vadd.s32 %v856, 16
        %v859 = vadd.s32 %v856, 24
        %v860 = vadd.s32 %v856, 32
        %v861 = vadd.s32 %v856, 40
        %v862 = vadd.s32 %v856, 48
        %v863 = vadd.s32 %v856, 56
        %v864 = vadd.s32 %v856, 64
        %v865 = vadd.s32 %v856, 72
        %v866 = vadd.s32 %v856, 80
        %v867 = vadd.s32 %v856, 88
        %v868 = vadd.s32 %v856, 96
        %v869 = vadd.s32 %v856, 104
        %v870 = vadd.s32 %v856, 112
        %v871 = vadd.s32 %v856, 120
        %v872 = vadd.s32 %v856, 128
        %v873 = vadd.s32 %v856, 136
        %v874 = vadd.s32 %v856, 144
        %v875 = vadd.s32 %v856, 152
        %v876 = vadd.s32 %v856, 160
        %v877 = vadd.s32 %v856, 168
        %v878 = vadd.s32 %v856, 176
        %v879 = vadd.s32 %v856, 184
        %v880 = vadd.s32 %v856, 192
        %v881 = vadd.s32 %v856, 200
        %v882 = vadd.s32 %v856, 208
        %v883 = vadd.s32 %v856, 216
        %v884 = vadd.s32 %v856, 224
        %v885 = vadd.s32 %v856, 232
        %v886 = vadd.s32 %v856, 240
        %v887 = vadd.s32 %v856, 248
        %v888 = vcvt.s32.f32 %v856
        %v889 = vcvt.s32.f32 %v857
        %v890 = vcvt.s32.f32 %v858
        %v891 = vcvt.s32.f32 %v859
        %v892 = vcvt.s32.f32 %v860
        %v893 = vcvt.s32.f32 %v861
        %v894 = vcvt.s32.f32 %v862
        %v895 = vcvt.s32.f32 %v863
        %v896 = vcvt.s32.f32 %v864
        %v897 = vcvt.s32.f32 %v865
        %v898 = vcvt.s32.f32 %v866
        %v899 = vcvt.s32.f32 %v867
        %v900 = vcvt.s32.f32 %v868
        %v901 = vcvt.s32.f32 %v869
        %v902 = vcvt.s32.f32 %v870
        %v903 = vcvt.s32.f32 %v871
        %v904 = vcvt.s32.f32 %v872
        %v905 = vcvt.s32.f32 %v873
        %v906 = vcvt.s32.f32 %v874
        %v907 = vcvt.s32.f32 %v875
        %v908 = vcvt.s32.f32 %v876
        %v909 = vcvt.s32.f32 %v877
        %v910 = vcvt.s32.f32 %v878
        %v911 = vcvt.s32.f32 %v879
        %v912 = vcvt.s32.f32 %v880
        %v913 = vcvt.s32.f32 %v881
        %v914 = vcvt.s32.f32 %v882
        %v915 = vcvt.s32.f32 %v883
        %v916 = vcvt.s32.f32 %v884
        %v917 = vcvt.s32.f32 %v885
        %v918 = vcvt.s32.f32 %v886
        %v919 = vcvt.s32.f32 %v887
        %v920 = vrcp.pop 16.0
        %v921 = vmul.f32 %v888, %v920
        %v922 = vmul.f32 %v889, %v920
        %v923 = vmul.f32 %v890, %v920
        %v924 = vmul.f32 %v891, %v920
        %v925 = vmul.f32 %v892, %v920
        %v926 = vmul.f32 %v893, %v920
        %v927 = vmul.f32 %v894, %v920
        %v928 = vmul.f32 %v895, %v920
        %v929 = vmul.f32 %v896, %v920
        %v930 = vmul.f32 %v897, %v920
        %v931 = vmul.f32 %v898, %v920
        %v932 = vmul.f32 %v899, %v920
        %v933 = vmul.f32 %v900, %v920
        %v934 = vmul.f32 %v901, %v920
        %v935 = vmul.f32 %v902, %v920
        %v936 = vmul.f32 %v903, %v920
        %v937 = vmul.f32 %v904, %v920
        %v938 = vmul.f32 %v905, %v920
        %v939 = vmul.f32 %v906, %v920
        %v940 = vmul.f32 %v907, %v920
        %v941 = vmul.f32 %v908, %v920
        %v942 = vmul.f32 %v909, %v920
        %v943 = vmul.f32 %v910, %v920
        %v944 = vmul.f32 %v911, %v920
        %v945 = vmul.f32 %v912, %v920
        %v946 = vmul.f32 %v913, %v920
        %v947 = vmul.f32 %v914, %v920
        %v948 = vmul.f32 %v915, %v920
        %v949 = vmul.f32 %v916, %v920
        %v950 = vmul.f32 %v917, %v920
        %v951 = vmul.f32 %v918, %v920
        %v952 = vmul.f32 %v919, %v920
        %v953 = vfloor.f32 %v921
        %v954 = vfloor.f32 %v922
        %v955 = vfloor.f32 %v923
        %v956 = vfloor.f32 %v924
        %v957 = vfloor.f32 %v925
        %v958 = vfloor.f32 %v926
        %v959 = vfloor.f32 %v927
        %v960 = vfloor.f32 %v928
        %v961 = vfloor.f32 %v929
        %v962 = vfloor.f32 %v930
        %v963 = vfloor.f32 %v931
        %v964 = vfloor.f32 %v932
        %v965 = vfloor.f32 %v933
        %v966 = vfloor.f32 %v934
        %v967 = vfloor.f32 %v935
        %v968 = vfloor.f32 %v936
        %v969 = vfloor.f32 %v937
        %v970 = vfloor.f32 %v938
        %v971 = vfloor.f32 %v939
        %v972 = vfloor.f32 %v940
        %v973 = vfloor.f32 %v941
        %v974 = vfloor.f32 %v942
        %v975 = vfloor.f32 %v943
        %v976 = vfloor.f32 %v944
        %v977 = vfloor.f32 %v945
        %v978 = vfloor.f32 %v946
        %v979 = vfloor.f32 %v947
        %v980 = vfloor.f32 %v948
        %v981 = vfloor.f32 %v949
        %v982 = vfloor.f32 %v950
        %v983 = vfloor.f32 %v951
        %v984 = vfloor.f32 %v952
        %v985 = vmul.f32 %v953, 16.0
        %v986 = vmul.f32 %v954, 16.0
        %v987 = vmul.f32 %v955, 16.0
        %v988 = vmul.f32 %v956, 16.0
        %v989 = vmul.f32 %v957, 16.0
        %v990 = vmul.f32 %v958, 16.0
        %v991 = vmul.f32 %v959, 16.0
        %v992 = vmul.f32 %v960, 16.0
        %v993 = vmul.f32 %v961, 16.0
        %v994 = vmul.f32 %v962, 16.0
        %v995 = vmul.f32 %v963, 16.0
        %v996 = vmul.f32 %v964, 16.0
        %v997 = vmul.f32 %v965, 16.0
        %v998 = vmul.f32 %v966, 16.0
        %v999 = vmul.f32 %v967, 16.0
        %v1000 = vmul.f32 %v968, 16.0
        %v1001 = vmul.f32 %v969, 16.0
        %v1002 = vmul.f32 %v970, 16.0
        %v1003 = vmul.f32 %v971, 16.0
        %v1004 = vmul.f32 %v972, 16.0
        %v1005 = vmul.f32 %v973, 16.0
        %v1006 = vmul.f32 %v974, 16.0
        %v1007 = vmul.f32 %v975, 16.0
        %v1008 = vmul.f32 %v976, 16.0
        %v1009 = vmul.f32 %v977, 16.0
        %v1010 = vmul.f32 %v978, 16.0
        %v1011 = vmul.f32 %v979, 16.0
        %v1012 = vmul.f32 %v980, 16.0
        %v1013 = vmul.f32 %v981, 16.0
        %v1014 = vmul.f32 %v982, 16.0
        %v1015 = vmul.f32 %v983, 16.0
        %v1016 = vmul.f32 %v984, 16.0
        %v1017 = vsub.f32 %v888, %v985
        %v1018 = vsub.f32 %v889, %v986
        %v1019 = vsub.f32 %v890, %v987
        %v1020 = vsub.f32 %v891, %v988
        %v1021 = vsub.f32 %v892, %v989
        %v1022 = vsub.f32 %v893, %v990
        %v1023 = vsub.f32 %v894, %v991
        %v1024 = vsub.f32 %v895, %v992
        %v1025 = vsub.f32 %v896, %v993
        %v1026 = vsub.f32 %v897, %v994
        %v1027 = vsub.f32 %v898, %v995
        %v1028 = vsub.f32 %v899, %v996
        %v1029 = vsub.f32 %v900, %v997
        %v1030 = vsub.f32 %v901, %v998
        %v1031 = vsub.f32 %v902, %v999
        %v1032 = vsub.f32 %v903, %v1000
        %v1033 = vsub.f32 %v904, %v1001
        %v1034 = vsub.f32 %v905, %v1002
        %v1035 = vsub.f32 %v906, %v1003
        %v1036 = vsub.f32 %v907, %v1004
        %v1037 = vsub.f32 %v908, %v1005
        %v1038 = vsub.f32 %v909, %v1006
        %v1039 = vsub.f32 %v910, %v1007
        %v1040 = vsub.f32 %v911, %v1008
        %v1041 = vsub.f32 %v912, %v1009
        %v1042 = vsub.f32 %v913, %v1010
        %v1043 = vsub.f32 %v914, %v1011
        %v1044 = vsub.f32 %v915, %v1012
        %v1045 = vsub.f32 %v916, %v1013
        %v1046 = vsub.f32 %v917, %v1014
        %v1047 = vsub.f32 %v918, %v1015
        %v1048 = vsub.f32 %v919, %v1016
        %v1049 = vmul.f32 %v953, %v920
        %v1050 = vmul.f32 %v954, %v920
        %v1051 = vmul.f32 %v955, %v920
        %v1052 = vmul.f32 %v956, %v920
        %v1053 = vmul.f32 %v957, %v920
        %v1054 = vmul.f32 %v958, %v920
        %v1055 = vmul.f32 %v959, %v920
        %v1056 = vmul.f32 %v960, %v920
        %v1057 = vmul.f32 %v961, %v920
        %v1058 = vmul.f32 %v962, %v920
        %v1059 = vmul.f32 %v963, %v920
        %v1060 = vmul.f32 %v964, %v920
        %v1061 = vmul.f32 %v965, %v920
        %v1062 = vmul.f32 %v966, %v920
        %v1063 = vmul.f32 %v967, %v920
        %v1064 = vmul.f32 %v968, %v920
        %v1065 = vmul.f32 %v969, %v920
        %v1066 = vmul.f32 %v970, %v920
        %v1067 = vmul.f32 %v971, %v920
        %v1068 = vmul.f32 %v972, %v920
        %v1069 = vmul.f32 %v973, %v920
        %v1070 = vmul.f32 %v974, %v920
        %v1071 = vmul.f32 %v975, %v920
        %v1072 = vmul.f32 %v976, %v920
        %v1073 = vmul.f32 %v977, %v920
        %v1074 = vmul.f32 %v978, %v920
        %v1075 = vmul.f32 %v979, %v920
        %v1076 = vmul.f32 %v980, %v920
        %v1077 = vmul.f32 %v981, %v920
        %v1078 = vmul.f32 %v982, %v920
        %v1079 = vmul.f32 %v983, %v920
        %v1080 = vmul.f32 %v984, %v920
        %v1081 = vfloor.f32 %v1049
        %v1082 = vfloor.f32 %v1050
        %v1083 = vfloor.f32 %v1051
        %v1084 = vfloor.f32 %v1052
        %v1085 = vfloor.f32 %v1053
        %v1086 = vfloor.f32 %v1054
        %v1087 = vfloor.f32 %v1055
        %v1088 = vfloor.f32 %v1056
        %v1089 = vfloor.f32 %v1057
        %v1090 = vfloor.f32 %v1058
        %v1091 = vfloor.f32 %v1059
        %v1092 = vfloor.f32 %v1060
        %v1093 = vfloor.f32 %v1061
        %v1094 = vfloor.f32 %v1062
        %v1095 = vfloor.f32 %v1063
        %v1096 = vfloor.f32 %v1064
        %v1097 = vfloor.f32 %v1065
        %v1098 = vfloor.f32 %v1066
        %v1099 = vfloor.f32 %v1067
        %v1100 = vfloor.f32 %v1068
        %v1101 = vfloor.f32 %v1069
        %v1102 = vfloor.f32 %v1070
        %v1103 = vfloor.f32 %v1071
        %v1104 = vfloor.f32 %v1072
        %v1105 = vfloor.f32 %v1073
        %v1106 = vfloor.f32 %v1074
        %v1107 = vfloor.f32 %v1075
        %v1108 = vfloor.f32 %v1076
        %v1109 = vfloor.f32 %v1077
        %v1110 = vfloor.f32 %v1078
        %v1111 = vfloor.f32 %v1079
        %v1112 = vfloor.f32 %v1080
        %v1113 = vmul.f32 %v1081, 16.0
        %v1114 = vmul.f32 %v1082, 16.0
        %v1115 = vmul.f32 %v1083, 16.0
        %v1116 = vmul.f32 %v1084, 16.0
        %v1117 = vmul.f32 %v1085, 16.0
        %v1118 = vmul.f32 %v1086, 16.0
        %v1119 = vmul.f32 %v1087, 16.0
        %v1120 = vmul.f32 %v1088, 16.0
        %v1121 = vmul.f32 %v1089, 16.0
        %v1122 = vmul.f32 %v1090, 16.0
        %v1123 = vmul.f32 %v1091, 16.0
        %v1124 = vmul.f32 %v1092, 16.0
        %v1125 = vmul.f32 %v1093, 16.0
        %v1126 = vmul.f32 %v1094, 16.0
        %v1127 = vmul.f32 %v1095, 16.0
        %v1128 = vmul.f32 %v1096, 16.0
        %v1129 = vmul.f32 %v1097, 16.0
        %v1130 = vmul.f32 %v1098, 16.0
        %v1131 = vmul.f32 %v1099, 16.0
        %v1132 = vmul.f32 %v1100, 16.0
        %v1133 = vmul.f32 %v1101, 16.0
        %v1134 = vmul.f32 %v1102, 16.0
        %v1135 = vmul.f32 %v1103, 16.0
        %v1136 = vmul.f32 %v1104, 16.0
        %v1137 = vmul.f32 %v1105, 16.0
        %v1138 = vmul.f32 %v1106, 16.0
        %v1139 = vmul.f32 %v1107, 16.0
        %v1140 = vmul.f32 %v1108, 16.0
        %v1141 = vmul.f32 %v1109, 16.0
        %v1142 = vmul.f32 %v1110, 16.0
        %v1143 = vmul.f32 %v1111, 16.0
        %v1144 = vmul.f32 %v1112, 16.0
        %v1145 = vsub.f32 %v953, %v1113
        %v1146 = vsub.f32 %v954, %v1114
        %v1147 = vsub.f32 %v955, %v1115
        %v1148 = vsub.f32 %v956, %v1116
        %v1149 = vsub.f32 %v957, %v1117
        %v1150 = vsub.f32 %v958, %v1118
        %v1151 = vsub.f32 %v959, %v1119
        %v1152 = vsub.f32 %v960, %v1120
        %v1153 = vsub.f32 %v961, %v1121
        %v1154 = vsub.f32 %v962, %v1122
        %v1155 = vsub.f32 %v963, %v1123
        %v1156 = vsub.f32 %v964, %v1124
        %v1157 = vsub.f32 %v965, %v1125
        %v1158 = vsub.f32 %v966, %v1126
        %v1159 = vsub.f32 %v967, %v1127
        %v1160 = vsub.f32 %v968, %v1128
        %v1161 = vsub.f32 %v969, %v1129
        %v1162 = vsub.f32 %v970, %v1130
        %v1163 = vsub.f32 %v971, %v1131
        %v1164 = vsub.f32 %v972, %v1132
        %v1165 = vsub.f32 %v973, %v1133
        %v1166 = vsub.f32 %v974, %v1134
        %v1167 = vsub.f32 %v975, %v1135
        %v1168 = vsub.f32 %v976, %v1136
        %v1169 = vsub.f32 %v977, %v1137
        %v1170 = vsub.f32 %v978, %v1138
        %v1171 = vsub.f32 %v979, %v1139
        %v1172 = vsub.f32 %v980, %v1140
        %v1173 = vsub.f32 %v981, %v1141
        %v1174 = vsub.f32 %v982, %v1142
        %v1175 = vsub.f32 %v983, %v1143
        %v1176 = vsub.f32 %v984, %v1144
        %v1177 = vld [vmem:[#allocation2 + $0x7] sm:$0xff]
        %v1178 = vld [vmem:[#allocation2 + $0xf] sm:$0xff]
        %v1179 = vld [vmem:[#allocation2 + $0x17] sm:$0xff]
        %v1180 = vld [vmem:[#allocation2 + $0x1f] sm:$0xff]
        %v1181 = vld [vmem:[#allocation2 + $0x27] sm:$0xff]
        %v1182 = vld [vmem:[#allocation2 + $0x2f] sm:$0xff]
        %v1183 = vld [vmem:[#allocation2 + $0x37] sm:$0xff]
        %v1184 = vld [vmem:[#allocation2 + $0x3f] sm:$0xff]
        %v1185 = vld [vmem:[#allocation2 + $0x47] sm:$0xff]
        %v1186 = vld [vmem:[#allocation2 + $0x4f] sm:$0xff]
        %v1187 = vld [vmem:[#allocation2 + $0x57] sm:$0xff]
        %v1188 = vld [vmem:[#allocation2 + $0x5f] sm:$0xff]
        %v1189 = vld [vmem:[#allocation2 + $0x67] sm:$0xff]
        %v1190 = vld [vmem:[#allocation2 + $0x6f] sm:$0xff]
        %v1191 = vld [vmem:[#allocation2 + $0x77] sm:$0xff]
        %v1192 = vld [vmem:[#allocation2 + $0x7f] sm:$0xff]
        %v1193 = vld [vmem:[#allocation2 + $0x87] sm:$0xff]
        %v1194 = vld [vmem:[#allocation2 + $0x8f] sm:$0xff]
        %v1195 = vld [vmem:[#allocation2 + $0x97] sm:$0xff]
        %v1196 = vld [vmem:[#allocation2 + $0x9f] sm:$0xff]
        %v1197 = vld [vmem:[#allocation2 + $0xa7] sm:$0xff]
        %v1198 = vld [vmem:[#allocation2 + $0xaf] sm:$0xff]
        %v1199 = vld [vmem:[#allocation2 + $0xb7] sm:$0xff]
        %v1200 = vld [vmem:[#allocation2 + $0xbf] sm:$0xff]
        %v1201 = vld [vmem:[#allocation2 + $0xc7] sm:$0xff]
        %v1202 = vld [vmem:[#allocation2 + $0xcf] sm:$0xff]
        %v1203 = vld [vmem:[#allocation2 + $0xd7] sm:$0xff]
        %v1204 = vld [vmem:[#allocation2 + $0xdf] sm:$0xff]
        %v1205 = vld [vmem:[#allocation2 + $0xe7] sm:$0xff]
        %v1206 = vld [vmem:[#allocation2 + $0xef] sm:$0xff]
        %v1207 = vld [vmem:[#allocation2 + $0xf7] sm:$0xff]
        %v1208 = vld [vmem:[#allocation2 + $0xff] sm:$0xff]
        %vm1209 = vcmp.ge.f32.partialorder %v1145, 1.0
        %vm1210 = vcmp.ge.f32.partialorder %v1146, 1.0
        %vm1211 = vcmp.ge.f32.partialorder %v1147, 1.0
        %vm1212 = vcmp.ge.f32.partialorder %v1148, 1.0
        %vm1213 = vcmp.ge.f32.partialorder %v1149, 1.0
        %vm1214 = vcmp.ge.f32.partialorder %v1150, 1.0
        %vm1215 = vcmp.ge.f32.partialorder %v1151, 1.0
        %vm1216 = vcmp.ge.f32.partialorder %v1152, 1.0
        %vm1217 = vcmp.ge.f32.partialorder %v1153, 1.0
        %vm1218 = vcmp.ge.f32.partialorder %v1154, 1.0
        %vm1219 = vcmp.ge.f32.partialorder %v1155, 1.0
        %vm1220 = vcmp.ge.f32.partialorder %v1156, 1.0
        %vm1221 = vcmp.ge.f32.partialorder %v1157, 1.0
        %vm1222 = vcmp.ge.f32.partialorder %v1158, 1.0
        %vm1223 = vcmp.ge.f32.partialorder %v1159, 1.0
        %vm1224 = vcmp.ge.f32.partialorder %v1160, 1.0
        %vm1225 = vcmp.ge.f32.partialorder %v1161, 1.0
        %vm1226 = vcmp.ge.f32.partialorder %v1162, 1.0
        %vm1227 = vcmp.ge.f32.partialorder %v1163, 1.0
        %vm1228 = vcmp.ge.f32.partialorder %v1164, 1.0
        %vm1229 = vcmp.ge.f32.partialorder %v1165, 1.0
        %vm1230 = vcmp.ge.f32.partialorder %v1166, 1.0
        %vm1231 = vcmp.ge.f32.partialorder %v1167, 1.0
        %vm1232 = vcmp.ge.f32.partialorder %v1168, 1.0
        %vm1233 = vcmp.ge.f32.partialorder %v1169, 1.0
        %vm1234 = vcmp.ge.f32.partialorder %v1170, 1.0
        %vm1235 = vcmp.ge.f32.partialorder %v1171, 1.0
        %vm1236 = vcmp.ge.f32.partialorder %v1172, 1.0
        %vm1237 = vcmp.ge.f32.partialorder %v1173, 1.0
        %vm1238 = vcmp.ge.f32.partialorder %v1174, 1.0
        %vm1239 = vcmp.ge.f32.partialorder %v1175, 1.0
        %vm1240 = vcmp.ge.f32.partialorder %v1176, 1.0
        %vm1241 = vcmp.ge.f32.partialorder %v1017, 1.0
        %vm1242 = vcmp.ge.f32.partialorder %v1018, 1.0
        %vm1243 = vcmp.ge.f32.partialorder %v1019, 1.0
        %vm1244 = vcmp.ge.f32.partialorder %v1020, 1.0
        %vm1245 = vcmp.ge.f32.partialorder %v1021, 1.0
        %vm1246 = vcmp.ge.f32.partialorder %v1022, 1.0
        %vm1247 = vcmp.ge.f32.partialorder %v1023, 1.0
        %vm1248 = vcmp.ge.f32.partialorder %v1024, 1.0
        %vm1249 = vcmp.ge.f32.partialorder %v1025, 1.0
        %vm1250 = vcmp.ge.f32.partialorder %v1026, 1.0
        %vm1251 = vcmp.ge.f32.partialorder %v1027, 1.0
        %vm1252 = vcmp.ge.f32.partialorder %v1028, 1.0
        %vm1253 = vcmp.ge.f32.partialorder %v1029, 1.0
        %vm1254 = vcmp.ge.f32.partialorder %v1030, 1.0
        %vm1255 = vcmp.ge.f32.partialorder %v1031, 1.0
        %vm1256 = vcmp.ge.f32.partialorder %v1032, 1.0
        %vm1257 = vcmp.ge.f32.partialorder %v1033, 1.0
        %vm1258 = vcmp.ge.f32.partialorder %v1034, 1.0
        %vm1259 = vcmp.ge.f32.partialorder %v1035, 1.0
        %vm1260 = vcmp.ge.f32.partialorder %v1036, 1.0
        %vm1261 = vcmp.ge.f32.partialorder %v1037, 1.0
        %vm1262 = vcmp.ge.f32.partialorder %v1038, 1.0
        %vm1263 = vcmp.ge.f32.partialorder %v1039, 1.0
        %vm1264 = vcmp.ge.f32.partialorder %v1040, 1.0
        %vm1265 = vcmp.ge.f32.partialorder %v1041, 1.0
        %vm1266 = vcmp.ge.f32.partialorder %v1042, 1.0
        %vm1267 = vcmp.ge.f32.partialorder %v1043, 1.0
        %vm1268 = vcmp.ge.f32.partialorder %v1044, 1.0
        %vm1269 = vcmp.ge.f32.partialorder %v1045, 1.0
        %vm1270 = vcmp.ge.f32.partialorder %v1046, 1.0
        %vm1271 = vcmp.ge.f32.partialorder %v1047, 1.0
        %vm1272 = vcmp.ge.f32.partialorder %v1048, 1.0
        %vm1273 = vmand %vm1209, %vm1241
        %vm1274 = vmand %vm1210, %vm1242
        %vm1275 = vmand %vm1211, %vm1243
        %vm1276 = vmand %vm1212, %vm1244
        %vm1277 = vmand %vm1213, %vm1245
        %vm1278 = vmand %vm1214, %vm1246
        %vm1279 = vmand %vm1215, %vm1247
        %vm1280 = vmand %vm1216, %vm1248
        %vm1281 = vmand %vm1217, %vm1249
        %vm1282 = vmand %vm1218, %vm1250
        %vm1283 = vmand %vm1219, %vm1251
        %vm1284 = vmand %vm1220, %vm1252
        %vm1285 = vmand %vm1221, %vm1253
        %vm1286 = vmand %vm1222, %vm1254
        %vm1287 = vmand %vm1223, %vm1255
        %vm1288 = vmand %vm1224, %vm1256
        %vm1289 = vmand %vm1225, %vm1257
        %vm1290 = vmand %vm1226, %vm1258
        %vm1291 = vmand %vm1227, %vm1259
        %vm1292 = vmand %vm1228, %vm1260
        %vm1293 = vmand %vm1229, %vm1261
        %vm1294 = vmand %vm1230, %vm1262
        %vm1295 = vmand %vm1231, %vm1263
        %vm1296 = vmand %vm1232, %vm1264
        %vm1297 = vmand %vm1233, %vm1265
        %vm1298 = vmand %vm1234, %vm1266
        %vm1299 = vmand %vm1235, %vm1267
        %vm1300 = vmand %vm1236, %vm1268
        %vm1301 = vmand %vm1237, %vm1269
        %vm1302 = vmand %vm1238, %vm1270
        %vm1303 = vmand %vm1239, %vm1271
        %vm1304 = vmand %vm1240, %vm1272
        %v1305 = vsel %vm1273, 1, 0
        %v1306 = vsel %vm1274, 1, 0
        %v1307 = vsel %vm1275, 1, 0
        %v1308 = vsel %vm1276, 1, 0
        %v1309 = vsel %vm1277, 1, 0
        %v1310 = vsel %vm1278, 1, 0
        %v1311 = vsel %vm1279, 1, 0
        %v1312 = vsel %vm1280, 1, 0
        %v1313 = vsel %vm1281, 1, 0
        %v1314 = vsel %vm1282, 1, 0
        %v1315 = vsel %vm1283, 1, 0
        %v1316 = vsel %vm1284, 1, 0
        %v1317 = vsel %vm1285, 1, 0
        %v1318 = vsel %vm1286, 1, 0
        %v1319 = vsel %vm1287, 1, 0
        %v1320 = vsel %vm1288, 1, 0
        %v1321 = vsel %vm1289, 1, 0
        %v1322 = vsel %vm1290, 1, 0
        %v1323 = vsel %vm1291, 1, 0
        %v1324 = vsel %vm1292, 1, 0
        %v1325 = vsel %vm1293, 1, 0
        %v1326 = vsel %vm1294, 1, 0
        %v1327 = vsel %vm1295, 1, 0
        %v1328 = vsel %vm1296, 1, 0
        %v1329 = vsel %vm1297, 1, 0
        %v1330 = vsel %vm1298, 1, 0
        %v1331 = vsel %vm1299, 1, 0
        %v1332 = vsel %vm1300, 1, 0
        %v1333 = vsel %vm1301, 1, 0
        %v1334 = vsel %vm1302, 1, 0
        %v1335 = vsel %vm1303, 1, 0
        %v1336 = vsel %vm1304, 1, 0
        %vm1337 = vcmp.eq.s32.totalorder %v1305, 1
        %vm1338 = vcmp.eq.s32.totalorder %v1306, 1
        %vm1339 = vcmp.eq.s32.totalorder %v1307, 1
        %vm1340 = vcmp.eq.s32.totalorder %v1308, 1
        %vm1341 = vcmp.eq.s32.totalorder %v1309, 1
        %vm1342 = vcmp.eq.s32.totalorder %v1310, 1
        %vm1343 = vcmp.eq.s32.totalorder %v1311, 1
        %vm1344 = vcmp.eq.s32.totalorder %v1312, 1
        %vm1345 = vcmp.eq.s32.totalorder %v1313, 1
        %vm1346 = vcmp.eq.s32.totalorder %v1314, 1
        %vm1347 = vcmp.eq.s32.totalorder %v1315, 1
        %vm1348 = vcmp.eq.s32.totalorder %v1316, 1
        %vm1349 = vcmp.eq.s32.totalorder %v1317, 1
        %vm1350 = vcmp.eq.s32.totalorder %v1318, 1
        %vm1351 = vcmp.eq.s32.totalorder %v1319, 1
        %vm1352 = vcmp.eq.s32.totalorder %v1320, 1
        %vm1353 = vcmp.eq.s32.totalorder %v1321, 1
        %vm1354 = vcmp.eq.s32.totalorder %v1322, 1
        %vm1355 = vcmp.eq.s32.totalorder %v1323, 1
        %vm1356 = vcmp.eq.s32.totalorder %v1324, 1
        %vm1357 = vcmp.eq.s32.totalorder %v1325, 1
        %vm1358 = vcmp.eq.s32.totalorder %v1326, 1
        %vm1359 = vcmp.eq.s32.totalorder %v1327, 1
        %vm1360 = vcmp.eq.s32.totalorder %v1328, 1
        %vm1361 = vcmp.eq.s32.totalorder %v1329, 1
        %vm1362 = vcmp.eq.s32.totalorder %v1330, 1
        %vm1363 = vcmp.eq.s32.totalorder %v1331, 1
        %vm1364 = vcmp.eq.s32.totalorder %v1332, 1
        %vm1365 = vcmp.eq.s32.totalorder %v1333, 1
        %vm1366 = vcmp.eq.s32.totalorder %v1334, 1
        %vm1367 = vcmp.eq.s32.totalorder %v1335, 1
        %vm1368 = vcmp.eq.s32.totalorder %v1336, 1
        %v1369 = vsel %vm1337, %v1177, 0.0
        %v1370 = vsel %vm1338, %v1178, 0.0
        %v1371 = vsel %vm1339, %v1179, 0.0
        %v1372 = vsel %vm1340, %v1180, 0.0
        %v1373 = vsel %vm1341, %v1181, 0.0
        %v1374 = vsel %vm1342, %v1182, 0.0
        %v1375 = vsel %vm1343, %v1183, 0.0
        %v1376 = vsel %vm1344, %v1184, 0.0
        %v1377 = vsel %vm1345, %v1185, 0.0
        %v1378 = vsel %vm1346, %v1186, 0.0
        %v1379 = vsel %vm1347, %v1187, 0.0
        %v1380 = vsel %vm1348, %v1188, 0.0
        %v1381 = vsel %vm1349, %v1189, 0.0
        %v1382 = vsel %vm1350, %v1190, 0.0
        %v1383 = vsel %vm1351, %v1191, 0.0
        %v1384 = vsel %vm1352, %v1192, 0.0
        %v1385 = vsel %vm1353, %v1193, 0.0
        %v1386 = vsel %vm1354, %v1194, 0.0
        %v1387 = vsel %vm1355, %v1195, 0.0
        %v1388 = vsel %vm1356, %v1196, 0.0
        %v1389 = vsel %vm1357, %v1197, 0.0
        %v1390 = vsel %vm1358, %v1198, 0.0
        %v1391 = vsel %vm1359, %v1199, 0.0
        %v1392 = vsel %vm1360, %v1200, 0.0
        %v1393 = vsel %vm1361, %v1201, 0.0
        %v1394 = vsel %vm1362, %v1202, 0.0
        %v1395 = vsel %vm1363, %v1203, 0.0
        %v1396 = vsel %vm1364, %v1204, 0.0
        %v1397 = vsel %vm1365, %v1205, 0.0
        %v1398 = vsel %vm1366, %v1206, 0.0
        %v1399 = vsel %vm1367, %v1207, 0.0
        %v1400 = vsel %vm1368, %v1208, 0.0
        %v1401 = vpack.c.bf16 %v1370, %v1369
        %v1402 = vpack.c.bf16 %v1372, %v1371
        %v1403 = vpack.c.bf16 %v1374, %v1373
        %v1404 = vpack.c.bf16 %v1376, %v1375
        %v1405 = vpack.c.bf16 %v1378, %v1377
        %v1406 = vpack.c.bf16 %v1380, %v1379
        %v1407 = vpack.c.bf16 %v1382, %v1381
        %v1408 = vpack.c.bf16 %v1384, %v1383
        %v1409 = vpack.c.bf16 %v1386, %v1385
        %v1410 = vpack.c.bf16 %v1388, %v1387
        %v1411 = vpack.c.bf16 %v1390, %v1389
        %v1412 = vpack.c.bf16 %v1392, %v1391
        %v1413 = vpack.c.bf16 %v1394, %v1393
        %v1414 = vpack.c.bf16 %v1396, %v1395
        %v1415 = vpack.c.bf16 %v1398, %v1397
        %v1416 = vpack.c.bf16 %v1400, %v1399
        %v1417 = vld [vmem:[#allocation2 + $0x8] sm:$0xff]
        %v1418 = vld [vmem:[#allocation2 + $0x10] sm:$0xff]
        %v1419 = vld [vmem:[#allocation2 + $0x18] sm:$0xff]
        %v1420 = vld [vmem:[#allocation2 + $0x20] sm:$0xff]
        %v1421 = vld [vmem:[#allocation2 + $0x28] sm:$0xff]
        %v1422 = vld [vmem:[#allocation2 + $0x30] sm:$0xff]
        %v1423 = vld [vmem:[#allocation2 + $0x38] sm:$0xff]
        %v1424 = vld [vmem:[#allocation2 + $0x40] sm:$0xff]
        %v1425 = vld [vmem:[#allocation2 + $0x48] sm:$0xff]
        %v1426 = vld [vmem:[#allocation2 + $0x50] sm:$0xff]
        %v1427 = vld [vmem:[#allocation2 + $0x58] sm:$0xff]
        %v1428 = vld [vmem:[#allocation2 + $0x60] sm:$0xff]
        %v1429 = vld [vmem:[#allocation2 + $0x68] sm:$0xff]
        %v1430 = vld [vmem:[#allocation2 + $0x70] sm:$0xff]
        %v1431 = vld [vmem:[#allocation2 + $0x78] sm:$0xff]
        %v1432 = vld [vmem:[#allocation2 + $0x80] sm:$0xff]
        %v1433 = vld [vmem:[#allocation2 + $0x88] sm:$0xff]
        %v1434 = vld [vmem:[#allocation2 + $0x90] sm:$0xff]
        %v1435 = vld [vmem:[#allocation2 + $0x98] sm:$0xff]
        %v1436 = vld [vmem:[#allocation2 + $0xa0] sm:$0xff]
        %v1437 = vld [vmem:[#allocation2 + $0xa8] sm:$0xff]
        %v1438 = vld [vmem:[#allocation2 + $0xb0] sm:$0xff]
        %v1439 = vld [vmem:[#allocation2 + $0xb8] sm:$0xff]
        %v1440 = vld [vmem:[#allocation2 + $0xc0] sm:$0xff]
        %v1441 = vld [vmem:[#allocation2 + $0xc8] sm:$0xff]
        %v1442 = vld [vmem:[#allocation2 + $0xd0] sm:$0xff]
        %v1443 = vld [vmem:[#allocation2 + $0xd8] sm:$0xff]
        %v1444 = vld [vmem:[#allocation2 + $0xe0] sm:$0xff]
        %v1445 = vld [vmem:[#allocation2 + $0xe8] sm:$0xff]
        %v1446 = vld [vmem:[#allocation2 + $0xf0] sm:$0xff]
        %v1447 = vld [vmem:[#allocation2 + $0xf8] sm:$0xff]
        %v1448 = vld [vmem:[#allocation2 + $0x100] sm:$0xff]
        %v1449 = vsel %vm1209, 1, 0
        %v1450 = vsel %vm1210, 1, 0
        %v1451 = vsel %vm1211, 1, 0
        %v1452 = vsel %vm1212, 1, 0
        %v1453 = vsel %vm1213, 1, 0
        %v1454 = vsel %vm1214, 1, 0
        %v1455 = vsel %vm1215, 1, 0
        %v1456 = vsel %vm1216, 1, 0
        %v1457 = vsel %vm1217, 1, 0
        %v1458 = vsel %vm1218, 1, 0
        %v1459 = vsel %vm1219, 1, 0
        %v1460 = vsel %vm1220, 1, 0
        %v1461 = vsel %vm1221, 1, 0
        %v1462 = vsel %vm1222, 1, 0
        %v1463 = vsel %vm1223, 1, 0
        %v1464 = vsel %vm1224, 1, 0
        %v1465 = vsel %vm1225, 1, 0
        %v1466 = vsel %vm1226, 1, 0
        %v1467 = vsel %vm1227, 1, 0
        %v1468 = vsel %vm1228, 1, 0
        %v1469 = vsel %vm1229, 1, 0
        %v1470 = vsel %vm1230, 1, 0
        %v1471 = vsel %vm1231, 1, 0
        %v1472 = vsel %vm1232, 1, 0
        %v1473 = vsel %vm1233, 1, 0
        %v1474 = vsel %vm1234, 1, 0
        %v1475 = vsel %vm1235, 1, 0
        %v1476 = vsel %vm1236, 1, 0
        %v1477 = vsel %vm1237, 1, 0
        %v1478 = vsel %vm1238, 1, 0
        %v1479 = vsel %vm1239, 1, 0
        %v1480 = vsel %vm1240, 1, 0
        %vm1481 = vcmp.eq.s32.totalorder %v1449, 1
        %vm1482 = vcmp.eq.s32.totalorder %v1450, 1
        %vm1483 = vcmp.eq.s32.totalorder %v1451, 1
        %vm1484 = vcmp.eq.s32.totalorder %v1452, 1
        %vm1485 = vcmp.eq.s32.totalorder %v1453, 1
        %vm1486 = vcmp.eq.s32.totalorder %v1454, 1
        %vm1487 = vcmp.eq.s32.totalorder %v1455, 1
        %vm1488 = vcmp.eq.s32.totalorder %v1456, 1
        %vm1489 = vcmp.eq.s32.totalorder %v1457, 1
        %vm1490 = vcmp.eq.s32.totalorder %v1458, 1
        %vm1491 = vcmp.eq.s32.totalorder %v1459, 1
        %vm1492 = vcmp.eq.s32.totalorder %v1460, 1
        %vm1493 = vcmp.eq.s32.totalorder %v1461, 1
        %vm1494 = vcmp.eq.s32.totalorder %v1462, 1
        %vm1495 = vcmp.eq.s32.totalorder %v1463, 1
        %vm1496 = vcmp.eq.s32.totalorder %v1464, 1
        %vm1497 = vcmp.eq.s32.totalorder %v1465, 1
        %vm1498 = vcmp.eq.s32.totalorder %v1466, 1
        %vm1499 = vcmp.eq.s32.totalorder %v1467, 1
        %vm1500 = vcmp.eq.s32.totalorder %v1468, 1
        %vm1501 = vcmp.eq.s32.totalorder %v1469, 1
        %vm1502 = vcmp.eq.s32.totalorder %v1470, 1
        %vm1503 = vcmp.eq.s32.totalorder %v1471, 1
        %vm1504 = vcmp.eq.s32.totalorder %v1472, 1
        %vm1505 = vcmp.eq.s32.totalorder %v1473, 1
        %vm1506 = vcmp.eq.s32.totalorder %v1474, 1
        %vm1507 = vcmp.eq.s32.totalorder %v1475, 1
        %vm1508 = vcmp.eq.s32.totalorder %v1476, 1
        %vm1509 = vcmp.eq.s32.totalorder %v1477, 1
        %vm1510 = vcmp.eq.s32.totalorder %v1478, 1
        %vm1511 = vcmp.eq.s32.totalorder %v1479, 1
        %vm1512 = vcmp.eq.s32.totalorder %v1480, 1
        %v1513 = vsel %vm1481, %v1417, 0.0
        %v1514 = vsel %vm1482, %v1418, 0.0
        %v1515 = vsel %vm1483, %v1419, 0.0
        %v1516 = vsel %vm1484, %v1420, 0.0
        %v1517 = vsel %vm1485, %v1421, 0.0
        %v1518 = vsel %vm1486, %v1422, 0.0
        %v1519 = vsel %vm1487, %v1423, 0.0
        %v1520 = vsel %vm1488, %v1424, 0.0
        %v1521 = vsel %vm1489, %v1425, 0.0
        %v1522 = vsel %vm1490, %v1426, 0.0
        %v1523 = vsel %vm1491, %v1427, 0.0
        %v1524 = vsel %vm1492, %v1428, 0.0
        %v1525 = vsel %vm1493, %v1429, 0.0
        %v1526 = vsel %vm1494, %v1430, 0.0
        %v1527 = vsel %vm1495, %v1431, 0.0
        %v1528 = vsel %vm1496, %v1432, 0.0
        %v1529 = vsel %vm1497, %v1433, 0.0
        %v1530 = vsel %vm1498, %v1434, 0.0
        %v1531 = vsel %vm1499, %v1435, 0.0
        %v1532 = vsel %vm1500, %v1436, 0.0
        %v1533 = vsel %vm1501, %v1437, 0.0
        %v1534 = vsel %vm1502, %v1438, 0.0
        %v1535 = vsel %vm1503, %v1439, 0.0
        %v1536 = vsel %vm1504, %v1440, 0.0
        %v1537 = vsel %vm1505, %v1441, 0.0
        %v1538 = vsel %vm1506, %v1442, 0.0
        %v1539 = vsel %vm1507, %v1443, 0.0
        %v1540 = vsel %vm1508, %v1444, 0.0
        %v1541 = vsel %vm1509, %v1445, 0.0
        %v1542 = vsel %vm1510, %v1446, 0.0
        %v1543 = vsel %vm1511, %v1447, 0.0
        %v1544 = vsel %vm1512, %v1448, 0.0
        %v1545 = vpack.c.bf16 %v1514, %v1513
        %v1546 = vpack.c.bf16 %v1516, %v1515
        %v1547 = vpack.c.bf16 %v1518, %v1517
        %v1548 = vpack.c.bf16 %v1520, %v1519
        %v1549 = vpack.c.bf16 %v1522, %v1521
        %v1550 = vpack.c.bf16 %v1524, %v1523
        %v1551 = vpack.c.bf16 %v1526, %v1525
        %v1552 = vpack.c.bf16 %v1528, %v1527
        %v1553 = vpack.c.bf16 %v1530, %v1529
        %v1554 = vpack.c.bf16 %v1532, %v1531
        %v1555 = vpack.c.bf16 %v1534, %v1533
        %v1556 = vpack.c.bf16 %v1536, %v1535
        %v1557 = vpack.c.bf16 %v1538, %v1537
        %v1558 = vpack.c.bf16 %v1540, %v1539
        %v1559 = vpack.c.bf16 %v1542, %v1541
        %v1560 = vpack.c.bf16 %v1544, %v1543
        %v1561 = vld [vmem:[#allocation2 + $0x9] sm:$0xff]
        %v1562 = vld [vmem:[#allocation2 + $0x11] sm:$0xff]
        %v1563 = vld [vmem:[#allocation2 + $0x19] sm:$0xff]
        %v1564 = vld [vmem:[#allocation2 + $0x21] sm:$0xff]
        %v1565 = vld [vmem:[#allocation2 + $0x29] sm:$0xff]
        %v1566 = vld [vmem:[#allocation2 + $0x31] sm:$0xff]
        %v1567 = vld [vmem:[#allocation2 + $0x39] sm:$0xff]
        %v1568 = vld [vmem:[#allocation2 + $0x41] sm:$0xff]
        %v1569 = vld [vmem:[#allocation2 + $0x49] sm:$0xff]
        %v1570 = vld [vmem:[#allocation2 + $0x51] sm:$0xff]
        %v1571 = vld [vmem:[#allocation2 + $0x59] sm:$0xff]
        %v1572 = vld [vmem:[#allocation2 + $0x61] sm:$0xff]
        %v1573 = vld [vmem:[#allocation2 + $0x69] sm:$0xff]
        %v1574 = vld [vmem:[#allocation2 + $0x71] sm:$0xff]
        %v1575 = vld [vmem:[#allocation2 + $0x79] sm:$0xff]
        %v1576 = vld [vmem:[#allocation2 + $0x81] sm:$0xff]
        %v1577 = vld [vmem:[#allocation2 + $0x89] sm:$0xff]
        %v1578 = vld [vmem:[#allocation2 + $0x91] sm:$0xff]
        %v1579 = vld [vmem:[#allocation2 + $0x99] sm:$0xff]
        %v1580 = vld [vmem:[#allocation2 + $0xa1] sm:$0xff]
        %v1581 = vld [vmem:[#allocation2 + $0xa9] sm:$0xff]
        %v1582 = vld [vmem:[#allocation2 + $0xb1] sm:$0xff]
        %v1583 = vld [vmem:[#allocation2 + $0xb9] sm:$0xff]
        %v1584 = vld [vmem:[#allocation2 + $0xc1] sm:$0xff]
        %v1585 = vld [vmem:[#allocation2 + $0xc9] sm:$0xff]
        %v1586 = vld [vmem:[#allocation2 + $0xd1] sm:$0xff]
        %v1587 = vld [vmem:[#allocation2 + $0xd9] sm:$0xff]
        %v1588 = vld [vmem:[#allocation2 + $0xe1] sm:$0xff]
        %v1589 = vld [vmem:[#allocation2 + $0xe9] sm:$0xff]
        %v1590 = vld [vmem:[#allocation2 + $0xf1] sm:$0xff]
        %v1591 = vld [vmem:[#allocation2 + $0xf9] sm:$0xff]
        %v1592 = vld [vmem:[#allocation2 + $0x101] sm:$0xff]
        %vm1593 = vcmp.lt.f32.partialorder %v1017, 15.0
        %vm1594 = vcmp.lt.f32.partialorder %v1018, 15.0
        %vm1595 = vcmp.lt.f32.partialorder %v1019, 15.0
        %vm1596 = vcmp.lt.f32.partialorder %v1020, 15.0
        %vm1597 = vcmp.lt.f32.partialorder %v1021, 15.0
        %vm1598 = vcmp.lt.f32.partialorder %v1022, 15.0
        %vm1599 = vcmp.lt.f32.partialorder %v1023, 15.0
        %vm1600 = vcmp.lt.f32.partialorder %v1024, 15.0
        %vm1601 = vcmp.lt.f32.partialorder %v1025, 15.0
        %vm1602 = vcmp.lt.f32.partialorder %v1026, 15.0
        %vm1603 = vcmp.lt.f32.partialorder %v1027, 15.0
        %vm1604 = vcmp.lt.f32.partialorder %v1028, 15.0
        %vm1605 = vcmp.lt.f32.partialorder %v1029, 15.0
        %vm1606 = vcmp.lt.f32.partialorder %v1030, 15.0
        %vm1607 = vcmp.lt.f32.partialorder %v1031, 15.0
        %vm1608 = vcmp.lt.f32.partialorder %v1032, 15.0
        %vm1609 = vcmp.lt.f32.partialorder %v1033, 15.0
        %vm1610 = vcmp.lt.f32.partialorder %v1034, 15.0
        %vm1611 = vcmp.lt.f32.partialorder %v1035, 15.0
        %vm1612 = vcmp.lt.f32.partialorder %v1036, 15.0
        %vm1613 = vcmp.lt.f32.partialorder %v1037, 15.0
        %vm1614 = vcmp.lt.f32.partialorder %v1038, 15.0
        %vm1615 = vcmp.lt.f32.partialorder %v1039, 15.0
        %vm1616 = vcmp.lt.f32.partialorder %v1040, 15.0
        %vm1617 = vcmp.lt.f32.partialorder %v1041, 15.0
        %vm1618 = vcmp.lt.f32.partialorder %v1042, 15.0
        %vm1619 = vcmp.lt.f32.partialorder %v1043, 15.0
        %vm1620 = vcmp.lt.f32.partialorder %v1044, 15.0
        %vm1621 = vcmp.lt.f32.partialorder %v1045, 15.0
        %vm1622 = vcmp.lt.f32.partialorder %v1046, 15.0
        %vm1623 = vcmp.lt.f32.partialorder %v1047, 15.0
        %vm1624 = vcmp.lt.f32.partialorder %v1048, 15.0
        %vm1625 = vmand %vm1209, %vm1593
        %vm1626 = vmand %vm1210, %vm1594
        %vm1627 = vmand %vm1211, %vm1595
        %vm1628 = vmand %vm1212, %vm1596
        %vm1629 = vmand %vm1213, %vm1597
        %vm1630 = vmand %vm1214, %vm1598
        %vm1631 = vmand %vm1215, %vm1599
        %vm1632 = vmand %vm1216, %vm1600
        %vm1633 = vmand %vm1217, %vm1601
        %vm1634 = vmand %vm1218, %vm1602
        %vm1635 = vmand %vm1219, %vm1603
        %vm1636 = vmand %vm1220, %vm1604
        %vm1637 = vmand %vm1221, %vm1605
        %vm1638 = vmand %vm1222, %vm1606
        %vm1639 = vmand %vm1223, %vm1607
        %vm1640 = vmand %vm1224, %vm1608
        %vm1641 = vmand %vm1225, %vm1609
        %vm1642 = vmand %vm1226, %vm1610
        %vm1643 = vmand %vm1227, %vm1611
        %vm1644 = vmand %vm1228, %vm1612
        %vm1645 = vmand %vm1229, %vm1613
        %vm1646 = vmand %vm1230, %vm1614
        %vm1647 = vmand %vm1231, %vm1615
        %vm1648 = vmand %vm1232, %vm1616
        %vm1649 = vmand %vm1233, %vm1617
        %vm1650 = vmand %vm1234, %vm1618
        %vm1651 = vmand %vm1235, %vm1619
        %vm1652 = vmand %vm1236, %vm1620
        %vm1653 = vmand %vm1237, %vm1621
        %vm1654 = vmand %vm1238, %vm1622
        %vm1655 = vmand %vm1239, %vm1623
        %vm1656 = vmand %vm1240, %vm1624
        %v1657 = vsel %vm1625, 1, 0
        %v1658 = vsel %vm1626, 1, 0
        %v1659 = vsel %vm1627, 1, 0
        %v1660 = vsel %vm1628, 1, 0
        %v1661 = vsel %vm1629, 1, 0
        %v1662 = vsel %vm1630, 1, 0
        %v1663 = vsel %vm1631, 1, 0
        %v1664 = vsel %vm1632, 1, 0
        %v1665 = vsel %vm1633, 1, 0
        %v1666 = vsel %vm1634, 1, 0
        %v1667 = vsel %vm1635, 1, 0
        %v1668 = vsel %vm1636, 1, 0
        %v1669 = vsel %vm1637, 1, 0
        %v1670 = vsel %vm1638, 1, 0
        %v1671 = vsel %vm1639, 1, 0
        %v1672 = vsel %vm1640, 1, 0
        %v1673 = vsel %vm1641, 1, 0
        %v1674 = vsel %vm1642, 1, 0
        %v1675 = vsel %vm1643, 1, 0
        %v1676 = vsel %vm1644, 1, 0
        %v1677 = vsel %vm1645, 1, 0
        %v1678 = vsel %vm1646, 1, 0
        %v1679 = vsel %vm1647, 1, 0
        %v1680 = vsel %vm1648, 1, 0
        %v1681 = vsel %vm1649, 1, 0
        %v1682 = vsel %vm1650, 1, 0
        %v1683 = vsel %vm1651, 1, 0
        %v1684 = vsel %vm1652, 1, 0
        %v1685 = vsel %vm1653, 1, 0
        %v1686 = vsel %vm1654, 1, 0
        %v1687 = vsel %vm1655, 1, 0
        %v1688 = vsel %vm1656, 1, 0
        %vm1689 = vcmp.eq.s32.totalorder %v1657, 1
        %vm1690 = vcmp.eq.s32.totalorder %v1658, 1
        %vm1691 = vcmp.eq.s32.totalorder %v1659, 1
        %vm1692 = vcmp.eq.s32.totalorder %v1660, 1
        %vm1693 = vcmp.eq.s32.totalorder %v1661, 1
        %vm1694 = vcmp.eq.s32.totalorder %v1662, 1
        %vm1695 = vcmp.eq.s32.totalorder %v1663, 1
        %vm1696 = vcmp.eq.s32.totalorder %v1664, 1
        %vm1697 = vcmp.eq.s32.totalorder %v1665, 1
        %vm1698 = vcmp.eq.s32.totalorder %v1666, 1
        %vm1699 = vcmp.eq.s32.totalorder %v1667, 1
        %vm1700 = vcmp.eq.s32.totalorder %v1668, 1
        %vm1701 = vcmp.eq.s32.totalorder %v1669, 1
        %vm1702 = vcmp.eq.s32.totalorder %v1670, 1
        %vm1703 = vcmp.eq.s32.totalorder %v1671, 1
        %vm1704 = vcmp.eq.s32.totalorder %v1672, 1
        %vm1705 = vcmp.eq.s32.totalorder %v1673, 1
        %vm1706 = vcmp.eq.s32.totalorder %v1674, 1
        %vm1707 = vcmp.eq.s32.totalorder %v1675, 1
        %vm1708 = vcmp.eq.s32.totalorder %v1676, 1
        %vm1709 = vcmp.eq.s32.totalorder %v1677, 1
        %vm1710 = vcmp.eq.s32.totalorder %v1678, 1
        %vm1711 = vcmp.eq.s32.totalorder %v1679, 1
        %vm1712 = vcmp.eq.s32.totalorder %v1680, 1
        %vm1713 = vcmp.eq.s32.totalorder %v1681, 1
        %vm1714 = vcmp.eq.s32.totalorder %v1682, 1
        %vm1715 = vcmp.eq.s32.totalorder %v1683, 1
        %vm1716 = vcmp.eq.s32.totalorder %v1684, 1
        %vm1717 = vcmp.eq.s32.totalorder %v1685, 1
        %vm1718 = vcmp.eq.s32.totalorder %v1686, 1
        %vm1719 = vcmp.eq.s32.totalorder %v1687, 1
        %vm1720 = vcmp.eq.s32.totalorder %v1688, 1
        %v1721 = vsel %vm1689, %v1561, 0.0
        %v1722 = vsel %vm1690, %v1562, 0.0
        %v1723 = vsel %vm1691, %v1563, 0.0
        %v1724 = vsel %vm1692, %v1564, 0.0
        %v1725 = vsel %vm1693, %v1565, 0.0
        %v1726 = vsel %vm1694, %v1566, 0.0
        %v1727 = vsel %vm1695, %v1567, 0.0
        %v1728 = vsel %vm1696, %v1568, 0.0
        %v1729 = vsel %vm1697, %v1569, 0.0
        %v1730 = vsel %vm1698, %v1570, 0.0
        %v1731 = vsel %vm1699, %v1571, 0.0
        %v1732 = vsel %vm1700, %v1572, 0.0
        %v1733 = vsel %vm1701, %v1573, 0.0
        %v1734 = vsel %vm1702, %v1574, 0.0
        %v1735 = vsel %vm1703, %v1575, 0.0
        %v1736 = vsel %vm1704, %v1576, 0.0
        %v1737 = vsel %vm1705, %v1577, 0.0
        %v1738 = vsel %vm1706, %v1578, 0.0
        %v1739 = vsel %vm1707, %v1579, 0.0
        %v1740 = vsel %vm1708, %v1580, 0.0
        %v1741 = vsel %vm1709, %v1581, 0.0
        %v1742 = vsel %vm1710, %v1582, 0.0
        %v1743 = vsel %vm1711, %v1583, 0.0
        %v1744 = vsel %vm1712, %v1584, 0.0
        %v1745 = vsel %vm1713, %v1585, 0.0
        %v1746 = vsel %vm1714, %v1586, 0.0
        %v1747 = vsel %vm1715, %v1587, 0.0
        %v1748 = vsel %vm1716, %v1588, 0.0
        %v1749 = vsel %vm1717, %v1589, 0.0
        %v1750 = vsel %vm1718, %v1590, 0.0
        %v1751 = vsel %vm1719, %v1591, 0.0
        %v1752 = vsel %vm1720, %v1592, 0.0
        %v1753 = vpack.c.bf16 %v1722, %v1721
        %v1754 = vpack.c.bf16 %v1724, %v1723
        %v1755 = vpack.c.bf16 %v1726, %v1725
        %v1756 = vpack.c.bf16 %v1728, %v1727
        %v1757 = vpack.c.bf16 %v1730, %v1729
        %v1758 = vpack.c.bf16 %v1732, %v1731
        %v1759 = vpack.c.bf16 %v1734, %v1733
        %v1760 = vpack.c.bf16 %v1736, %v1735
        %v1761 = vpack.c.bf16 %v1738, %v1737
        %v1762 = vpack.c.bf16 %v1740, %v1739
        %v1763 = vpack.c.bf16 %v1742, %v1741
        %v1764 = vpack.c.bf16 %v1744, %v1743
        %v1765 = vpack.c.bf16 %v1746, %v1745
        %v1766 = vpack.c.bf16 %v1748, %v1747
        %v1767 = vpack.c.bf16 %v1750, %v1749
        %v1768 = vpack.c.bf16 %v1752, %v1751
        %v1769 = vld [vmem:[#allocation2 + $0x107] sm:$0xff]
        %v1770 = vld [vmem:[#allocation2 + $0x10f] sm:$0xff]
        %v1771 = vsel %vm1241, 1, 0
        %v1772 = vsel %vm1242, 1, 0
        %v1773 = vsel %vm1243, 1, 0
        %v1774 = vsel %vm1244, 1, 0
        %v1775 = vsel %vm1245, 1, 0
        %v1776 = vsel %vm1246, 1, 0
        %v1777 = vsel %vm1247, 1, 0
        %v1778 = vsel %vm1248, 1, 0
        %v1779 = vsel %vm1249, 1, 0
        %v1780 = vsel %vm1250, 1, 0
        %v1781 = vsel %vm1251, 1, 0
        %v1782 = vsel %vm1252, 1, 0
        %v1783 = vsel %vm1253, 1, 0
        %v1784 = vsel %vm1254, 1, 0
        %v1785 = vsel %vm1255, 1, 0
        %v1786 = vsel %vm1256, 1, 0
        %v1787 = vsel %vm1257, 1, 0
        %v1788 = vsel %vm1258, 1, 0
        %v1789 = vsel %vm1259, 1, 0
        %v1790 = vsel %vm1260, 1, 0
        %v1791 = vsel %vm1261, 1, 0
        %v1792 = vsel %vm1262, 1, 0
        %v1793 = vsel %vm1263, 1, 0
        %v1794 = vsel %vm1264, 1, 0
        %v1795 = vsel %vm1265, 1, 0
        %v1796 = vsel %vm1266, 1, 0
        %v1797 = vsel %vm1267, 1, 0
        %v1798 = vsel %vm1268, 1, 0
        %v1799 = vsel %vm1269, 1, 0
        %v1800 = vsel %vm1270, 1, 0
        %v1801 = vsel %vm1271, 1, 0
        %v1802 = vsel %vm1272, 1, 0
        %vm1803 = vcmp.eq.s32.totalorder %v1771, 1
        %vm1804 = vcmp.eq.s32.totalorder %v1772, 1
        %vm1805 = vcmp.eq.s32.totalorder %v1773, 1
        %vm1806 = vcmp.eq.s32.totalorder %v1774, 1
        %vm1807 = vcmp.eq.s32.totalorder %v1775, 1
        %vm1808 = vcmp.eq.s32.totalorder %v1776, 1
        %vm1809 = vcmp.eq.s32.totalorder %v1777, 1
        %vm1810 = vcmp.eq.s32.totalorder %v1778, 1
        %vm1811 = vcmp.eq.s32.totalorder %v1779, 1
        %vm1812 = vcmp.eq.s32.totalorder %v1780, 1
        %vm1813 = vcmp.eq.s32.totalorder %v1781, 1
        %vm1814 = vcmp.eq.s32.totalorder %v1782, 1
        %vm1815 = vcmp.eq.s32.totalorder %v1783, 1
        %vm1816 = vcmp.eq.s32.totalorder %v1784, 1
        %vm1817 = vcmp.eq.s32.totalorder %v1785, 1
        %vm1818 = vcmp.eq.s32.totalorder %v1786, 1
        %vm1819 = vcmp.eq.s32.totalorder %v1787, 1
        %vm1820 = vcmp.eq.s32.totalorder %v1788, 1
        %vm1821 = vcmp.eq.s32.totalorder %v1789, 1
        %vm1822 = vcmp.eq.s32.totalorder %v1790, 1
        %vm1823 = vcmp.eq.s32.totalorder %v1791, 1
        %vm1824 = vcmp.eq.s32.totalorder %v1792, 1
        %vm1825 = vcmp.eq.s32.totalorder %v1793, 1
        %vm1826 = vcmp.eq.s32.totalorder %v1794, 1
        %vm1827 = vcmp.eq.s32.totalorder %v1795, 1
        %vm1828 = vcmp.eq.s32.totalorder %v1796, 1
        %vm1829 = vcmp.eq.s32.totalorder %v1797, 1
        %vm1830 = vcmp.eq.s32.totalorder %v1798, 1
        %vm1831 = vcmp.eq.s32.totalorder %v1799, 1
        %vm1832 = vcmp.eq.s32.totalorder %v1800, 1
        %vm1833 = vcmp.eq.s32.totalorder %v1801, 1
        %vm1834 = vcmp.eq.s32.totalorder %v1802, 1
        %v1835 = vsel %vm1803, %v1179, 0.0
        %v1836 = vsel %vm1804, %v1180, 0.0
        %v1837 = vsel %vm1805, %v1181, 0.0
        %v1838 = vsel %vm1806, %v1182, 0.0
        %v1839 = vsel %vm1807, %v1183, 0.0
        %v1840 = vsel %vm1808, %v1184, 0.0
        %v1841 = vsel %vm1809, %v1185, 0.0
        %v1842 = vsel %vm1810, %v1186, 0.0
        %v1843 = vsel %vm1811, %v1187, 0.0
        %v1844 = vsel %vm1812, %v1188, 0.0
        %v1845 = vsel %vm1813, %v1189, 0.0
        %v1846 = vsel %vm1814, %v1190, 0.0
        %v1847 = vsel %vm1815, %v1191, 0.0
        %v1848 = vsel %vm1816, %v1192, 0.0
        %v1849 = vsel %vm1817, %v1193, 0.0
        %v1850 = vsel %vm1818, %v1194, 0.0
        %v1851 = vsel %vm1819, %v1195, 0.0
        %v1852 = vsel %vm1820, %v1196, 0.0
        %v1853 = vsel %vm1821, %v1197, 0.0
        %v1854 = vsel %vm1822, %v1198, 0.0
        %v1855 = vsel %vm1823, %v1199, 0.0
        %v1856 = vsel %vm1824, %v1200, 0.0
        %v1857 = vsel %vm1825, %v1201, 0.0
        %v1858 = vsel %vm1826, %v1202, 0.0
        %v1859 = vsel %vm1827, %v1203, 0.0
        %v1860 = vsel %vm1828, %v1204, 0.0
        %v1861 = vsel %vm1829, %v1205, 0.0
        %v1862 = vsel %vm1830, %v1206, 0.0
        %v1863 = vsel %vm1831, %v1207, 0.0
        %v1864 = vsel %vm1832, %v1208, 0.0
        %v1865 = vsel %vm1833, %v1769, 0.0
        %v1866 = vsel %vm1834, %v1770, 0.0
        %v1867 = vpack.c.bf16 %v1836, %v1835
        %v1868 = vpack.c.bf16 %v1838, %v1837
        %v1869 = vpack.c.bf16 %v1840, %v1839
        %v1870 = vpack.c.bf16 %v1842, %v1841
        %v1871 = vpack.c.bf16 %v1844, %v1843
        %v1872 = vpack.c.bf16 %v1846, %v1845
        %v1873 = vpack.c.bf16 %v1848, %v1847
        %v1874 = vpack.c.bf16 %v1850, %v1849
        %v1875 = vpack.c.bf16 %v1852, %v1851
        %v1876 = vpack.c.bf16 %v1854, %v1853
        %v1877 = vpack.c.bf16 %v1856, %v1855
        %v1878 = vpack.c.bf16 %v1858, %v1857
        %v1879 = vpack.c.bf16 %v1860, %v1859
        %v1880 = vpack.c.bf16 %v1862, %v1861
        %v1881 = vpack.c.bf16 %v1864, %v1863
        %v1882 = vpack.c.bf16 %v1866, %v1865
        %v1883 = vpack.c.bf16 %v786, %v785
        %v1884 = vpack.c.bf16 %v788, %v787
        %v1885 = vpack.c.bf16 %v790, %v789
        %v1886 = vpack.c.bf16 %v792, %v791
        %v1887 = vpack.c.bf16 %v794, %v793
        %v1888 = vpack.c.bf16 %v796, %v795
        %v1889 = vpack.c.bf16 %v798, %v797
        %v1890 = vpack.c.bf16 %v800, %v799
        %v1891 = vpack.c.bf16 %v802, %v801
        %v1892 = vpack.c.bf16 %v804, %v803
        %v1893 = vpack.c.bf16 %v806, %v805
        %v1894 = vpack.c.bf16 %v808, %v807
        %v1895 = vpack.c.bf16 %v810, %v809
        %v1896 = vpack.c.bf16 %v812, %v811
        %v1897 = vpack.c.bf16 %v814, %v813
        %v1898 = vpack.c.bf16 %v816, %v815
        %v1899 = vld [vmem:[#allocation2 + $0x109] sm:$0xff]
        %v1900 = vld [vmem:[#allocation2 + $0x111] sm:$0xff]
        %v1901 = vsel %vm1593, 1, 0
        %v1902 = vsel %vm1594, 1, 0
        %v1903 = vsel %vm1595, 1, 0
        %v1904 = vsel %vm1596, 1, 0
        %v1905 = vsel %vm1597, 1, 0
        %v1906 = vsel %vm1598, 1, 0
        %v1907 = vsel %vm1599, 1, 0
        %v1908 = vsel %vm1600, 1, 0
        %v1909 = vsel %vm1601, 1, 0
        %v1910 = vsel %vm1602, 1, 0
        %v1911 = vsel %vm1603, 1, 0
        %v1912 = vsel %vm1604, 1, 0
        %v1913 = vsel %vm1605, 1, 0
        %v1914 = vsel %vm1606, 1, 0
        %v1915 = vsel %vm1607, 1, 0
        %v1916 = vsel %vm1608, 1, 0
        %v1917 = vsel %vm1609, 1, 0
        %v1918 = vsel %vm1610, 1, 0
        %v1919 = vsel %vm1611, 1, 0
        %v1920 = vsel %vm1612, 1, 0
        %v1921 = vsel %vm1613, 1, 0
        %v1922 = vsel %vm1614, 1, 0
        %v1923 = vsel %vm1615, 1, 0
        %v1924 = vsel %vm1616, 1, 0
        %v1925 = vsel %vm1617, 1, 0
        %v1926 = vsel %vm1618, 1, 0
        %v1927 = vsel %vm1619, 1, 0
        %v1928 = vsel %vm1620, 1, 0
        %v1929 = vsel %vm1621, 1, 0
        %v1930 = vsel %vm1622, 1, 0
        %v1931 = vsel %vm1623, 1, 0
        %v1932 = vsel %vm1624, 1, 0
        %vm1933 = vcmp.eq.s32.totalorder %v1901, 1
        %vm1934 = vcmp.eq.s32.totalorder %v1902, 1
        %vm1935 = vcmp.eq.s32.totalorder %v1903, 1
        %vm1936 = vcmp.eq.s32.totalorder %v1904, 1
        %vm1937 = vcmp.eq.s32.totalorder %v1905, 1
        %vm1938 = vcmp.eq.s32.totalorder %v1906, 1
        %vm1939 = vcmp.eq.s32.totalorder %v1907, 1
        %vm1940 = vcmp.eq.s32.totalorder %v1908, 1
        %vm1941 = vcmp.eq.s32.totalorder %v1909, 1
        %vm1942 = vcmp.eq.s32.totalorder %v1910, 1
        %vm1943 = vcmp.eq.s32.totalorder %v1911, 1
        %vm1944 = vcmp.eq.s32.totalorder %v1912, 1
        %vm1945 = vcmp.eq.s32.totalorder %v1913, 1
        %vm1946 = vcmp.eq.s32.totalorder %v1914, 1
        %vm1947 = vcmp.eq.s32.totalorder %v1915, 1
        %vm1948 = vcmp.eq.s32.totalorder %v1916, 1
        %vm1949 = vcmp.eq.s32.totalorder %v1917, 1
        %vm1950 = vcmp.eq.s32.totalorder %v1918, 1
        %vm1951 = vcmp.eq.s32.totalorder %v1919, 1
        %vm1952 = vcmp.eq.s32.totalorder %v1920, 1
        %vm1953 = vcmp.eq.s32.totalorder %v1921, 1
        %vm1954 = vcmp.eq.s32.totalorder %v1922, 1
        %vm1955 = vcmp.eq.s32.totalorder %v1923, 1
        %vm1956 = vcmp.eq.s32.totalorder %v1924, 1
        %vm1957 = vcmp.eq.s32.totalorder %v1925, 1
        %vm1958 = vcmp.eq.s32.totalorder %v1926, 1
        %vm1959 = vcmp.eq.s32.totalorder %v1927, 1
        %vm1960 = vcmp.eq.s32.totalorder %v1928, 1
        %vm1961 = vcmp.eq.s32.totalorder %v1929, 1
        %vm1962 = vcmp.eq.s32.totalorder %v1930, 1
        %vm1963 = vcmp.eq.s32.totalorder %v1931, 1
        %vm1964 = vcmp.eq.s32.totalorder %v1932, 1
        %v1965 = vsel %vm1933, %v1563, 0.0
        %v1966 = vsel %vm1934, %v1564, 0.0
        %v1967 = vsel %vm1935, %v1565, 0.0
        %v1968 = vsel %vm1936, %v1566, 0.0
        %v1969 = vsel %vm1937, %v1567, 0.0
        %v1970 = vsel %vm1938, %v1568, 0.0
        %v1971 = vsel %vm1939, %v1569, 0.0
        %v1972 = vsel %vm1940, %v1570, 0.0
        %v1973 = vsel %vm1941, %v1571, 0.0
        %v1974 = vsel %vm1942, %v1572, 0.0
        %v1975 = vsel %vm1943, %v1573, 0.0
        %v1976 = vsel %vm1944, %v1574, 0.0
        %v1977 = vsel %vm1945, %v1575, 0.0
        %v1978 = vsel %vm1946, %v1576, 0.0
        %v1979 = vsel %vm1947, %v1577, 0.0
        %v1980 = vsel %vm1948, %v1578, 0.0
        %v1981 = vsel %vm1949, %v1579, 0.0
        %v1982 = vsel %vm1950, %v1580, 0.0
        %v1983 = vsel %vm1951, %v1581, 0.0
        %v1984 = vsel %vm1952, %v1582, 0.0
        %v1985 = vsel %vm1953, %v1583, 0.0
        %v1986 = vsel %vm1954, %v1584, 0.0
        %v1987 = vsel %vm1955, %v1585, 0.0
        %v1988 = vsel %vm1956, %v1586, 0.0
        %v1989 = vsel %vm1957, %v1587, 0.0
        %v1990 = vsel %vm1958, %v1588, 0.0
        %v1991 = vsel %vm1959, %v1589, 0.0
        %v1992 = vsel %vm1960, %v1590, 0.0
        %v1993 = vsel %vm1961, %v1591, 0.0
        %v1994 = vsel %vm1962, %v1592, 0.0
        %v1995 = vsel %vm1963, %v1899, 0.0
        %v1996 = vsel %vm1964, %v1900, 0.0
        %v1997 = vpack.c.bf16 %v1966, %v1965
        %v1998 = vpack.c.bf16 %v1968, %v1967
        %v1999 = vpack.c.bf16 %v1970, %v1969
        %v2000 = vpack.c.bf16 %v1972, %v1971
        %v2001 = vpack.c.bf16 %v1974, %v1973
        %v2002 = vpack.c.bf16 %v1976, %v1975
        %v2003 = vpack.c.bf16 %v1978, %v1977
        %v2004 = vpack.c.bf16 %v1980, %v1979
        %v2005 = vpack.c.bf16 %v1982, %v1981
        %v2006 = vpack.c.bf16 %v1984, %v1983
        %v2007 = vpack.c.bf16 %v1986, %v1985
        %v2008 = vpack.c.bf16 %v1988, %v1987
        %v2009 = vpack.c.bf16 %v1990, %v1989
        %v2010 = vpack.c.bf16 %v1992, %v1991
        %v2011 = vpack.c.bf16 %v1994, %v1993
        %v2012 = vpack.c.bf16 %v1996, %v1995
        %v2013 = vld [vmem:[#allocation2 + $0x117] sm:$0xff]
        %v2014 = vld [vmem:[#allocation2 + $0x11f] sm:$0xff]
        %vm2015 = vcmp.lt.f32.partialorder %v1145, 15.0
        %vm2016 = vcmp.lt.f32.partialorder %v1146, 15.0
        %vm2017 = vcmp.lt.f32.partialorder %v1147, 15.0
        %vm2018 = vcmp.lt.f32.partialorder %v1148, 15.0
        %vm2019 = vcmp.lt.f32.partialorder %v1149, 15.0
        %vm2020 = vcmp.lt.f32.partialorder %v1150, 15.0
        %vm2021 = vcmp.lt.f32.partialorder %v1151, 15.0
        %vm2022 = vcmp.lt.f32.partialorder %v1152, 15.0
        %vm2023 = vcmp.lt.f32.partialorder %v1153, 15.0
        %vm2024 = vcmp.lt.f32.partialorder %v1154, 15.0
        %vm2025 = vcmp.lt.f32.partialorder %v1155, 15.0
        %vm2026 = vcmp.lt.f32.partialorder %v1156, 15.0
        %vm2027 = vcmp.lt.f32.partialorder %v1157, 15.0
        %vm2028 = vcmp.lt.f32.partialorder %v1158, 15.0
        %vm2029 = vcmp.lt.f32.partialorder %v1159, 15.0
        %vm2030 = vcmp.lt.f32.partialorder %v1160, 15.0
        %vm2031 = vcmp.lt.f32.partialorder %v1161, 15.0
        %vm2032 = vcmp.lt.f32.partialorder %v1162, 15.0
        %vm2033 = vcmp.lt.f32.partialorder %v1163, 15.0
        %vm2034 = vcmp.lt.f32.partialorder %v1164, 15.0
        %vm2035 = vcmp.lt.f32.partialorder %v1165, 15.0
        %vm2036 = vcmp.lt.f32.partialorder %v1166, 15.0
        %vm2037 = vcmp.lt.f32.partialorder %v1167, 15.0
        %vm2038 = vcmp.lt.f32.partialorder %v1168, 15.0
        %vm2039 = vcmp.lt.f32.partialorder %v1169, 15.0
        %vm2040 = vcmp.lt.f32.partialorder %v1170, 15.0
        %vm2041 = vcmp.lt.f32.partialorder %v1171, 15.0
        %vm2042 = vcmp.lt.f32.partialorder %v1172, 15.0
        %vm2043 = vcmp.lt.f32.partialorder %v1173, 15.0
        %vm2044 = vcmp.lt.f32.partialorder %v1174, 15.0
        %vm2045 = vcmp.lt.f32.partialorder %v1175, 15.0
        %vm2046 = vcmp.lt.f32.partialorder %v1176, 15.0
        %vm2047 = vmand %vm2015, %vm1241
        %vm2048 = vmand %vm2016, %vm1242
        %vm2049 = vmand %vm2017, %vm1243
        %vm2050 = vmand %vm2018, %vm1244
        %vm2051 = vmand %vm2019, %vm1245
        %vm2052 = vmand %vm2020, %vm1246
        %vm2053 = vmand %vm2021, %vm1247
        %vm2054 = vmand %vm2022, %vm1248
        %vm2055 = vmand %vm2023, %vm1249
        %vm2056 = vmand %vm2024, %vm1250
        %vm2057 = vmand %vm2025, %vm1251
        %vm2058 = vmand %vm2026, %vm1252
        %vm2059 = vmand %vm2027, %vm1253
        %vm2060 = vmand %vm2028, %vm1254
        %vm2061 = vmand %vm2029, %vm1255
        %vm2062 = vmand %vm2030, %vm1256
        %vm2063 = vmand %vm2031, %vm1257
        %vm2064 = vmand %vm2032, %vm1258
        %vm2065 = vmand %vm2033, %vm1259
        %vm2066 = vmand %vm2034, %vm1260
        %vm2067 = vmand %vm2035, %vm1261
        %vm2068 = vmand %vm2036, %vm1262
        %vm2069 = vmand %vm2037, %vm1263
        %vm2070 = vmand %vm2038, %vm1264
        %vm2071 = vmand %vm2039, %vm1265
        %vm2072 = vmand %vm2040, %vm1266
        %vm2073 = vmand %vm2041, %vm1267
        %vm2074 = vmand %vm2042, %vm1268
        %vm2075 = vmand %vm2043, %vm1269
        %vm2076 = vmand %vm2044, %vm1270
        %vm2077 = vmand %vm2045, %vm1271
        %vm2078 = vmand %vm2046, %vm1272
        %v2079 = vsel %vm2047, 1, 0
        %v2080 = vsel %vm2048, 1, 0
        %v2081 = vsel %vm2049, 1, 0
        %v2082 = vsel %vm2050, 1, 0
        %v2083 = vsel %vm2051, 1, 0
        %v2084 = vsel %vm2052, 1, 0
        %v2085 = vsel %vm2053, 1, 0
        %v2086 = vsel %vm2054, 1, 0
        %v2087 = vsel %vm2055, 1, 0
        %v2088 = vsel %vm2056, 1, 0
        %v2089 = vsel %vm2057, 1, 0
        %v2090 = vsel %vm2058, 1, 0
        %v2091 = vsel %vm2059, 1, 0
        %v2092 = vsel %vm2060, 1, 0
        %v2093 = vsel %vm2061, 1, 0
        %v2094 = vsel %vm2062, 1, 0
        %v2095 = vsel %vm2063, 1, 0
        %v2096 = vsel %vm2064, 1, 0
        %v2097 = vsel %vm2065, 1, 0
        %v2098 = vsel %vm2066, 1, 0
        %v2099 = vsel %vm2067, 1, 0
        %v2100 = vsel %vm2068, 1, 0
        %v2101 = vsel %vm2069, 1, 0
        %v2102 = vsel %vm2070, 1, 0
        %v2103 = vsel %vm2071, 1, 0
        %v2104 = vsel %vm2072, 1, 0
        %v2105 = vsel %vm2073, 1, 0
        %v2106 = vsel %vm2074, 1, 0
        %v2107 = vsel %vm2075, 1, 0
        %v2108 = vsel %vm2076, 1, 0
        %v2109 = vsel %vm2077, 1, 0
        %v2110 = vsel %vm2078, 1, 0
        %vm2111 = vcmp.eq.s32.totalorder %v2079, 1
        %vm2112 = vcmp.eq.s32.totalorder %v2080, 1
        %vm2113 = vcmp.eq.s32.totalorder %v2081, 1
        %vm2114 = vcmp.eq.s32.totalorder %v2082, 1
        %vm2115 = vcmp.eq.s32.totalorder %v2083, 1
        %vm2116 = vcmp.eq.s32.totalorder %v2084, 1
        %vm2117 = vcmp.eq.s32.totalorder %v2085, 1
        %vm2118 = vcmp.eq.s32.totalorder %v2086, 1
        %vm2119 = vcmp.eq.s32.totalorder %v2087, 1
        %vm2120 = vcmp.eq.s32.totalorder %v2088, 1
        %vm2121 = vcmp.eq.s32.totalorder %v2089, 1
        %vm2122 = vcmp.eq.s32.totalorder %v2090, 1
        %vm2123 = vcmp.eq.s32.totalorder %v2091, 1
        %vm2124 = vcmp.eq.s32.totalorder %v2092, 1
        %vm2125 = vcmp.eq.s32.totalorder %v2093, 1
        %vm2126 = vcmp.eq.s32.totalorder %v2094, 1
        %vm2127 = vcmp.eq.s32.totalorder %v2095, 1
        %vm2128 = vcmp.eq.s32.totalorder %v2096, 1
        %vm2129 = vcmp.eq.s32.totalorder %v2097, 1
        %vm2130 = vcmp.eq.s32.totalorder %v2098, 1
        %vm2131 = vcmp.eq.s32.totalorder %v2099, 1
        %vm2132 = vcmp.eq.s32.totalorder %v2100, 1
        %vm2133 = vcmp.eq.s32.totalorder %v2101, 1
        %vm2134 = vcmp.eq.s32.totalorder %v2102, 1
        %vm2135 = vcmp.eq.s32.totalorder %v2103, 1
        %vm2136 = vcmp.eq.s32.totalorder %v2104, 1
        %vm2137 = vcmp.eq.s32.totalorder %v2105, 1
        %vm2138 = vcmp.eq.s32.totalorder %v2106, 1
        %vm2139 = vcmp.eq.s32.totalorder %v2107, 1
        %vm2140 = vcmp.eq.s32.totalorder %v2108, 1
        %vm2141 = vcmp.eq.s32.totalorder %v2109, 1
        %vm2142 = vcmp.eq.s32.totalorder %v2110, 1
        %v2143 = vsel %vm2111, %v1181, 0.0
        %v2144 = vsel %vm2112, %v1182, 0.0
        %v2145 = vsel %vm2113, %v1183, 0.0
        %v2146 = vsel %vm2114, %v1184, 0.0
        %v2147 = vsel %vm2115, %v1185, 0.0
        %v2148 = vsel %vm2116, %v1186, 0.0
        %v2149 = vsel %vm2117, %v1187, 0.0
        %v2150 = vsel %vm2118, %v1188, 0.0
        %v2151 = vsel %vm2119, %v1189, 0.0
        %v2152 = vsel %vm2120, %v1190, 0.0
        %v2153 = vsel %vm2121, %v1191, 0.0
        %v2154 = vsel %vm2122, %v1192, 0.0
        %v2155 = vsel %vm2123, %v1193, 0.0
        %v2156 = vsel %vm2124, %v1194, 0.0
        %v2157 = vsel %vm2125, %v1195, 0.0
        %v2158 = vsel %vm2126, %v1196, 0.0
        %v2159 = vsel %vm2127, %v1197, 0.0
        %v2160 = vsel %vm2128, %v1198, 0.0
        %v2161 = vsel %vm2129, %v1199, 0.0
        %v2162 = vsel %vm2130, %v1200, 0.0
        %v2163 = vsel %vm2131, %v1201, 0.0
        %v2164 = vsel %vm2132, %v1202, 0.0
        %v2165 = vsel %vm2133, %v1203, 0.0
        %v2166 = vsel %vm2134, %v1204, 0.0
        %v2167 = vsel %vm2135, %v1205, 0.0
        %v2168 = vsel %vm2136, %v1206, 0.0
        %v2169 = vsel %vm2137, %v1207, 0.0
        %v2170 = vsel %vm2138, %v1208, 0.0
        %v2171 = vsel %vm2139, %v1769, 0.0
        %v2172 = vsel %vm2140, %v1770, 0.0
        %v2173 = vsel %vm2141, %v2013, 0.0
        %v2174 = vsel %vm2142, %v2014, 0.0
        %v2175 = vpack.c.bf16 %v2144, %v2143
        %v2176 = vpack.c.bf16 %v2146, %v2145
        %v2177 = vpack.c.bf16 %v2148, %v2147
        %v2178 = vpack.c.bf16 %v2150, %v2149
        %v2179 = vpack.c.bf16 %v2152, %v2151
        %v2180 = vpack.c.bf16 %v2154, %v2153
        %v2181 = vpack.c.bf16 %v2156, %v2155
        %v2182 = vpack.c.bf16 %v2158, %v2157
        %v2183 = vpack.c.bf16 %v2160, %v2159
        %v2184 = vpack.c.bf16 %v2162, %v2161
        %v2185 = vpack.c.bf16 %v2164, %v2163
        %v2186 = vpack.c.bf16 %v2166, %v2165
        %v2187 = vpack.c.bf16 %v2168, %v2167
        %v2188 = vpack.c.bf16 %v2170, %v2169
        %v2189 = vpack.c.bf16 %v2172, %v2171
        %v2190 = vpack.c.bf16 %v2174, %v2173
        %v2191 = vld [vmem:[#allocation2 + $0x108] sm:$0xff]
        %v2192 = vld [vmem:[#allocation2 + $0x110] sm:$0xff]
        %v2193 = vld [vmem:[#allocation2 + $0x118] sm:$0xff]
        %v2194 = vld [vmem:[#allocation2 + $0x120] sm:$0xff]
        %v2195 = vsel %vm2015, 1, 0
        %v2196 = vsel %vm2016, 1, 0
        %v2197 = vsel %vm2017, 1, 0
        %v2198 = vsel %vm2018, 1, 0
        %v2199 = vsel %vm2019, 1, 0
        %v2200 = vsel %vm2020, 1, 0
        %v2201 = vsel %vm2021, 1, 0
        %v2202 = vsel %vm2022, 1, 0
        %v2203 = vsel %vm2023, 1, 0
        %v2204 = vsel %vm2024, 1, 0
        %v2205 = vsel %vm2025, 1, 0
        %v2206 = vsel %vm2026, 1, 0
        %v2207 = vsel %vm2027, 1, 0
        %v2208 = vsel %vm2028, 1, 0
        %v2209 = vsel %vm2029, 1, 0
        %v2210 = vsel %vm2030, 1, 0
        %v2211 = vsel %vm2031, 1, 0
        %v2212 = vsel %vm2032, 1, 0
        %v2213 = vsel %vm2033, 1, 0
        %v2214 = vsel %vm2034, 1, 0
        %v2215 = vsel %vm2035, 1, 0
        %v2216 = vsel %vm2036, 1, 0
        %v2217 = vsel %vm2037, 1, 0
        %v2218 = vsel %vm2038, 1, 0
        %v2219 = vsel %vm2039, 1, 0
        %v2220 = vsel %vm2040, 1, 0
        %v2221 = vsel %vm2041, 1, 0
        %v2222 = vsel %vm2042, 1, 0
        %v2223 = vsel %vm2043, 1, 0
        %v2224 = vsel %vm2044, 1, 0
        %v2225 = vsel %vm2045, 1, 0
        %v2226 = vsel %vm2046, 1, 0
        %vm2227 = vcmp.eq.s32.totalorder %v2195, 1
        %vm2228 = vcmp.eq.s32.totalorder %v2196, 1
        %vm2229 = vcmp.eq.s32.totalorder %v2197, 1
        %vm2230 = vcmp.eq.s32.totalorder %v2198, 1
        %vm2231 = vcmp.eq.s32.totalorder %v2199, 1
        %vm2232 = vcmp.eq.s32.totalorder %v2200, 1
        %vm2233 = vcmp.eq.s32.totalorder %v2201, 1
        %vm2234 = vcmp.eq.s32.totalorder %v2202, 1
        %vm2235 = vcmp.eq.s32.totalorder %v2203, 1
        %vm2236 = vcmp.eq.s32.totalorder %v2204, 1
        %vm2237 = vcmp.eq.s32.totalorder %v2205, 1
        %vm2238 = vcmp.eq.s32.totalorder %v2206, 1
        %vm2239 = vcmp.eq.s32.totalorder %v2207, 1
        %vm2240 = vcmp.eq.s32.totalorder %v2208, 1
        %vm2241 = vcmp.eq.s32.totalorder %v2209, 1
        %vm2242 = vcmp.eq.s32.totalorder %v2210, 1
        %vm2243 = vcmp.eq.s32.totalorder %v2211, 1
        %vm2244 = vcmp.eq.s32.totalorder %v2212, 1
        %vm2245 = vcmp.eq.s32.totalorder %v2213, 1
        %vm2246 = vcmp.eq.s32.totalorder %v2214, 1
        %vm2247 = vcmp.eq.s32.totalorder %v2215, 1
        %vm2248 = vcmp.eq.s32.totalorder %v2216, 1
        %vm2249 = vcmp.eq.s32.totalorder %v2217, 1
        %vm2250 = vcmp.eq.s32.totalorder %v2218, 1
        %vm2251 = vcmp.eq.s32.totalorder %v2219, 1
        %vm2252 = vcmp.eq.s32.totalorder %v2220, 1
        %vm2253 = vcmp.eq.s32.totalorder %v2221, 1
        %vm2254 = vcmp.eq.s32.totalorder %v2222, 1
        %vm2255 = vcmp.eq.s32.totalorder %v2223, 1
        %vm2256 = vcmp.eq.s32.totalorder %v2224, 1
        %vm2257 = vcmp.eq.s32.totalorder %v2225, 1
        %vm2258 = vcmp.eq.s32.totalorder %v2226, 1
        %v2259 = vsel %vm2227, %v1421, 0.0
        %v2260 = vsel %vm2228, %v1422, 0.0
        %v2261 = vsel %vm2229, %v1423, 0.0
        %v2262 = vsel %vm2230, %v1424, 0.0
        %v2263 = vsel %vm2231, %v1425, 0.0
        %v2264 = vsel %vm2232, %v1426, 0.0
        %v2265 = vsel %vm2233, %v1427, 0.0
        %v2266 = vsel %vm2234, %v1428, 0.0
        %v2267 = vsel %vm2235, %v1429, 0.0
        %v2268 = vsel %vm2236, %v1430, 0.0
        %v2269 = vsel %vm2237, %v1431, 0.0
        %v2270 = vsel %vm2238, %v1432, 0.0
        %v2271 = vsel %vm2239, %v1433, 0.0
        %v2272 = vsel %vm2240, %v1434, 0.0
        %v2273 = vsel %vm2241, %v1435, 0.0
        %v2274 = vsel %vm2242, %v1436, 0.0
        %v2275 = vsel %vm2243, %v1437, 0.0
        %v2276 = vsel %vm2244, %v1438, 0.0
        %v2277 = vsel %vm2245, %v1439, 0.0
        %v2278 = vsel %vm2246, %v1440, 0.0
        %v2279 = vsel %vm2247, %v1441, 0.0
        %v2280 = vsel %vm2248, %v1442, 0.0
        %v2281 = vsel %vm2249, %v1443, 0.0
        %v2282 = vsel %vm2250, %v1444, 0.0
        %v2283 = vsel %vm2251, %v1445, 0.0
        %v2284 = vsel %vm2252, %v1446, 0.0
        %v2285 = vsel %vm2253, %v1447, 0.0
        %v2286 = vsel %vm2254, %v1448, 0.0
        %v2287 = vsel %vm2255, %v2191, 0.0
        %v2288 = vsel %vm2256, %v2192, 0.0
        %v2289 = vsel %vm2257, %v2193, 0.0
        %v2290 = vsel %vm2258, %v2194, 0.0
        %v2291 = vpack.c.bf16 %v2260, %v2259
        %v2292 = vpack.c.bf16 %v2262, %v2261
        %v2293 = vpack.c.bf16 %v2264, %v2263
        %v2294 = vpack.c.bf16 %v2266, %v2265
        %v2295 = vpack.c.bf16 %v2268, %v2267
        %v2296 = vpack.c.bf16 %v2270, %v2269
        %v2297 = vpack.c.bf16 %v2272, %v2271
        %v2298 = vpack.c.bf16 %v2274, %v2273
        %v2299 = vpack.c.bf16 %v2276, %v2275
        %v2300 = vpack.c.bf16 %v2278, %v2277
        %v2301 = vpack.c.bf16 %v2280, %v2279
        %v2302 = vpack.c.bf16 %v2282, %v2281
        %v2303 = vpack.c.bf16 %v2284, %v2283
        %v2304 = vpack.c.bf16 %v2286, %v2285
        %v2305 = vpack.c.bf16 %v2288, %v2287
        %v2306 = vpack.c.bf16 %v2290, %v2289
        %v2307 = vld [vmem:[#allocation2 + $0x119] sm:$0xff]
        %v2308 = vld [vmem:[#allocation2 + $0x121] sm:$0xff]
        %vm2309 = vmand %vm2015, %vm1593
        %vm2310 = vmand %vm2016, %vm1594
        %vm2311 = vmand %vm2017, %vm1595
        %vm2312 = vmand %vm2018, %vm1596
        %vm2313 = vmand %vm2019, %vm1597
        %vm2314 = vmand %vm2020, %vm1598
        %vm2315 = vmand %vm2021, %vm1599
        %vm2316 = vmand %vm2022, %vm1600
        %vm2317 = vmand %vm2023, %vm1601
        %vm2318 = vmand %vm2024, %vm1602
        %vm2319 = vmand %vm2025, %vm1603
        %vm2320 = vmand %vm2026, %vm1604
        %vm2321 = vmand %vm2027, %vm1605
        %vm2322 = vmand %vm2028, %vm1606
        %vm2323 = vmand %vm2029, %vm1607
        %vm2324 = vmand %vm2030, %vm1608
        %vm2325 = vmand %vm2031, %vm1609
        %vm2326 = vmand %vm2032, %vm1610
        %vm2327 = vmand %vm2033, %vm1611
        %vm2328 = vmand %vm2034, %vm1612
        %vm2329 = vmand %vm2035, %vm1613
        %vm2330 = vmand %vm2036, %vm1614
        %vm2331 = vmand %vm2037, %vm1615
        %vm2332 = vmand %vm2038, %vm1616
        %vm2333 = vmand %vm2039, %vm1617
        %vm2334 = vmand %vm2040, %vm1618
        %vm2335 = vmand %vm2041, %vm1619
        %vm2336 = vmand %vm2042, %vm1620
        %vm2337 = vmand %vm2043, %vm1621
        %vm2338 = vmand %vm2044, %vm1622
        %vm2339 = vmand %vm2045, %vm1623
        %vm2340 = vmand %vm2046, %vm1624
        %v2341 = vsel %vm2309, 1, 0
        %v2342 = vsel %vm2310, 1, 0
        %v2343 = vsel %vm2311, 1, 0
        %v2344 = vsel %vm2312, 1, 0
        %v2345 = vsel %vm2313, 1, 0
        %v2346 = vsel %vm2314, 1, 0
        %v2347 = vsel %vm2315, 1, 0
        %v2348 = vsel %vm2316, 1, 0
        %v2349 = vsel %vm2317, 1, 0
        %v2350 = vsel %vm2318, 1, 0
        %v2351 = vsel %vm2319, 1, 0
        %v2352 = vsel %vm2320, 1, 0
        %v2353 = vsel %vm2321, 1, 0
        %v2354 = vsel %vm2322, 1, 0
        %v2355 = vsel %vm2323, 1, 0
        %v2356 = vsel %vm2324, 1, 0
        %v2357 = vsel %vm2325, 1, 0
        %v2358 = vsel %vm2326, 1, 0
        %v2359 = vsel %vm2327, 1, 0
        %v2360 = vsel %vm2328, 1, 0
        %v2361 = vsel %vm2329, 1, 0
        %v2362 = vsel %vm2330, 1, 0
        %v2363 = vsel %vm2331, 1, 0
        %v2364 = vsel %vm2332, 1, 0
        %v2365 = vsel %vm2333, 1, 0
        %v2366 = vsel %vm2334, 1, 0
        %v2367 = vsel %vm2335, 1, 0
        %v2368 = vsel %vm2336, 1, 0
        %v2369 = vsel %vm2337, 1, 0
        %v2370 = vsel %vm2338, 1, 0
        %v2371 = vsel %vm2339, 1, 0
        %v2372 = vsel %vm2340, 1, 0
        %vm2373 = vcmp.eq.s32.totalorder %v2341, 1
        %vm2374 = vcmp.eq.s32.totalorder %v2342, 1
        %vm2375 = vcmp.eq.s32.totalorder %v2343, 1
        %vm2376 = vcmp.eq.s32.totalorder %v2344, 1
        %vm2377 = vcmp.eq.s32.totalorder %v2345, 1
        %vm2378 = vcmp.eq.s32.totalorder %v2346, 1
        %vm2379 = vcmp.eq.s32.totalorder %v2347, 1
        %vm2380 = vcmp.eq.s32.totalorder %v2348, 1
        %vm2381 = vcmp.eq.s32.totalorder %v2349, 1
        %vm2382 = vcmp.eq.s32.totalorder %v2350, 1
        %vm2383 = vcmp.eq.s32.totalorder %v2351, 1
        %vm2384 = vcmp.eq.s32.totalorder %v2352, 1
        %vm2385 = vcmp.eq.s32.totalorder %v2353, 1
        %vm2386 = vcmp.eq.s32.totalorder %v2354, 1
        %vm2387 = vcmp.eq.s32.totalorder %v2355, 1
        %vm2388 = vcmp.eq.s32.totalorder %v2356, 1
        %vm2389 = vcmp.eq.s32.totalorder %v2357, 1
        %vm2390 = vcmp.eq.s32.totalorder %v2358, 1
        %vm2391 = vcmp.eq.s32.totalorder %v2359, 1
        %vm2392 = vcmp.eq.s32.totalorder %v2360, 1
        %vm2393 = vcmp.eq.s32.totalorder %v2361, 1
        %vm2394 = vcmp.eq.s32.totalorder %v2362, 1
        %vm2395 = vcmp.eq.s32.totalorder %v2363, 1
        %vm2396 = vcmp.eq.s32.totalorder %v2364, 1
        %vm2397 = vcmp.eq.s32.totalorder %v2365, 1
        %vm2398 = vcmp.eq.s32.totalorder %v2366, 1
        %vm2399 = vcmp.eq.s32.totalorder %v2367, 1
        %vm2400 = vcmp.eq.s32.totalorder %v2368, 1
        %vm2401 = vcmp.eq.s32.totalorder %v2369, 1
        %vm2402 = vcmp.eq.s32.totalorder %v2370, 1
        %vm2403 = vcmp.eq.s32.totalorder %v2371, 1
        %vm2404 = vcmp.eq.s32.totalorder %v2372, 1
        %v2405 = vsel %vm2373, %v1565, 0.0
        %v2406 = vsel %vm2374, %v1566, 0.0
        %v2407 = vsel %vm2375, %v1567, 0.0
        %v2408 = vsel %vm2376, %v1568, 0.0
        %v2409 = vsel %vm2377, %v1569, 0.0
        %v2410 = vsel %vm2378, %v1570, 0.0
        %v2411 = vsel %vm2379, %v1571, 0.0
        %v2412 = vsel %vm2380, %v1572, 0.0
        %v2413 = vsel %vm2381, %v1573, 0.0
        %v2414 = vsel %vm2382, %v1574, 0.0
        %v2415 = vsel %vm2383, %v1575, 0.0
        %v2416 = vsel %vm2384, %v1576, 0.0
        %v2417 = vsel %vm2385, %v1577, 0.0
        %v2418 = vsel %vm2386, %v1578, 0.0
        %v2419 = vsel %vm2387, %v1579, 0.0
        %v2420 = vsel %vm2388, %v1580, 0.0
        %v2421 = vsel %vm2389, %v1581, 0.0
        %v2422 = vsel %vm2390, %v1582, 0.0
        %v2423 = vsel %vm2391, %v1583, 0.0
        %v2424 = vsel %vm2392, %v1584, 0.0
        %v2425 = vsel %vm2393, %v1585, 0.0
        %v2426 = vsel %vm2394, %v1586, 0.0
        %v2427 = vsel %vm2395, %v1587, 0.0
        %v2428 = vsel %vm2396, %v1588, 0.0
        %v2429 = vsel %vm2397, %v1589, 0.0
        %v2430 = vsel %vm2398, %v1590, 0.0
        %v2431 = vsel %vm2399, %v1591, 0.0
        %v2432 = vsel %vm2400, %v1592, 0.0
        %v2433 = vsel %vm2401, %v1899, 0.0
        %v2434 = vsel %vm2402, %v1900, 0.0
        %v2435 = vsel %vm2403, %v2307, 0.0
        %v2436 = vsel %vm2404, %v2308, 0.0
        %v2437 = vpack.c.bf16 %v2406, %v2405
        %v2438 = vpack.c.bf16 %v2408, %v2407
        %v2439 = vpack.c.bf16 %v2410, %v2409
        %v2440 = vpack.c.bf16 %v2412, %v2411
        %v2441 = vpack.c.bf16 %v2414, %v2413
        %v2442 = vpack.c.bf16 %v2416, %v2415
        %v2443 = vpack.c.bf16 %v2418, %v2417
        %v2444 = vpack.c.bf16 %v2420, %v2419
        %v2445 = vpack.c.bf16 %v2422, %v2421
        %v2446 = vpack.c.bf16 %v2424, %v2423
        %v2447 = vpack.c.bf16 %v2426, %v2425
        %v2448 = vpack.c.bf16 %v2428, %v2427
        %v2449 = vpack.c.bf16 %v2430, %v2429
        %v2450 = vpack.c.bf16 %v2432, %v2431
        %v2451 = vpack.c.bf16 %v2434, %v2433
        %v2452 = vpack.c.bf16 %v2436, %v2435
        %v2453 = vld [vmem:[#allocation8] sm:$0xf]
        %v2454 = vld [vmem:[#allocation8 + $0x4] sm:$0xf]
        %v2455 = vld [vmem:[#allocation8 + $0x8] sm:$0xf]
        %v2456 = vld [vmem:[#allocation8 + $0xc] sm:$0xf]
        %v2457 = vld [vmem:[#allocation8 + $0x10] sm:$0xf]
        %v2458 = vld [vmem:[#allocation8 + $0x14] sm:$0xf]
        %v2459 = vld [vmem:[#allocation8 + $0x18] sm:$0xf]
        %v2460 = vld [vmem:[#allocation8 + $0x1c] sm:$0xf]
        %v2461 = vld [vmem:[#allocation8 + $0x20] sm:$0xf]
        %v2462 = vld [vmem:[#allocation8 + $0x24] sm:$0xf]
        %v2463 = vld [vmem:[#allocation8 + $0x28] sm:$0xf]
        %v2464 = vld [vmem:[#allocation8 + $0x2c] sm:$0xf]
        %v2465 = vld [vmem:[#allocation8 + $0x30] sm:$0xf]
        %v2466 = vld [vmem:[#allocation8 + $0x34] sm:$0xf]
        %v2467 = vld [vmem:[#allocation8 + $0x38] sm:$0xf]
        %v2468 = vld [vmem:[#allocation8 + $0x3c] sm:$0xf]
        %v2469 = vld [vmem:[#allocation8 + $0x40] sm:$0xf]
        %v2470 = vld [vmem:[#allocation8 + $0x44] sm:$0xf]
        %v2471 = vld [vmem:[#allocation8 + $0x48] sm:$0xf]
        %v2472 = vld [vmem:[#allocation8 + $0x4c] sm:$0xf]
        %v2473 = vld [vmem:[#allocation8 + $0x50] sm:$0xf]
        %v2474 = vld [vmem:[#allocation8 + $0x54] sm:$0xf]
        %v2475 = vld [vmem:[#allocation8 + $0x58] sm:$0xf]
        %v2476 = vld [vmem:[#allocation8 + $0x5c] sm:$0xf]
        %v2477 = vld [vmem:[#allocation8 + $0x60] sm:$0xf]
        %v2478 = vld [vmem:[#allocation8 + $0x64] sm:$0xf]
        %v2479 = vld [vmem:[#allocation8 + $0x68] sm:$0xf]
        %v2480 = vld [vmem:[#allocation8 + $0x6c] sm:$0xf]
        %v2481 = vld [vmem:[#allocation8 + $0x70] sm:$0xf]
        %v2482 = vld [vmem:[#allocation8 + $0x74] sm:$0xf]
        %v2483 = vld [vmem:[#allocation8 + $0x78] sm:$0xf]
        %v2484 = vld [vmem:[#allocation8 + $0x7c] sm:$0xf]
        %v2485 = vld [vmem:[#allocation8 + $0x80] sm:$0xf]
        %v2486 = vld [vmem:[#allocation8 + $0x84] sm:$0xf]
        %v2487 = vld [vmem:[#allocation8 + $0x88] sm:$0xf]
        %v2488 = vld [vmem:[#allocation8 + $0x8c] sm:$0xf]
        %v2489 = vld [vmem:[#allocation8 + $0x90] sm:$0xf]
        %v2490 = vld [vmem:[#allocation8 + $0x94] sm:$0xf]
        %v2491 = vld [vmem:[#allocation8 + $0x98] sm:$0xf]
        %v2492 = vld [vmem:[#allocation8 + $0x9c] sm:$0xf]
        %v2493 = vld [vmem:[#allocation8 + $0xa0] sm:$0xf]
        %v2494 = vld [vmem:[#allocation8 + $0xa4] sm:$0xf]
        %v2495 = vld [vmem:[#allocation8 + $0xa8] sm:$0xf]
        %v2496 = vld [vmem:[#allocation8 + $0xac] sm:$0xf]
        %v2497 = vld [vmem:[#allocation8 + $0xb0] sm:$0xf]
        %v2498 = vld [vmem:[#allocation8 + $0xb4] sm:$0xf]
        %v2499 = vld [vmem:[#allocation8 + $0xb8] sm:$0xf]
        %v2500 = vld [vmem:[#allocation8 + $0xbc] sm:$0xf]
        %v2501 = vld [vmem:[#allocation8 + $0xc0] sm:$0xf]
        %v2502 = vld [vmem:[#allocation8 + $0xc4] sm:$0xf]
        %v2503 = vld [vmem:[#allocation8 + $0xc8] sm:$0xf]
        %v2504 = vld [vmem:[#allocation8 + $0xcc] sm:$0xf]
        %v2505 = vld [vmem:[#allocation8 + $0xd0] sm:$0xf]
        %v2506 = vld [vmem:[#allocation8 + $0xd4] sm:$0xf]
        %v2507 = vld [vmem:[#allocation8 + $0xd8] sm:$0xf]
        %v2508 = vld [vmem:[#allocation8 + $0xdc] sm:$0xf]
        %v2509 = vld [vmem:[#allocation8 + $0xe0] sm:$0xf]
        %v2510 = vld [vmem:[#allocation8 + $0xe4] sm:$0xf]
        %v2511 = vld [vmem:[#allocation8 + $0xe8] sm:$0xf]
        %v2512 = vld [vmem:[#allocation8 + $0xec] sm:$0xf]
        %v2513 = vld [vmem:[#allocation8 + $0xf0] sm:$0xf]
        %v2514 = vld [vmem:[#allocation8 + $0xf4] sm:$0xf]
        %v2515 = vld [vmem:[#allocation8 + $0xf8] sm:$0xf]
        %v2516 = vld [vmem:[#allocation8 + $0xfc] sm:$0xf]
        %v2517 = vld [vmem:[#allocation8 + $0x100] sm:$0xf]
        %v2518 = vld [vmem:[#allocation8 + $0x104] sm:$0xf]
        %v2519 = vld [vmem:[#allocation8 + $0x108] sm:$0xf]
        %v2520 = vld [vmem:[#allocation8 + $0x10c] sm:$0xf]
        %v2521 = vld [vmem:[#allocation8 + $0x110] sm:$0xf]
        %v2522 = vld [vmem:[#allocation8 + $0x114] sm:$0xf]
        %v2523 = vld [vmem:[#allocation8 + $0x118] sm:$0xf]
        %v2524 = vld [vmem:[#allocation8 + $0x11c] sm:$0xf]
        %v2525 = vld [vmem:[#allocation8 + $0x120] sm:$0xf]
        %v2526 = vld [vmem:[#allocation8 + $0x124] sm:$0xf]
        %v2527 = vld [vmem:[#allocation8 + $0x128] sm:$0xf]
        %v2528 = vld [vmem:[#allocation8 + $0x12c] sm:$0xf]
        %v2529 = vld [vmem:[#allocation8 + $0x130] sm:$0xf]
        %v2530 = vld [vmem:[#allocation8 + $0x134] sm:$0xf]
        %v2531 = vld [vmem:[#allocation8 + $0x138] sm:$0xf]
        %v2532 = vld [vmem:[#allocation8 + $0x13c] sm:$0xf]
        %v2533 = vld [vmem:[#allocation8 + $0x140] sm:$0xf]
        %v2534 = vld [vmem:[#allocation8 + $0x144] sm:$0xf]
        %v2535 = vld [vmem:[#allocation8 + $0x148] sm:$0xf]
        %v2536 = vld [vmem:[#allocation8 + $0x14c] sm:$0xf]
        %v2537 = vld [vmem:[#allocation8 + $0x150] sm:$0xf]
        %v2538 = vld [vmem:[#allocation8 + $0x154] sm:$0xf]
        %v2539 = vld [vmem:[#allocation8 + $0x158] sm:$0xf]
        %v2540 = vld [vmem:[#allocation8 + $0x15c] sm:$0xf]
        %v2541 = vld [vmem:[#allocation8 + $0x160] sm:$0xf]
        %v2542 = vld [vmem:[#allocation8 + $0x164] sm:$0xf]
        %v2543 = vld [vmem:[#allocation8 + $0x168] sm:$0xf]
        %v2544 = vld [vmem:[#allocation8 + $0x16c] sm:$0xf]
        %v2545 = vld [vmem:[#allocation8 + $0x170] sm:$0xf]
        %v2546 = vld [vmem:[#allocation8 + $0x174] sm:$0xf]
        %v2547 = vld [vmem:[#allocation8 + $0x178] sm:$0xf]
        %v2548 = vld [vmem:[#allocation8 + $0x17c] sm:$0xf]
        %v2549 = vld [vmem:[#allocation8 + $0x180] sm:$0xf]
        %v2550 = vld [vmem:[#allocation8 + $0x184] sm:$0xf]
        %v2551 = vld [vmem:[#allocation8 + $0x188] sm:$0xf]
        %v2552 = vld [vmem:[#allocation8 + $0x18c] sm:$0xf]
        %v2553 = vld [vmem:[#allocation8 + $0x190] sm:$0xf]
        %v2554 = vld [vmem:[#allocation8 + $0x194] sm:$0xf]
        %v2555 = vld [vmem:[#allocation8 + $0x198] sm:$0xf]
        %v2556 = vld [vmem:[#allocation8 + $0x19c] sm:$0xf]
        %v2557 = vld [vmem:[#allocation8 + $0x1a0] sm:$0xf]
        %v2558 = vld [vmem:[#allocation8 + $0x1a4] sm:$0xf]
        %v2559 = vld [vmem:[#allocation8 + $0x1a8] sm:$0xf]
        %v2560 = vld [vmem:[#allocation8 + $0x1ac] sm:$0xf]
        %v2561 = vld [vmem:[#allocation8 + $0x1b0] sm:$0xf]
        %v2562 = vld [vmem:[#allocation8 + $0x1b4] sm:$0xf]
        %v2563 = vld [vmem:[#allocation8 + $0x1b8] sm:$0xf]
        %v2564 = vld [vmem:[#allocation8 + $0x1bc] sm:$0xf]
        %v2565 = vld [vmem:[#allocation8 + $0x1c0] sm:$0xf]
        %v2566 = vld [vmem:[#allocation8 + $0x1c4] sm:$0xf]
        %v2567 = vld [vmem:[#allocation8 + $0x1c8] sm:$0xf]
        %v2568 = vld [vmem:[#allocation8 + $0x1cc] sm:$0xf]
        %v2569 = vld [vmem:[#allocation8 + $0x1d0] sm:$0xf]
        %v2570 = vld [vmem:[#allocation8 + $0x1d4] sm:$0xf]
        %v2571 = vld [vmem:[#allocation8 + $0x1d8] sm:$0xf]
        %v2572 = vld [vmem:[#allocation8 + $0x1dc] sm:$0xf]
        %v2573 = vld [vmem:[#allocation8 + $0x1e0] sm:$0xf]
        %v2574 = vld [vmem:[#allocation8 + $0x1e4] sm:$0xf]
        %v2575 = vld [vmem:[#allocation8 + $0x1e8] sm:$0xf]
        %v2576 = vld [vmem:[#allocation8 + $0x1ec] sm:$0xf]
        %v2577 = vld [vmem:[#allocation8 + $0x1f0] sm:$0xf]
        %v2578 = vld [vmem:[#allocation8 + $0x1f4] sm:$0xf]
        %v2579 = vld [vmem:[#allocation8 + $0x1f8] sm:$0xf]
        %v2580 = vld [vmem:[#allocation8 + $0x1fc] sm:$0xf]
        %v2581 = vld [vmem:[#allocation8 + $0x200] sm:$0xf]
        %v2582 = vld [vmem:[#allocation8 + $0x204] sm:$0xf]
        %v2583 = vld [vmem:[#allocation8 + $0x208] sm:$0xf]
        %v2584 = vld [vmem:[#allocation8 + $0x20c] sm:$0xf]
        %v2585 = vld [vmem:[#allocation8 + $0x210] sm:$0xf]
        %v2586 = vld [vmem:[#allocation8 + $0x214] sm:$0xf]
        %v2587 = vld [vmem:[#allocation8 + $0x218] sm:$0xf]
        %v2588 = vld [vmem:[#allocation8 + $0x21c] sm:$0xf]
        %v2589 = vld [vmem:[#allocation8 + $0x220] sm:$0xf]
        %v2590 = vld [vmem:[#allocation8 + $0x224] sm:$0xf]
        %v2591 = vld [vmem:[#allocation8 + $0x228] sm:$0xf]
        %v2592 = vld [vmem:[#allocation8 + $0x22c] sm:$0xf]
        %v2593 = vld [vmem:[#allocation8 + $0x230] sm:$0xf]
        %v2594 = vld [vmem:[#allocation8 + $0x234] sm:$0xf]
        %v2595 = vld [vmem:[#allocation8 + $0x238] sm:$0xf]
        %v2596 = vld [vmem:[#allocation8 + $0x23c] sm:$0xf]
        %v2597 = vld [vmem:[%s4] sm:$0x1]
        %v2599 = vlaneseq
        %v2600 = vshrl.u32 %v2599, 7
        %v2601 = vsub.s32 0, %v2600
        %v2602 = vrot.slane %v2597, %v2601
        %v2748 = vunpack.c.l.b16 %v2453
        %v2749 = vunpack.c.l.b16 %v2454
        %v2750 = vunpack.c.l.b16 %v2455
        %v2751 = vunpack.c.l.b16 %v2456
        %v2752 = vunpack.c.l.b16 %v2457
        %v2753 = vunpack.c.l.b16 %v2458
        %v2754 = vunpack.c.l.b16 %v2459
        %v2755 = vunpack.c.l.b16 %v2460
        %v2756 = vunpack.c.l.b16 %v2461
        %v2757 = vunpack.c.l.b16 %v2462
        %v2758 = vunpack.c.l.b16 %v2463
        %v2759 = vunpack.c.l.b16 %v2464
        %v2760 = vunpack.c.l.b16 %v2465
        %v2761 = vunpack.c.l.b16 %v2466
        %v2762 = vunpack.c.l.b16 %v2467
        %v2763 = vunpack.c.l.b16 %v2468
        %v2764 = vunpack.c.l.b16 %v2469
        %v2765 = vunpack.c.l.b16 %v2470
        %v2766 = vunpack.c.l.b16 %v2471
        %v2767 = vunpack.c.l.b16 %v2472
        %v2768 = vunpack.c.l.b16 %v2473
        %v2769 = vunpack.c.l.b16 %v2474
        %v2770 = vunpack.c.l.b16 %v2475
        %v2771 = vunpack.c.l.b16 %v2476
        %v2772 = vunpack.c.l.b16 %v2477
        %v2773 = vunpack.c.l.b16 %v2478
        %v2774 = vunpack.c.l.b16 %v2479
        %v2775 = vunpack.c.l.b16 %v2480
        %v2776 = vunpack.c.l.b16 %v2481
        %v2777 = vunpack.c.l.b16 %v2482
        %v2778 = vunpack.c.l.b16 %v2483
        %v2779 = vunpack.c.l.b16 %v2484
        %v2780 = vunpack.c.l.b16 %v2485
        %v2781 = vunpack.c.l.b16 %v2486
        %v2782 = vunpack.c.l.b16 %v2487
        %v2783 = vunpack.c.l.b16 %v2488
        %v2784 = vunpack.c.l.b16 %v2489
        %v2785 = vunpack.c.l.b16 %v2490
        %v2786 = vunpack.c.l.b16 %v2491
        %v2787 = vunpack.c.l.b16 %v2492
        %v2788 = vunpack.c.l.b16 %v2493
        %v2789 = vunpack.c.l.b16 %v2494
        %v2790 = vunpack.c.l.b16 %v2495
        %v2791 = vunpack.c.l.b16 %v2496
        %v2792 = vunpack.c.l.b16 %v2497
        %v2793 = vunpack.c.l.b16 %v2498
        %v2794 = vunpack.c.l.b16 %v2499
        %v2795 = vunpack.c.l.b16 %v2500
        %v2796 = vunpack.c.l.b16 %v2501
        %v2797 = vunpack.c.l.b16 %v2502
        %v2798 = vunpack.c.l.b16 %v2503
        %v2799 = vunpack.c.l.b16 %v2504
        %v2800 = vunpack.c.l.b16 %v2505
        %v2801 = vunpack.c.l.b16 %v2506
        %v2802 = vunpack.c.l.b16 %v2507
        %v2803 = vunpack.c.l.b16 %v2508
        %v2804 = vunpack.c.l.b16 %v2509
        %v2805 = vunpack.c.l.b16 %v2510
        %v2806 = vunpack.c.l.b16 %v2511
        %v2807 = vunpack.c.l.b16 %v2512
        %v2808 = vunpack.c.l.b16 %v2513
        %v2809 = vunpack.c.l.b16 %v2514
        %v2810 = vunpack.c.l.b16 %v2515
        %v2811 = vunpack.c.l.b16 %v2516
        %v2812 = vunpack.c.l.b16 %v2517
        %v2813 = vunpack.c.l.b16 %v2518
        %v2814 = vunpack.c.l.b16 %v2519
        %v2815 = vunpack.c.l.b16 %v2520
        %v2816 = vunpack.c.l.b16 %v2521
        %v2817 = vunpack.c.l.b16 %v2522
        %v2818 = vunpack.c.l.b16 %v2523
        %v2819 = vunpack.c.l.b16 %v2524
        %v2820 = vunpack.c.l.b16 %v2525
        %v2821 = vunpack.c.l.b16 %v2526
        %v2822 = vunpack.c.l.b16 %v2527
        %v2823 = vunpack.c.l.b16 %v2528
        %v2824 = vunpack.c.l.b16 %v2529
        %v2825 = vunpack.c.l.b16 %v2530
        %v2826 = vunpack.c.l.b16 %v2531
        %v2827 = vunpack.c.l.b16 %v2532
        %v2828 = vunpack.c.l.b16 %v2533
        %v2829 = vunpack.c.l.b16 %v2534
        %v2830 = vunpack.c.l.b16 %v2535
        %v2831 = vunpack.c.l.b16 %v2536
        %v2832 = vunpack.c.l.b16 %v2537
        %v2833 = vunpack.c.l.b16 %v2538
        %v2834 = vunpack.c.l.b16 %v2539
        %v2835 = vunpack.c.l.b16 %v2540
        %v2836 = vunpack.c.l.b16 %v2541
        %v2837 = vunpack.c.l.b16 %v2542
        %v2838 = vunpack.c.l.b16 %v2543
        %v2839 = vunpack.c.l.b16 %v2544
        %v2840 = vunpack.c.l.b16 %v2545
        %v2841 = vunpack.c.l.b16 %v2546
        %v2842 = vunpack.c.l.b16 %v2547
        %v2843 = vunpack.c.l.b16 %v2548
        %v2844 = vunpack.c.l.b16 %v2549
        %v2845 = vunpack.c.l.b16 %v2550
        %v2846 = vunpack.c.l.b16 %v2551
        %v2847 = vunpack.c.l.b16 %v2552
        %v2848 = vunpack.c.l.b16 %v2553
        %v2849 = vunpack.c.l.b16 %v2554
        %v2850 = vunpack.c.l.b16 %v2555
        %v2851 = vunpack.c.l.b16 %v2556
        %v2852 = vunpack.c.l.b16 %v2557
        %v2853 = vunpack.c.l.b16 %v2558
        %v2854 = vunpack.c.l.b16 %v2559
        %v2855 = vunpack.c.l.b16 %v2560
        %v2856 = vunpack.c.l.b16 %v2561
        %v2857 = vunpack.c.l.b16 %v2562
        %v2858 = vunpack.c.l.b16 %v2563
        %v2859 = vunpack.c.l.b16 %v2564
        %v2860 = vunpack.c.l.b16 %v2565
        %v2861 = vunpack.c.l.b16 %v2566
        %v2862 = vunpack.c.l.b16 %v2567
        %v2863 = vunpack.c.l.b16 %v2568
        %v2864 = vunpack.c.l.b16 %v2569
        %v2865 = vunpack.c.l.b16 %v2570
        %v2866 = vunpack.c.l.b16 %v2571
        %v2867 = vunpack.c.l.b16 %v2572
        %v2868 = vunpack.c.l.b16 %v2573
        %v2869 = vunpack.c.l.b16 %v2574
        %v2870 = vunpack.c.l.b16 %v2575
        %v2871 = vunpack.c.l.b16 %v2576
        %v2872 = vunpack.c.l.b16 %v2577
        %v2873 = vunpack.c.l.b16 %v2578
        %v2874 = vunpack.c.l.b16 %v2579
        %v2875 = vunpack.c.l.b16 %v2580
        %v2876 = vunpack.c.l.b16 %v2581
        %v2877 = vunpack.c.l.b16 %v2582
        %v2878 = vunpack.c.l.b16 %v2583
        %v2879 = vunpack.c.l.b16 %v2584
        %v2880 = vunpack.c.l.b16 %v2585
        %v2881 = vunpack.c.l.b16 %v2586
        %v2882 = vunpack.c.l.b16 %v2587
        %v2883 = vunpack.c.l.b16 %v2588
        %v2884 = vunpack.c.l.b16 %v2589
        %v2885 = vunpack.c.l.b16 %v2590
        %v2886 = vunpack.c.l.b16 %v2591
        %v2887 = vunpack.c.l.b16 %v2592
        %v2888 = vunpack.c.l.b16 %v2593
        %v2889 = vunpack.c.l.b16 %v2594
        %v2890 = vunpack.c.l.b16 %v2595
        %v2891 = vunpack.c.l.b16 %v2596
        %v2892 = vpack.c.b16 %v2749, %v2748
        %v2893 = vpack.c.b16 %v2751, %v2750
        %v2894 = vpack.c.b16 %v2753, %v2752
        %v2895 = vpack.c.b16 %v2755, %v2754
        %v2896 = vpack.c.b16 %v2757, %v2756
        %v2897 = vpack.c.b16 %v2759, %v2758
        %v2898 = vpack.c.b16 %v2761, %v2760
        %v2899 = vpack.c.b16 %v2763, %v2762
        %v2900 = vpack.c.b16 %v2765, %v2764
        %v2901 = vpack.c.b16 %v2767, %v2766
        %v2902 = vpack.c.b16 %v2769, %v2768
        %v2903 = vpack.c.b16 %v2771, %v2770
        %v2904 = vpack.c.b16 %v2773, %v2772
        %v2905 = vpack.c.b16 %v2775, %v2774
        %v2906 = vpack.c.b16 %v2777, %v2776
        %v2907 = vpack.c.b16 %v2779, %v2778
        %v2908 = vpack.c.b16 %v2781, %v2780
        %v2909 = vpack.c.b16 %v2783, %v2782
        %v2910 = vpack.c.b16 %v2785, %v2784
        %v2911 = vpack.c.b16 %v2787, %v2786
        %v2912 = vpack.c.b16 %v2789, %v2788
        %v2913 = vpack.c.b16 %v2791, %v2790
        %v2914 = vpack.c.b16 %v2793, %v2792
        %v2915 = vpack.c.b16 %v2795, %v2794
        %v2916 = vpack.c.b16 %v2797, %v2796
        %v2917 = vpack.c.b16 %v2799, %v2798
        %v2918 = vpack.c.b16 %v2801, %v2800
        %v2919 = vpack.c.b16 %v2803, %v2802
        %v2920 = vpack.c.b16 %v2805, %v2804
        %v2921 = vpack.c.b16 %v2807, %v2806
        %v2922 = vpack.c.b16 %v2809, %v2808
        %v2923 = vpack.c.b16 %v2811, %v2810
        %v2924 = vpack.c.b16 %v2813, %v2812
        %v2925 = vpack.c.b16 %v2815, %v2814
        %v2926 = vpack.c.b16 %v2817, %v2816
        %v2927 = vpack.c.b16 %v2819, %v2818
        %v2928 = vpack.c.b16 %v2821, %v2820
        %v2929 = vpack.c.b16 %v2823, %v2822
        %v2930 = vpack.c.b16 %v2825, %v2824
        %v2931 = vpack.c.b16 %v2827, %v2826
        %v2932 = vpack.c.b16 %v2829, %v2828
        %v2933 = vpack.c.b16 %v2831, %v2830
        %v2934 = vpack.c.b16 %v2833, %v2832
        %v2935 = vpack.c.b16 %v2835, %v2834
        %v2936 = vpack.c.b16 %v2837, %v2836
        %v2937 = vpack.c.b16 %v2839, %v2838
        %v2938 = vpack.c.b16 %v2841, %v2840
        %v2939 = vpack.c.b16 %v2843, %v2842
        %v2940 = vpack.c.b16 %v2845, %v2844
        %v2941 = vpack.c.b16 %v2847, %v2846
        %v2942 = vpack.c.b16 %v2849, %v2848
        %v2943 = vpack.c.b16 %v2851, %v2850
        %v2944 = vpack.c.b16 %v2853, %v2852
        %v2945 = vpack.c.b16 %v2855, %v2854
        %v2946 = vpack.c.b16 %v2857, %v2856
        %v2947 = vpack.c.b16 %v2859, %v2858
        %v2948 = vpack.c.b16 %v2861, %v2860
        %v2949 = vpack.c.b16 %v2863, %v2862
        %v2950 = vpack.c.b16 %v2865, %v2864
        %v2951 = vpack.c.b16 %v2867, %v2866
        %v2952 = vpack.c.b16 %v2869, %v2868
        %v2953 = vpack.c.b16 %v2871, %v2870
        %v2954 = vpack.c.b16 %v2873, %v2872
        %v2955 = vpack.c.b16 %v2875, %v2874
        %v2956 = vpack.c.b16 %v2877, %v2876
        %v2957 = vpack.c.b16 %v2879, %v2878
        %v2958 = vpack.c.b16 %v2881, %v2880
        %v2959 = vpack.c.b16 %v2883, %v2882
        %v2960 = vpack.c.b16 %v2885, %v2884
        %v2961 = vpack.c.b16 %v2887, %v2886
        %v2962 = vpack.c.b16 %v2889, %v2888
        %v2963 = vpack.c.b16 %v2891, %v2890
        %3036 = vmatprep.subr.bf16.mxu0 0
        %3037 = vmatpush1.bf16.msra.mxu0 %v2899
        %3038 = vmatprep.subr.bf16.mxu0 0
        %3039 = vmatpush1.bf16.msra.mxu0 %v2898
        %3040 = vmatprep.subr.bf16.mxu0 0
        %3041 = vmatpush1.bf16.msra.mxu0 %v2897
        %3042 = vmatprep.subr.bf16.mxu0 0
        %3043 = vmatpush1.bf16.msra.mxu0 %v2896
        %3044 = vmatprep.subr.bf16.mxu0 0
        %3045 = vmatpush1.bf16.msra.mxu0 %v2895
        %3046 = vmatprep.subr.bf16.mxu0 0
        %3047 = vmatpush1.bf16.msra.mxu0 %v2894
        %3048 = vmatprep.subr.bf16.mxu0 0
        %3049 = vmatpush1.bf16.msra.mxu0 %v2893
        %3050 = vmatprep.subr.bf16.mxu0 0
        %3051 = vmatpush1.bf16.msra.mxu0 %v2892
        %3052 = vmatprep.subr.bf16.mxu0 0
        %3053 = vmatpush2.bf16.msra.mxu0 %v2907
        %3054 = vmatprep.subr.bf16.mxu0 0
        %3055 = vmatpush2.bf16.msra.mxu0 %v2906
        %3056 = vmatprep.subr.bf16.mxu0 0
        %3057 = vmatpush2.bf16.msra.mxu0 %v2905
        %3058 = vmatprep.subr.bf16.mxu0 0
        %3059 = vmatpush2.bf16.msra.mxu0 %v2904
        %3060 = vmatprep.subr.bf16.mxu0 0
        %3061 = vmatpush2.bf16.msra.mxu0 %v2903
        %3062 = vmatprep.subr.bf16.mxu0 0
        %3063 = vmatpush2.bf16.msra.mxu0 %v2902
        %3064 = vmatprep.subr.bf16.mxu0 0
        %3065 = vmatpush2.bf16.msra.mxu0 %v2901
        %3066 = vmatprep.subr.bf16.mxu0 0
        %3067 = vmatpush2.bf16.msra.mxu0 %v2900
        %3068 = vmatprep.mubr.bf16.mxu0 %v1545
        %3069 = vmatmul.mubr.bf16.gmra.mxu0 %v1401
        %v3070 = vpop.f32.mrf.mxu0
        %v3071 = vadd.f32 %v2602, %v3070
        %v3072 = vpop.f32.mrf.mxu0
        %v3073 = vpop.f32.mrf.mxu0
        %v3074 = vadd.f32 %v2602, %v3073
        %v3075 = vpop.f32.mrf.mxu0
        %3076 = vmatprep.mubr.bf16.mxu0 %v1546
        %3077 = vmatmul.mubr.bf16.gmra.mxu0 %v1402
        %v3078 = vpop.f32.mrf.mxu0
        %v3079 = vadd.f32 %v2602, %v3078
        %v3080 = vpop.f32.mrf.mxu0
        %v3081 = vpop.f32.mrf.mxu0
        %v3082 = vadd.f32 %v2602, %v3081
        %v3083 = vpop.f32.mrf.mxu0
        %3084 = vmatprep.mubr.bf16.mxu0 %v1547
        %3085 = vmatmul.mubr.bf16.gmra.mxu0 %v1403
        %v3086 = vpop.f32.mrf.mxu0
        %v3087 = vadd.f32 %v2602, %v3086
        %v3088 = vpop.f32.mrf.mxu0
        %v3089 = vpop.f32.mrf.mxu0
        %v3090 = vadd.f32 %v2602, %v3089
        %v3091 = vpop.f32.mrf.mxu0
        %3092 = vmatprep.mubr.bf16.mxu0 %v1548
        %3093 = vmatmul.mubr.bf16.gmra.mxu0 %v1404
        %v3094 = vpop.f32.mrf.mxu0
        %v3095 = vadd.f32 %v2602, %v3094
        %v3096 = vpop.f32.mrf.mxu0
        %v3097 = vpop.f32.mrf.mxu0
        %v3098 = vadd.f32 %v2602, %v3097
        %v3099 = vpop.f32.mrf.mxu0
        %3100 = vmatprep.mubr.bf16.mxu0 %v1549
        %3101 = vmatmul.mubr.bf16.gmra.mxu0 %v1405
        %v3102 = vpop.f32.mrf.mxu0
        %v3103 = vadd.f32 %v2602, %v3102
        %v3104 = vpop.f32.mrf.mxu0
        %v3105 = vpop.f32.mrf.mxu0
        %v3106 = vadd.f32 %v2602, %v3105
        %v3107 = vpop.f32.mrf.mxu0
        %3108 = vmatprep.mubr.bf16.mxu0 %v1550
        %3109 = vmatmul.mubr.bf16.gmra.mxu0 %v1406
        %v3110 = vpop.f32.mrf.mxu0
        %v3111 = vadd.f32 %v2602, %v3110
        %v3112 = vpop.f32.mrf.mxu0
        %v3113 = vpop.f32.mrf.mxu0
        %v3114 = vadd.f32 %v2602, %v3113
        %v3115 = vpop.f32.mrf.mxu0
        %3116 = vmatprep.mubr.bf16.mxu0 %v1551
        %3117 = vmatmul.mubr.bf16.gmra.mxu0 %v1407
        %v3118 = vpop.f32.mrf.mxu0
        %v3119 = vadd.f32 %v2602, %v3118
        %v3120 = vpop.f32.mrf.mxu0
        %v3121 = vpop.f32.mrf.mxu0
        %v3122 = vadd.f32 %v2602, %v3121
        %v3123 = vpop.f32.mrf.mxu0
        %3124 = vmatprep.mubr.bf16.mxu0 %v1552
        %3125 = vmatmul.mubr.bf16.gmra.mxu0 %v1408
        %v3126 = vpop.f32.mrf.mxu0
        %v3127 = vadd.f32 %v2602, %v3126
        %v3128 = vpop.f32.mrf.mxu0
        %v3129 = vpop.f32.mrf.mxu0
        %v3130 = vadd.f32 %v2602, %v3129
        %v3131 = vpop.f32.mrf.mxu0
        %3132 = vmatprep.mubr.bf16.mxu0 %v1553
        %3133 = vmatmul.mubr.bf16.gmra.mxu0 %v1409
        %v3134 = vpop.f32.mrf.mxu0
        %v3135 = vadd.f32 %v2602, %v3134
        %v3136 = vpop.f32.mrf.mxu0
        %v3137 = vpop.f32.mrf.mxu0
        %v3138 = vadd.f32 %v2602, %v3137
        %v3139 = vpop.f32.mrf.mxu0
        %3140 = vmatprep.mubr.bf16.mxu0 %v1554
        %3141 = vmatmul.mubr.bf16.gmra.mxu0 %v1410
        %v3142 = vpop.f32.mrf.mxu0
        %v3143 = vadd.f32 %v2602, %v3142
        %v3144 = vpop.f32.mrf.mxu0
        %v3145 = vpop.f32.mrf.mxu0
        %v3146 = vadd.f32 %v2602, %v3145
        %v3147 = vpop.f32.mrf.mxu0
        %3148 = vmatprep.mubr.bf16.mxu0 %v1555
        %3149 = vmatmul.mubr.bf16.gmra.mxu0 %v1411
        %v3150 = vpop.f32.mrf.mxu0
        %v3151 = vadd.f32 %v2602, %v3150
        %v3152 = vpop.f32.mrf.mxu0
        %v3153 = vpop.f32.mrf.mxu0
        %v3154 = vadd.f32 %v2602, %v3153
        %v3155 = vpop.f32.mrf.mxu0
        %3156 = vmatprep.mubr.bf16.mxu0 %v1556
        %3157 = vmatmul.mubr.bf16.gmra.mxu0 %v1412
        %v3158 = vpop.f32.mrf.mxu0
        %v3159 = vadd.f32 %v2602, %v3158
        %v3160 = vpop.f32.mrf.mxu0
        %v3161 = vpop.f32.mrf.mxu0
        %v3162 = vadd.f32 %v2602, %v3161
        %v3163 = vpop.f32.mrf.mxu0
        %3164 = vmatprep.mubr.bf16.mxu0 %v1557
        %3165 = vmatmul.mubr.bf16.gmra.mxu0 %v1413
        %v3166 = vpop.f32.mrf.mxu0
        %v3167 = vadd.f32 %v2602, %v3166
        %v3168 = vpop.f32.mrf.mxu0
        %v3169 = vpop.f32.mrf.mxu0
        %v3170 = vadd.f32 %v2602, %v3169
        %v3171 = vpop.f32.mrf.mxu0
        %3172 = vmatprep.mubr.bf16.mxu0 %v1558
        %3173 = vmatmul.mubr.bf16.gmra.mxu0 %v1414
        %v3174 = vpop.f32.mrf.mxu0
        %v3175 = vadd.f32 %v2602, %v3174
        %v3176 = vpop.f32.mrf.mxu0
        %v3177 = vpop.f32.mrf.mxu0
        %v3178 = vadd.f32 %v2602, %v3177
        %v3179 = vpop.f32.mrf.mxu0
        %3180 = vmatprep.mubr.bf16.mxu0 %v1559
        %3181 = vmatmul.mubr.bf16.gmra.mxu0 %v1415
        %v3182 = vpop.f32.mrf.mxu0
        %v3183 = vadd.f32 %v2602, %v3182
        %v3184 = vpop.f32.mrf.mxu0
        %v3185 = vpop.f32.mrf.mxu0
        %v3186 = vadd.f32 %v2602, %v3185
        %v3187 = vpop.f32.mrf.mxu0
        %3188 = vmatprep.mubr.bf16.mxu0 %v1560
        %3189 = vmatmul.mubr.bf16.gmra.mxu0 %v1416
        %v3190 = vpop.f32.mrf.mxu0
        %v3191 = vadd.f32 %v2602, %v3190
        %v3192 = vpop.f32.mrf.mxu0
        %v3193 = vpop.f32.mrf.mxu0
        %v3194 = vadd.f32 %v2602, %v3193
        %v3195 = vpop.f32.mrf.mxu0
        %3196 = vdwg.mxu0
        %3197 = vmatprep.subr.bf16.mxu0 0
        %3198 = vmatpush1.bf16.msra.mxu0 %v2915
        %3199 = vmatprep.subr.bf16.mxu0 0
        %3200 = vmatpush1.bf16.msra.mxu0 %v2914
        %3201 = vmatprep.subr.bf16.mxu0 0
        %3202 = vmatpush1.bf16.msra.mxu0 %v2913
        %3203 = vmatprep.subr.bf16.mxu0 0
        %3204 = vmatpush1.bf16.msra.mxu0 %v2912
        %3205 = vmatprep.subr.bf16.mxu0 0
        %3206 = vmatpush1.bf16.msra.mxu0 %v2911
        %3207 = vmatprep.subr.bf16.mxu0 0
        %3208 = vmatpush1.bf16.msra.mxu0 %v2910
        %3209 = vmatprep.subr.bf16.mxu0 0
        %3210 = vmatpush1.bf16.msra.mxu0 %v2909
        %3211 = vmatprep.subr.bf16.mxu0 0
        %3212 = vmatpush1.bf16.msra.mxu0 %v2908
        %3213 = vmatprep.subr.bf16.mxu0 0
        %3214 = vmatpush2.bf16.msra.mxu0 %v2923
        %3215 = vmatprep.subr.bf16.mxu0 0
        %3216 = vmatpush2.bf16.msra.mxu0 %v2922
        %3217 = vmatprep.subr.bf16.mxu0 0
        %3218 = vmatpush2.bf16.msra.mxu0 %v2921
        %3219 = vmatprep.subr.bf16.mxu0 0
        %3220 = vmatpush2.bf16.msra.mxu0 %v2920
        %3221 = vmatprep.subr.bf16.mxu0 0
        %3222 = vmatpush2.bf16.msra.mxu0 %v2919
        %3223 = vmatprep.subr.bf16.mxu0 0
        %3224 = vmatpush2.bf16.msra.mxu0 %v2918
        %3225 = vmatprep.subr.bf16.mxu0 0
        %3226 = vmatpush2.bf16.msra.mxu0 %v2917
        %3227 = vmatprep.subr.bf16.mxu0 0
        %3228 = vmatpush2.bf16.msra.mxu0 %v2916
        %3229 = vmatprep.mubr.bf16.mxu0 %v1867
        %3230 = vmatmul.mubr.bf16.gmra.mxu0 %v1753
        %v3231 = vpop.f32.mrf.mxu0
        %v3232 = vadd.f32 %v3071, %v3231
        %v3233 = vpop.f32.mrf.mxu0
        %v3234 = vpop.f32.mrf.mxu0
        %v3235 = vadd.f32 %v3074, %v3234
        %v3236 = vpop.f32.mrf.mxu0
        %3237 = vmatprep.mubr.bf16.mxu0 %v1868
        %3238 = vmatmul.mubr.bf16.gmra.mxu0 %v1754
        %v3239 = vpop.f32.mrf.mxu0
        %v3240 = vadd.f32 %v3079, %v3239
        %v3241 = vpop.f32.mrf.mxu0
        %v3242 = vpop.f32.mrf.mxu0
        %v3243 = vadd.f32 %v3082, %v3242
        %v3244 = vpop.f32.mrf.mxu0
        %3245 = vmatprep.mubr.bf16.mxu0 %v1869
        %3246 = vmatmul.mubr.bf16.gmra.mxu0 %v1755
        %v3247 = vpop.f32.mrf.mxu0
        %v3248 = vadd.f32 %v3087, %v3247
        %v3249 = vpop.f32.mrf.mxu0
        %v3250 = vpop.f32.mrf.mxu0
        %v3251 = vadd.f32 %v3090, %v3250
        %v3252 = vpop.f32.mrf.mxu0
        %3253 = vmatprep.mubr.bf16.mxu0 %v1870
        %3254 = vmatmul.mubr.bf16.gmra.mxu0 %v1756
        %v3255 = vpop.f32.mrf.mxu0
        %v3256 = vadd.f32 %v3095, %v3255
        %v3257 = vpop.f32.mrf.mxu0
        %v3258 = vpop.f32.mrf.mxu0
        %v3259 = vadd.f32 %v3098, %v3258
        %v3260 = vpop.f32.mrf.mxu0
        %3261 = vmatprep.mubr.bf16.mxu0 %v1871
        %3262 = vmatmul.mubr.bf16.gmra.mxu0 %v1757
        %v3263 = vpop.f32.mrf.mxu0
        %v3264 = vadd.f32 %v3103, %v3263
        %v3265 = vpop.f32.mrf.mxu0
        %v3266 = vpop.f32.mrf.mxu0
        %v3267 = vadd.f32 %v3106, %v3266
        %v3268 = vpop.f32.mrf.mxu0
        %3269 = vmatprep.mubr.bf16.mxu0 %v1872
        %3270 = vmatmul.mubr.bf16.gmra.mxu0 %v1758
        %v3271 = vpop.f32.mrf.mxu0
        %v3272 = vadd.f32 %v3111, %v3271
        %v3273 = vpop.f32.mrf.mxu0
        %v3274 = vpop.f32.mrf.mxu0
        %v3275 = vadd.f32 %v3114, %v3274
        %v3276 = vpop.f32.mrf.mxu0
        %3277 = vmatprep.mubr.bf16.mxu0 %v1873
        %3278 = vmatmul.mubr.bf16.gmra.mxu0 %v1759
        %v3279 = vpop.f32.mrf.mxu0
        %v3280 = vadd.f32 %v3119, %v3279
        %v3281 = vpop.f32.mrf.mxu0
        %v3282 = vpop.f32.mrf.mxu0
        %v3283 = vadd.f32 %v3122, %v3282
        %v3284 = vpop.f32.mrf.mxu0
        %3285 = vmatprep.mubr.bf16.mxu0 %v1874
        %3286 = vmatmul.mubr.bf16.gmra.mxu0 %v1760
        %v3287 = vpop.f32.mrf.mxu0
        %v3288 = vadd.f32 %v3127, %v3287
        %v3289 = vpop.f32.mrf.mxu0
        %v3290 = vpop.f32.mrf.mxu0
        %v3291 = vadd.f32 %v3130, %v3290
        %v3292 = vpop.f32.mrf.mxu0
        %3293 = vmatprep.mubr.bf16.mxu0 %v1875
        %3294 = vmatmul.mubr.bf16.gmra.mxu0 %v1761
        %v3295 = vpop.f32.mrf.mxu0
        %v3296 = vadd.f32 %v3135, %v3295
        %v3297 = vpop.f32.mrf.mxu0
        %v3298 = vpop.f32.mrf.mxu0
        %v3299 = vadd.f32 %v3138, %v3298
        %v3300 = vpop.f32.mrf.mxu0
        %3301 = vmatprep.mubr.bf16.mxu0 %v1876
        %3302 = vmatmul.mubr.bf16.gmra.mxu0 %v1762
        %v3303 = vpop.f32.mrf.mxu0
        %v3304 = vadd.f32 %v3143, %v3303
        %v3305 = vpop.f32.mrf.mxu0
        %v3306 = vpop.f32.mrf.mxu0
        %v3307 = vadd.f32 %v3146, %v3306
        %v3308 = vpop.f32.mrf.mxu0
        %3309 = vmatprep.mubr.bf16.mxu0 %v1877
        %3310 = vmatmul.mubr.bf16.gmra.mxu0 %v1763
        %v3311 = vpop.f32.mrf.mxu0
        %v3312 = vadd.f32 %v3151, %v3311
        %v3313 = vpop.f32.mrf.mxu0
        %v3314 = vpop.f32.mrf.mxu0
        %v3315 = vadd.f32 %v3154, %v3314
        %v3316 = vpop.f32.mrf.mxu0
        %3317 = vmatprep.mubr.bf16.mxu0 %v1878
        %3318 = vmatmul.mubr.bf16.gmra.mxu0 %v1764
        %v3319 = vpop.f32.mrf.mxu0
        %v3320 = vadd.f32 %v3159, %v3319
        %v3321 = vpop.f32.mrf.mxu0
        %v3322 = vpop.f32.mrf.mxu0
        %v3323 = vadd.f32 %v3162, %v3322
        %v3324 = vpop.f32.mrf.mxu0
        %3325 = vmatprep.mubr.bf16.mxu0 %v1879
        %3326 = vmatmul.mubr.bf16.gmra.mxu0 %v1765
        %v3327 = vpop.f32.mrf.mxu0
        %v3328 = vadd.f32 %v3167, %v3327
        %v3329 = vpop.f32.mrf.mxu0
        %v3330 = vpop.f32.mrf.mxu0
        %v3331 = vadd.f32 %v3170, %v3330
        %v3332 = vpop.f32.mrf.mxu0
        %3333 = vmatprep.mubr.bf16.mxu0 %v1880
        %3334 = vmatmul.mubr.bf16.gmra.mxu0 %v1766
        %v3335 = vpop.f32.mrf.mxu0
        %v3336 = vadd.f32 %v3175, %v3335
        %v3337 = vpop.f32.mrf.mxu0
        %v3338 = vpop.f32.mrf.mxu0
        %v3339 = vadd.f32 %v3178, %v3338
        %v3340 = vpop.f32.mrf.mxu0
        %3341 = vmatprep.mubr.bf16.mxu0 %v1881
        %3342 = vmatmul.mubr.bf16.gmra.mxu0 %v1767
        %v3343 = vpop.f32.mrf.mxu0
        %v3344 = vadd.f32 %v3183, %v3343
        %v3345 = vpop.f32.mrf.mxu0
        %v3346 = vpop.f32.mrf.mxu0
        %v3347 = vadd.f32 %v3186, %v3346
        %v3348 = vpop.f32.mrf.mxu0
        %3349 = vmatprep.mubr.bf16.mxu0 %v1882
        %3350 = vmatmul.mubr.bf16.gmra.mxu0 %v1768
        %v3351 = vpop.f32.mrf.mxu0
        %v3352 = vadd.f32 %v3191, %v3351
        %v3353 = vpop.f32.mrf.mxu0
        %v3354 = vpop.f32.mrf.mxu0
        %v3355 = vadd.f32 %v3194, %v3354
        %v3356 = vpop.f32.mrf.mxu0
        %3357 = vdwg.mxu0
        %3358 = vmatprep.subr.bf16.mxu0 0
        %3359 = vmatpush1.bf16.msra.mxu0 %v2931
        %3360 = vmatprep.subr.bf16.mxu0 0
        %3361 = vmatpush1.bf16.msra.mxu0 %v2930
        %3362 = vmatprep.subr.bf16.mxu0 0
        %3363 = vmatpush1.bf16.msra.mxu0 %v2929
        %3364 = vmatprep.subr.bf16.mxu0 0
        %3365 = vmatpush1.bf16.msra.mxu0 %v2928
        %3366 = vmatprep.subr.bf16.mxu0 0
        %3367 = vmatpush1.bf16.msra.mxu0 %v2927
        %3368 = vmatprep.subr.bf16.mxu0 0
        %3369 = vmatpush1.bf16.msra.mxu0 %v2926
        %3370 = vmatprep.subr.bf16.mxu0 0
        %3371 = vmatpush1.bf16.msra.mxu0 %v2925
        %3372 = vmatprep.subr.bf16.mxu0 0
        %3373 = vmatpush1.bf16.msra.mxu0 %v2924
        %3374 = vmatprep.subr.bf16.mxu0 0
        %3375 = vmatpush2.bf16.msra.mxu0 %v2939
        %3376 = vmatprep.subr.bf16.mxu0 0
        %3377 = vmatpush2.bf16.msra.mxu0 %v2938
        %3378 = vmatprep.subr.bf16.mxu0 0
        %3379 = vmatpush2.bf16.msra.mxu0 %v2937
        %3380 = vmatprep.subr.bf16.mxu0 0
        %3381 = vmatpush2.bf16.msra.mxu0 %v2936
        %3382 = vmatprep.subr.bf16.mxu0 0
        %3383 = vmatpush2.bf16.msra.mxu0 %v2935
        %3384 = vmatprep.subr.bf16.mxu0 0
        %3385 = vmatpush2.bf16.msra.mxu0 %v2934
        %3386 = vmatprep.subr.bf16.mxu0 0
        %3387 = vmatpush2.bf16.msra.mxu0 %v2933
        %3388 = vmatprep.subr.bf16.mxu0 0
        %3389 = vmatpush2.bf16.msra.mxu0 %v2932
        %3390 = vmatprep.mubr.bf16.mxu0 %v1997
        %3391 = vmatmul.mubr.bf16.gmra.mxu0 %v1883
        %v3392 = vpop.f32.mrf.mxu0
        %v3393 = vadd.f32 %v3232, %v3392
        %v3394 = vpop.f32.mrf.mxu0
        %v3395 = vpop.f32.mrf.mxu0
        %v3396 = vadd.f32 %v3235, %v3395
        %v3397 = vpop.f32.mrf.mxu0
        %3398 = vmatprep.mubr.bf16.mxu0 %v1998
        %3399 = vmatmul.mubr.bf16.gmra.mxu0 %v1884
        %v3400 = vpop.f32.mrf.mxu0
        %v3401 = vadd.f32 %v3240, %v3400
        %v3402 = vpop.f32.mrf.mxu0
        %v3403 = vpop.f32.mrf.mxu0
        %v3404 = vadd.f32 %v3243, %v3403
        %v3405 = vpop.f32.mrf.mxu0
        %3406 = vmatprep.mubr.bf16.mxu0 %v1999
        %3407 = vmatmul.mubr.bf16.gmra.mxu0 %v1885
        %v3408 = vpop.f32.mrf.mxu0
        %v3409 = vadd.f32 %v3248, %v3408
        %v3410 = vpop.f32.mrf.mxu0
        %v3411 = vpop.f32.mrf.mxu0
        %v3412 = vadd.f32 %v3251, %v3411
        %v3413 = vpop.f32.mrf.mxu0
        %3414 = vmatprep.mubr.bf16.mxu0 %v2000
        %3415 = vmatmul.mubr.bf16.gmra.mxu0 %v1886
        %v3416 = vpop.f32.mrf.mxu0
        %v3417 = vadd.f32 %v3256, %v3416
        %v3418 = vpop.f32.mrf.mxu0
        %v3419 = vpop.f32.mrf.mxu0
        %v3420 = vadd.f32 %v3259, %v3419
        %v3421 = vpop.f32.mrf.mxu0
        %3422 = vmatprep.mubr.bf16.mxu0 %v2001
        %3423 = vmatmul.mubr.bf16.gmra.mxu0 %v1887
        %v3424 = vpop.f32.mrf.mxu0
        %v3425 = vadd.f32 %v3264, %v3424
        %v3426 = vpop.f32.mrf.mxu0
        %v3427 = vpop.f32.mrf.mxu0
        %v3428 = vadd.f32 %v3267, %v3427
        %v3429 = vpop.f32.mrf.mxu0
        %3430 = vmatprep.mubr.bf16.mxu0 %v2002
        %3431 = vmatmul.mubr.bf16.gmra.mxu0 %v1888
        %v3432 = vpop.f32.mrf.mxu0
        %v3433 = vadd.f32 %v3272, %v3432
        %v3434 = vpop.f32.mrf.mxu0
        %v3435 = vpop.f32.mrf.mxu0
        %v3436 = vadd.f32 %v3275, %v3435
        %v3437 = vpop.f32.mrf.mxu0
        %3438 = vmatprep.mubr.bf16.mxu0 %v2003
        %3439 = vmatmul.mubr.bf16.gmra.mxu0 %v1889
        %v3440 = vpop.f32.mrf.mxu0
        %v3441 = vadd.f32 %v3280, %v3440
        %v3442 = vpop.f32.mrf.mxu0
        %v3443 = vpop.f32.mrf.mxu0
        %v3444 = vadd.f32 %v3283, %v3443
        %v3445 = vpop.f32.mrf.mxu0
        %3446 = vmatprep.mubr.bf16.mxu0 %v2004
        %3447 = vmatmul.mubr.bf16.gmra.mxu0 %v1890
        %v3448 = vpop.f32.mrf.mxu0
        %v3449 = vadd.f32 %v3288, %v3448
        %v3450 = vpop.f32.mrf.mxu0
        %v3451 = vpop.f32.mrf.mxu0
        %v3452 = vadd.f32 %v3291, %v3451
        %v3453 = vpop.f32.mrf.mxu0
        %3454 = vmatprep.mubr.bf16.mxu0 %v2005
        %3455 = vmatmul.mubr.bf16.gmra.mxu0 %v1891
        %v3456 = vpop.f32.mrf.mxu0
        %v3457 = vadd.f32 %v3296, %v3456
        %v3458 = vpop.f32.mrf.mxu0
        %v3459 = vpop.f32.mrf.mxu0
        %v3460 = vadd.f32 %v3299, %v3459
        %v3461 = vpop.f32.mrf.mxu0
        %3462 = vmatprep.mubr.bf16.mxu0 %v2006
        %3463 = vmatmul.mubr.bf16.gmra.mxu0 %v1892
        %v3464 = vpop.f32.mrf.mxu0
        %v3465 = vadd.f32 %v3304, %v3464
        %v3466 = vpop.f32.mrf.mxu0
        %v3467 = vpop.f32.mrf.mxu0
        %v3468 = vadd.f32 %v3307, %v3467
        %v3469 = vpop.f32.mrf.mxu0
        %3470 = vmatprep.mubr.bf16.mxu0 %v2007
        %3471 = vmatmul.mubr.bf16.gmra.mxu0 %v1893
        %v3472 = vpop.f32.mrf.mxu0
        %v3473 = vadd.f32 %v3312, %v3472
        %v3474 = vpop.f32.mrf.mxu0
        %v3475 = vpop.f32.mrf.mxu0
        %v3476 = vadd.f32 %v3315, %v3475
        %v3477 = vpop.f32.mrf.mxu0
        %3478 = vmatprep.mubr.bf16.mxu0 %v2008
        %3479 = vmatmul.mubr.bf16.gmra.mxu0 %v1894
        %v3480 = vpop.f32.mrf.mxu0
        %v3481 = vadd.f32 %v3320, %v3480
        %v3482 = vpop.f32.mrf.mxu0
        %v3483 = vpop.f32.mrf.mxu0
        %v3484 = vadd.f32 %v3323, %v3483
        %v3485 = vpop.f32.mrf.mxu0
        %3486 = vmatprep.mubr.bf16.mxu0 %v2009
        %3487 = vmatmul.mubr.bf16.gmra.mxu0 %v1895
        %v3488 = vpop.f32.mrf.mxu0
        %v3489 = vadd.f32 %v3328, %v3488
        %v3490 = vpop.f32.mrf.mxu0
        %v3491 = vpop.f32.mrf.mxu0
        %v3492 = vadd.f32 %v3331, %v3491
        %v3493 = vpop.f32.mrf.mxu0
        %3494 = vmatprep.mubr.bf16.mxu0 %v2010
        %3495 = vmatmul.mubr.bf16.gmra.mxu0 %v1896
        %v3496 = vpop.f32.mrf.mxu0
        %v3497 = vadd.f32 %v3336, %v3496
        %v3498 = vpop.f32.mrf.mxu0
        %v3499 = vpop.f32.mrf.mxu0
        %v3500 = vadd.f32 %v3339, %v3499
        %v3501 = vpop.f32.mrf.mxu0
        %3502 = vmatprep.mubr.bf16.mxu0 %v2011
        %3503 = vmatmul.mubr.bf16.gmra.mxu0 %v1897
        %v3504 = vpop.f32.mrf.mxu0
        %v3505 = vadd.f32 %v3344, %v3504
        %v3506 = vpop.f32.mrf.mxu0
        %v3507 = vpop.f32.mrf.mxu0
        %v3508 = vadd.f32 %v3347, %v3507
        %v3509 = vpop.f32.mrf.mxu0
        %3510 = vmatprep.mubr.bf16.mxu0 %v2012
        %3511 = vmatmul.mubr.bf16.gmra.mxu0 %v1898
        %v3512 = vpop.f32.mrf.mxu0
        %v3513 = vadd.f32 %v3352, %v3512
        %v3514 = vpop.f32.mrf.mxu0
        %v3515 = vpop.f32.mrf.mxu0
        %v3516 = vadd.f32 %v3355, %v3515
        %v3517 = vpop.f32.mrf.mxu0
        %3518 = vdwg.mxu0
        %3519 = vmatprep.subr.bf16.mxu0 0
        %3520 = vmatpush1.bf16.msra.mxu0 %v2947
        %3521 = vmatprep.subr.bf16.mxu0 0
        %3522 = vmatpush1.bf16.msra.mxu0 %v2946
        %3523 = vmatprep.subr.bf16.mxu0 0
        %3524 = vmatpush1.bf16.msra.mxu0 %v2945
        %3525 = vmatprep.subr.bf16.mxu0 0
        %3526 = vmatpush1.bf16.msra.mxu0 %v2944
        %3527 = vmatprep.subr.bf16.mxu0 0
        %3528 = vmatpush1.bf16.msra.mxu0 %v2943
        %3529 = vmatprep.subr.bf16.mxu0 0
        %3530 = vmatpush1.bf16.msra.mxu0 %v2942
        %3531 = vmatprep.subr.bf16.mxu0 0
        %3532 = vmatpush1.bf16.msra.mxu0 %v2941
        %3533 = vmatprep.subr.bf16.mxu0 0
        %3534 = vmatpush1.bf16.msra.mxu0 %v2940
        %3535 = vmatprep.subr.bf16.mxu0 0
        %3536 = vmatpush2.bf16.msra.mxu0 %v2955
        %3537 = vmatprep.subr.bf16.mxu0 0
        %3538 = vmatpush2.bf16.msra.mxu0 %v2954
        %3539 = vmatprep.subr.bf16.mxu0 0
        %3540 = vmatpush2.bf16.msra.mxu0 %v2953
        %3541 = vmatprep.subr.bf16.mxu0 0
        %3542 = vmatpush2.bf16.msra.mxu0 %v2952
        %3543 = vmatprep.subr.bf16.mxu0 0
        %3544 = vmatpush2.bf16.msra.mxu0 %v2951
        %3545 = vmatprep.subr.bf16.mxu0 0
        %3546 = vmatpush2.bf16.msra.mxu0 %v2950
        %3547 = vmatprep.subr.bf16.mxu0 0
        %3548 = vmatpush2.bf16.msra.mxu0 %v2949
        %3549 = vmatprep.subr.bf16.mxu0 0
        %3550 = vmatpush2.bf16.msra.mxu0 %v2948
        %3551 = vmatprep.mubr.bf16.mxu0 %v2291
        %3552 = vmatmul.mubr.bf16.gmra.mxu0 %v2175
        %v3553 = vpop.f32.mrf.mxu0
        %v3554 = vadd.f32 %v3393, %v3553
        %v3555 = vpop.f32.mrf.mxu0
        %v3556 = vpop.f32.mrf.mxu0
        %v3557 = vadd.f32 %v3396, %v3556
        %v3558 = vpop.f32.mrf.mxu0
        %3559 = vmatprep.mubr.bf16.mxu0 %v2292
        %3560 = vmatmul.mubr.bf16.gmra.mxu0 %v2176
        %v3561 = vpop.f32.mrf.mxu0
        %v3562 = vadd.f32 %v3401, %v3561
        %v3563 = vpop.f32.mrf.mxu0
        %v3564 = vpop.f32.mrf.mxu0
        %v3565 = vadd.f32 %v3404, %v3564
        %v3566 = vpop.f32.mrf.mxu0
        %3567 = vmatprep.mubr.bf16.mxu0 %v2293
        %3568 = vmatmul.mubr.bf16.gmra.mxu0 %v2177
        %v3569 = vpop.f32.mrf.mxu0
        %v3570 = vadd.f32 %v3409, %v3569
        %v3571 = vpop.f32.mrf.mxu0
        %v3572 = vpop.f32.mrf.mxu0
        %v3573 = vadd.f32 %v3412, %v3572
        %v3574 = vpop.f32.mrf.mxu0
        %3575 = vmatprep.mubr.bf16.mxu0 %v2294
        %3576 = vmatmul.mubr.bf16.gmra.mxu0 %v2178
        %v3577 = vpop.f32.mrf.mxu0
        %v3578 = vadd.f32 %v3417, %v3577
        %v3579 = vpop.f32.mrf.mxu0
        %v3580 = vpop.f32.mrf.mxu0
        %v3581 = vadd.f32 %v3420, %v3580
        %v3582 = vpop.f32.mrf.mxu0
        %3583 = vmatprep.mubr.bf16.mxu0 %v2295
        %3584 = vmatmul.mubr.bf16.gmra.mxu0 %v2179
        %v3585 = vpop.f32.mrf.mxu0
        %v3586 = vadd.f32 %v3425, %v3585
        %v3587 = vpop.f32.mrf.mxu0
        %v3588 = vpop.f32.mrf.mxu0
        %v3589 = vadd.f32 %v3428, %v3588
        %v3590 = vpop.f32.mrf.mxu0
        %3591 = vmatprep.mubr.bf16.mxu0 %v2296
        %3592 = vmatmul.mubr.bf16.gmra.mxu0 %v2180
        %v3593 = vpop.f32.mrf.mxu0
        %v3594 = vadd.f32 %v3433, %v3593
        %v3595 = vpop.f32.mrf.mxu0
        %v3596 = vpop.f32.mrf.mxu0
        %v3597 = vadd.f32 %v3436, %v3596
        %v3598 = vpop.f32.mrf.mxu0
        %3599 = vmatprep.mubr.bf16.mxu0 %v2297
        %3600 = vmatmul.mubr.bf16.gmra.mxu0 %v2181
        %v3601 = vpop.f32.mrf.mxu0
        %v3602 = vadd.f32 %v3441, %v3601
        %v3603 = vpop.f32.mrf.mxu0
        %v3604 = vpop.f32.mrf.mxu0
        %v3605 = vadd.f32 %v3444, %v3604
        %v3606 = vpop.f32.mrf.mxu0
        %3607 = vmatprep.mubr.bf16.mxu0 %v2298
        %3608 = vmatmul.mubr.bf16.gmra.mxu0 %v2182
        %v3609 = vpop.f32.mrf.mxu0
        %v3610 = vadd.f32 %v3449, %v3609
        %v3611 = vpop.f32.mrf.mxu0
        %v3612 = vpop.f32.mrf.mxu0
        %v3613 = vadd.f32 %v3452, %v3612
        %v3614 = vpop.f32.mrf.mxu0
        %3615 = vmatprep.mubr.bf16.mxu0 %v2299
        %3616 = vmatmul.mubr.bf16.gmra.mxu0 %v2183
        %v3617 = vpop.f32.mrf.mxu0
        %v3618 = vadd.f32 %v3457, %v3617
        %v3619 = vpop.f32.mrf.mxu0
        %v3620 = vpop.f32.mrf.mxu0
        %v3621 = vadd.f32 %v3460, %v3620
        %v3622 = vpop.f32.mrf.mxu0
        %3623 = vmatprep.mubr.bf16.mxu0 %v2300
        %3624 = vmatmul.mubr.bf16.gmra.mxu0 %v2184
        %v3625 = vpop.f32.mrf.mxu0
        %v3626 = vadd.f32 %v3465, %v3625
        %v3627 = vpop.f32.mrf.mxu0
        %v3628 = vpop.f32.mrf.mxu0
        %v3629 = vadd.f32 %v3468, %v3628
        %v3630 = vpop.f32.mrf.mxu0
        %3631 = vmatprep.mubr.bf16.mxu0 %v2301
        %3632 = vmatmul.mubr.bf16.gmra.mxu0 %v2185
        %v3633 = vpop.f32.mrf.mxu0
        %v3634 = vadd.f32 %v3473, %v3633
        %v3635 = vpop.f32.mrf.mxu0
        %v3636 = vpop.f32.mrf.mxu0
        %v3637 = vadd.f32 %v3476, %v3636
        %v3638 = vpop.f32.mrf.mxu0
        %3639 = vmatprep.mubr.bf16.mxu0 %v2302
        %3640 = vmatmul.mubr.bf16.gmra.mxu0 %v2186
        %v3641 = vpop.f32.mrf.mxu0
        %v3642 = vadd.f32 %v3481, %v3641
        %v3643 = vpop.f32.mrf.mxu0
        %v3644 = vpop.f32.mrf.mxu0
        %v3645 = vadd.f32 %v3484, %v3644
        %v3646 = vpop.f32.mrf.mxu0
        %3647 = vmatprep.mubr.bf16.mxu0 %v2303
        %3648 = vmatmul.mubr.bf16.gmra.mxu0 %v2187
        %v3649 = vpop.f32.mrf.mxu0
        %v3650 = vadd.f32 %v3489, %v3649
        %v3651 = vpop.f32.mrf.mxu0
        %v3652 = vpop.f32.mrf.mxu0
        %v3653 = vadd.f32 %v3492, %v3652
        %v3654 = vpop.f32.mrf.mxu0
        %3655 = vmatprep.mubr.bf16.mxu0 %v2304
        %3656 = vmatmul.mubr.bf16.gmra.mxu0 %v2188
        %v3657 = vpop.f32.mrf.mxu0
        %v3658 = vadd.f32 %v3497, %v3657
        %v3659 = vpop.f32.mrf.mxu0
        %v3660 = vpop.f32.mrf.mxu0
        %v3661 = vadd.f32 %v3500, %v3660
        %v3662 = vpop.f32.mrf.mxu0
        %3663 = vmatprep.mubr.bf16.mxu0 %v2305
        %3664 = vmatmul.mubr.bf16.gmra.mxu0 %v2189
        %v3665 = vpop.f32.mrf.mxu0
        %v3666 = vadd.f32 %v3505, %v3665
        %v3667 = vpop.f32.mrf.mxu0
        %v3668 = vpop.f32.mrf.mxu0
        %v3669 = vadd.f32 %v3508, %v3668
        %v3670 = vpop.f32.mrf.mxu0
        %3671 = vmatprep.mubr.bf16.mxu0 %v2306
        %3672 = vmatmul.mubr.bf16.gmra.mxu0 %v2190
        %v3673 = vpop.f32.mrf.mxu0
        %v3674 = vadd.f32 %v3513, %v3673
        %v3675 = vpop.f32.mrf.mxu0
        %v3676 = vpop.f32.mrf.mxu0
        %v3677 = vadd.f32 %v3516, %v3676
        %v3678 = vpop.f32.mrf.mxu0
        %3679 = vdwg.mxu0
        %3680 = vmatprep.subr.bf16.mxu0 0
        %3681 = vmatpush1.bf16.msra.mxu0 %v2963
        %3682 = vmatprep.subr.bf16.mxu0 0
        %3683 = vmatpush1.bf16.msra.mxu0 %v2962
        %3684 = vmatprep.subr.bf16.mxu0 0
        %3685 = vmatpush1.bf16.msra.mxu0 %v2961
        %3686 = vmatprep.subr.bf16.mxu0 0
        %3687 = vmatpush1.bf16.msra.mxu0 %v2960
        %3688 = vmatprep.subr.bf16.mxu0 0
        %3689 = vmatpush1.bf16.msra.mxu0 %v2959
        %3690 = vmatprep.subr.bf16.mxu0 0
        %3691 = vmatpush1.bf16.msra.mxu0 %v2958
        %3692 = vmatprep.subr.bf16.mxu0 0
        %3693 = vmatpush1.bf16.msra.mxu0 %v2957
        %3694 = vmatprep.subr.bf16.mxu0 0
        %3695 = vmatpush1.bf16.msra.mxu0 %v2956
        %3696 = vmatprep.subr.bf16.mxu0 0
        %3697 = vmatpush2.bf16.msra.mxu0 0
        %3698 = vmatprep.subr.bf16.mxu0 0
        %3699 = vmatpush2.bf16.msra.mxu0 0
        %3700 = vmatprep.subr.bf16.mxu0 0
        %3701 = vmatpush2.bf16.msra.mxu0 0
        %3702 = vmatprep.subr.bf16.mxu0 0
        %3703 = vmatpush2.bf16.msra.mxu0 0
        %3704 = vmatprep.subr.bf16.mxu0 0
        %3705 = vmatpush2.bf16.msra.mxu0 0
        %3706 = vmatprep.subr.bf16.mxu0 0
        %3707 = vmatpush2.bf16.msra.mxu0 0
        %3708 = vmatprep.subr.bf16.mxu0 0
        %3709 = vmatpush2.bf16.msra.mxu0 0
        %3710 = vmatprep.subr.bf16.mxu0 0
        %3711 = vmatpush2.bf16.msra.mxu0 0
        %3712 = vmatprep.mubr.bf16.mxu0 0
        %3713 = vmatmul.mubr.bf16.gmra.mxu0 %v2437
        %v3714 = vpop.f32.mrf.mxu0
        %v3715 = vadd.f32 %v3554, %v3714
        %v3716 = vpop.f32.mrf.mxu0
        %v3717 = vpop.f32.mrf.mxu0
        %v3718 = vadd.f32 %v3557, %v3717
        %v3719 = vpop.f32.mrf.mxu0
        %3720 = vmatprep.mubr.bf16.mxu0 0
        %3721 = vmatmul.mubr.bf16.gmra.mxu0 %v2438
        %v3722 = vpop.f32.mrf.mxu0
        %v3723 = vadd.f32 %v3562, %v3722
        %v3724 = vpop.f32.mrf.mxu0
        %v3725 = vpop.f32.mrf.mxu0
        %v3726 = vadd.f32 %v3565, %v3725
        %v3727 = vpop.f32.mrf.mxu0
        %3728 = vmatprep.mubr.bf16.mxu0 0
        %3729 = vmatmul.mubr.bf16.gmra.mxu0 %v2439
        %v3730 = vpop.f32.mrf.mxu0
        %v3731 = vadd.f32 %v3570, %v3730
        %v3732 = vpop.f32.mrf.mxu0
        %v3733 = vpop.f32.mrf.mxu0
        %v3734 = vadd.f32 %v3573, %v3733
        %v3735 = vpop.f32.mrf.mxu0
        %3736 = vmatprep.mubr.bf16.mxu0 0
        %3737 = vmatmul.mubr.bf16.gmra.mxu0 %v2440
        %v3738 = vpop.f32.mrf.mxu0
        %v3739 = vadd.f32 %v3578, %v3738
        %v3740 = vpop.f32.mrf.mxu0
        %v3741 = vpop.f32.mrf.mxu0
        %v3742 = vadd.f32 %v3581, %v3741
        %v3743 = vpop.f32.mrf.mxu0
        %3744 = vmatprep.mubr.bf16.mxu0 0
        %3745 = vmatmul.mubr.bf16.gmra.mxu0 %v2441
        %v3746 = vpop.f32.mrf.mxu0
        %v3747 = vadd.f32 %v3586, %v3746
        %v3748 = vpop.f32.mrf.mxu0
        %v3749 = vpop.f32.mrf.mxu0
        %v3750 = vadd.f32 %v3589, %v3749
        %v3751 = vpop.f32.mrf.mxu0
        %3752 = vmatprep.mubr.bf16.mxu0 0
        %3753 = vmatmul.mubr.bf16.gmra.mxu0 %v2442
        %v3754 = vpop.f32.mrf.mxu0
        %v3755 = vadd.f32 %v3594, %v3754
        %v3756 = vpop.f32.mrf.mxu0
        %v3757 = vpop.f32.mrf.mxu0
        %v3758 = vadd.f32 %v3597, %v3757
        %v3759 = vpop.f32.mrf.mxu0
        %3760 = vmatprep.mubr.bf16.mxu0 0
        %3761 = vmatmul.mubr.bf16.gmra.mxu0 %v2443
        %v3762 = vpop.f32.mrf.mxu0
        %v3763 = vadd.f32 %v3602, %v3762
        %v3764 = vpop.f32.mrf.mxu0
        %v3765 = vpop.f32.mrf.mxu0
        %v3766 = vadd.f32 %v3605, %v3765
        %v3767 = vpop.f32.mrf.mxu0
        %3768 = vmatprep.mubr.bf16.mxu0 0
        %3769 = vmatmul.mubr.bf16.gmra.mxu0 %v2444
        %v3770 = vpop.f32.mrf.mxu0
        %v3771 = vadd.f32 %v3610, %v3770
        %v3772 = vpop.f32.mrf.mxu0
        %v3773 = vpop.f32.mrf.mxu0
        %v3774 = vadd.f32 %v3613, %v3773
        %v3775 = vpop.f32.mrf.mxu0
        %3776 = vmatprep.mubr.bf16.mxu0 0
        %3777 = vmatmul.mubr.bf16.gmra.mxu0 %v2445
        %v3778 = vpop.f32.mrf.mxu0
        %v3779 = vadd.f32 %v3618, %v3778
        %v3780 = vpop.f32.mrf.mxu0
        %v3781 = vpop.f32.mrf.mxu0
        %v3782 = vadd.f32 %v3621, %v3781
        %v3783 = vpop.f32.mrf.mxu0
        %3784 = vmatprep.mubr.bf16.mxu0 0
        %3785 = vmatmul.mubr.bf16.gmra.mxu0 %v2446
        %v3786 = vpop.f32.mrf.mxu0
        %v3787 = vadd.f32 %v3626, %v3786
        %v3788 = vpop.f32.mrf.mxu0
        %v3789 = vpop.f32.mrf.mxu0
        %v3790 = vadd.f32 %v3629, %v3789
        %v3791 = vpop.f32.mrf.mxu0
        %3792 = vmatprep.mubr.bf16.mxu0 0
        %3793 = vmatmul.mubr.bf16.gmra.mxu0 %v2447
        %v3794 = vpop.f32.mrf.mxu0
        %v3795 = vadd.f32 %v3634, %v3794
        %v3796 = vpop.f32.mrf.mxu0
        %v3797 = vpop.f32.mrf.mxu0
        %v3798 = vadd.f32 %v3637, %v3797
        %v3799 = vpop.f32.mrf.mxu0
        %3800 = vmatprep.mubr.bf16.mxu0 0
        %3801 = vmatmul.mubr.bf16.gmra.mxu0 %v2448
        %v3802 = vpop.f32.mrf.mxu0
        %v3803 = vadd.f32 %v3642, %v3802
        %v3804 = vpop.f32.mrf.mxu0
        %v3805 = vpop.f32.mrf.mxu0
        %v3806 = vadd.f32 %v3645, %v3805
        %v3807 = vpop.f32.mrf.mxu0
        %3808 = vmatprep.mubr.bf16.mxu0 0
        %3809 = vmatmul.mubr.bf16.gmra.mxu0 %v2449
        %v3810 = vpop.f32.mrf.mxu0
        %v3811 = vadd.f32 %v3650, %v3810
        %v3812 = vpop.f32.mrf.mxu0
        %v3813 = vpop.f32.mrf.mxu0
        %v3814 = vadd.f32 %v3653, %v3813
        %v3815 = vpop.f32.mrf.mxu0
        %3816 = vmatprep.mubr.bf16.mxu0 0
        %3817 = vmatmul.mubr.bf16.gmra.mxu0 %v2450
        %v3818 = vpop.f32.mrf.mxu0
        %v3819 = vadd.f32 %v3658, %v3818
        %v3820 = vpop.f32.mrf.mxu0
        %v3821 = vpop.f32.mrf.mxu0
        %v3822 = vadd.f32 %v3661, %v3821
        %v3823 = vpop.f32.mrf.mxu0
        %3824 = vmatprep.mubr.bf16.mxu0 0
        %3825 = vmatmul.mubr.bf16.gmra.mxu0 %v2451
        %v3826 = vpop.f32.mrf.mxu0
        %v3827 = vadd.f32 %v3666, %v3826
        %v3828 = vpop.f32.mrf.mxu0
        %v3829 = vpop.f32.mrf.mxu0
        %v3830 = vadd.f32 %v3669, %v3829
        %v3831 = vpop.f32.mrf.mxu0
        %3832 = vmatprep.mubr.bf16.mxu0 0
        %3833 = vmatmul.mubr.bf16.gmra.mxu0 %v2452
        %v3834 = vpop.f32.mrf.mxu0
        %v3835 = vadd.f32 %v3674, %v3834
        %v3836 = vpop.f32.mrf.mxu0
        %v3837 = vpop.f32.mrf.mxu0
        %v3838 = vadd.f32 %v3677, %v3837
        %v3839 = vpop.f32.mrf.mxu0
        %3840 = vdwg.mxu0
        %v3841 = vmax.f32 %v3715, 0.0
        %v3842 = vmax.f32 %v3718, 0.0
        %v3843 = vmax.f32 %v3723, 0.0
        %v3844 = vmax.f32 %v3726, 0.0
        %v3845 = vmax.f32 %v3731, 0.0
        %v3846 = vmax.f32 %v3734, 0.0
        %v3847 = vmax.f32 %v3739, 0.0
        %v3848 = vmax.f32 %v3742, 0.0
        %v3849 = vmax.f32 %v3747, 0.0
        %v3850 = vmax.f32 %v3750, 0.0
        %v3851 = vmax.f32 %v3755, 0.0
        %v3852 = vmax.f32 %v3758, 0.0
        %v3853 = vmax.f32 %v3763, 0.0
        %v3854 = vmax.f32 %v3766, 0.0
        %v3855 = vmax.f32 %v3771, 0.0
        %v3856 = vmax.f32 %v3774, 0.0
        %v3857 = vmax.f32 %v3779, 0.0
        %v3858 = vmax.f32 %v3782, 0.0
        %v3859 = vmax.f32 %v3787, 0.0
        %v3860 = vmax.f32 %v3790, 0.0
        %v3861 = vmax.f32 %v3795, 0.0
        %v3862 = vmax.f32 %v3798, 0.0
        %v3863 = vmax.f32 %v3803, 0.0
        %v3864 = vmax.f32 %v3806, 0.0
        %v3865 = vmax.f32 %v3811, 0.0
        %v3866 = vmax.f32 %v3814, 0.0
        %v3867 = vmax.f32 %v3819, 0.0
        %v3868 = vmax.f32 %v3822, 0.0
        %v3869 = vmax.f32 %v3827, 0.0
        %v3870 = vmax.f32 %v3830, 0.0
        %v3871 = vmax.f32 %v3835, 0.0
        %v3872 = vmax.f32 %v3838, 0.0
        %v3873 = vpack.c.bf16 %v3842, %v3841
        %v3874 = vpack.c.bf16 %v3844, %v3843
        %v3875 = vpack.c.bf16 %v3846, %v3845
        %v3876 = vpack.c.bf16 %v3848, %v3847
        %v3877 = vpack.c.bf16 %v3850, %v3849
        %v3878 = vpack.c.bf16 %v3852, %v3851
        %v3879 = vpack.c.bf16 %v3854, %v3853
        %v3880 = vpack.c.bf16 %v3856, %v3855
        %v3881 = vpack.c.bf16 %v3858, %v3857
        %v3882 = vpack.c.bf16 %v3860, %v3859
        %v3883 = vpack.c.bf16 %v3862, %v3861
        %v3884 = vpack.c.bf16 %v3864, %v3863
        %v3885 = vpack.c.bf16 %v3866, %v3865
        %v3886 = vpack.c.bf16 %v3868, %v3867
        %v3887 = vpack.c.bf16 %v3870, %v3869
        %v3888 = vpack.c.bf16 %v3872, %v3871
        %v3889 = vld [vmem:[#allocation9] sm:$0xf]
        %v3890 = vld [vmem:[#allocation9 + $0x4] sm:$0xf]
        %v3891 = vld [vmem:[#allocation9 + $0x8] sm:$0xf]
        %v3892 = vld [vmem:[#allocation9 + $0xc] sm:$0xf]
        %v3893 = vld [vmem:[#allocation9 + $0x10] sm:$0xf]
        %v3894 = vld [vmem:[#allocation9 + $0x14] sm:$0xf]
        %v3895 = vld [vmem:[#allocation9 + $0x18] sm:$0xf]
        %v3896 = vld [vmem:[#allocation9 + $0x1c] sm:$0xf]
        %v3897 = vld [vmem:[#allocation9 + $0x20] sm:$0xf]
        %v3898 = vld [vmem:[#allocation9 + $0x24] sm:$0xf]
        %v3899 = vld [vmem:[#allocation9 + $0x28] sm:$0xf]
        %v3900 = vld [vmem:[#allocation9 + $0x2c] sm:$0xf]
        %v3901 = vld [vmem:[#allocation9 + $0x30] sm:$0xf]
        %v3902 = vld [vmem:[#allocation9 + $0x34] sm:$0xf]
        %v3903 = vld [vmem:[#allocation9 + $0x38] sm:$0xf]
        %v3904 = vld [vmem:[#allocation9 + $0x3c] sm:$0xf]
        %v3905 = vld [vmem:[%s6] sm:$0x1]
        %v3907 = vlaneseq
        %v3908 = vshrl.u32 %v3907, 7
        %v3909 = vsub.s32 0, %v3908
        %v3910 = vrot.slane %v3905, %v3909
        %v3928 = vunpack.c.l.b16 %v3889
        %v3929 = vunpack.c.l.b16 %v3890
        %v3930 = vunpack.c.l.b16 %v3891
        %v3931 = vunpack.c.l.b16 %v3892
        %v3932 = vunpack.c.l.b16 %v3893
        %v3933 = vunpack.c.l.b16 %v3894
        %v3934 = vunpack.c.l.b16 %v3895
        %v3935 = vunpack.c.l.b16 %v3896
        %v3936 = vunpack.c.l.b16 %v3897
        %v3937 = vunpack.c.l.b16 %v3898
        %v3938 = vunpack.c.l.b16 %v3899
        %v3939 = vunpack.c.l.b16 %v3900
        %v3940 = vunpack.c.l.b16 %v3901
        %v3941 = vunpack.c.l.b16 %v3902
        %v3942 = vunpack.c.l.b16 %v3903
        %v3943 = vunpack.c.l.b16 %v3904
        %v3944 = vpack.c.b16 %v3929, %v3928
        %v3945 = vpack.c.b16 %v3931, %v3930
        %v3946 = vpack.c.b16 %v3933, %v3932
        %v3947 = vpack.c.b16 %v3935, %v3934
        %v3948 = vpack.c.b16 %v3937, %v3936
        %v3949 = vpack.c.b16 %v3939, %v3938
        %v3950 = vpack.c.b16 %v3941, %v3940
        %v3951 = vpack.c.b16 %v3943, %v3942
        %3960 = vmatprep.subr.bf16.mxu0 0
        %3961 = vmatpush1.bf16.msra.mxu0 %v3951
        %3962 = vmatprep.subr.bf16.mxu0 0
        %3963 = vmatpush1.bf16.msra.mxu0 %v3950
        %3964 = vmatprep.subr.bf16.mxu0 0
        %3965 = vmatpush1.bf16.msra.mxu0 %v3949
        %3966 = vmatprep.subr.bf16.mxu0 0
        %3967 = vmatpush1.bf16.msra.mxu0 %v3948
        %3968 = vmatprep.subr.bf16.mxu0 0
        %3969 = vmatpush1.bf16.msra.mxu0 %v3947
        %3970 = vmatprep.subr.bf16.mxu0 0
        %3971 = vmatpush1.bf16.msra.mxu0 %v3946
        %3972 = vmatprep.subr.bf16.mxu0 0
        %3973 = vmatpush1.bf16.msra.mxu0 %v3945
        %3974 = vmatprep.subr.bf16.mxu0 0
        %3975 = vmatpush1.bf16.msra.mxu0 %v3944
        %3976 = vmatprep.subr.bf16.mxu0 0
        %3977 = vmatpush2.bf16.msra.mxu0 0
        %3978 = vmatprep.subr.bf16.mxu0 0
        %3979 = vmatpush2.bf16.msra.mxu0 0
        %3980 = vmatprep.subr.bf16.mxu0 0
        %3981 = vmatpush2.bf16.msra.mxu0 0
        %3982 = vmatprep.subr.bf16.mxu0 0
        %3983 = vmatpush2.bf16.msra.mxu0 0
        %3984 = vmatprep.subr.bf16.mxu0 0
        %3985 = vmatpush2.bf16.msra.mxu0 0
        %3986 = vmatprep.subr.bf16.mxu0 0
        %3987 = vmatpush2.bf16.msra.mxu0 0
        %3988 = vmatprep.subr.bf16.mxu0 0
        %3989 = vmatpush2.bf16.msra.mxu0 0
        %3990 = vmatprep.subr.bf16.mxu0 0
        %3991 = vmatpush2.bf16.msra.mxu0 0
        %3992 = vmatprep.mubr.bf16.mxu0 0
        %3993 = vmatmul.mubr.bf16.gmra.mxu0 %v3873
        %v3994 = vpop.f32.mrf.mxu0
        %v3995 = vadd.f32 %v3910, %v3994
        %v3996 = vpop.f32.mrf.mxu0
        %v3997 = vpop.f32.mrf.mxu0
        %v3998 = vadd.f32 %v3910, %v3997
        %v3999 = vpop.f32.mrf.mxu0
        %4000 = vmatprep.mubr.bf16.mxu0 0
        %4001 = vmatmul.mubr.bf16.gmra.mxu0 %v3874
        %v4002 = vpop.f32.mrf.mxu0
        %v4003 = vadd.f32 %v3910, %v4002
        %v4004 = vpop.f32.mrf.mxu0
        %v4005 = vpop.f32.mrf.mxu0
        %v4006 = vadd.f32 %v3910, %v4005
        %v4007 = vpop.f32.mrf.mxu0
        %4008 = vmatprep.mubr.bf16.mxu0 0
        %4009 = vmatmul.mubr.bf16.gmra.mxu0 %v3875
        %v4010 = vpop.f32.mrf.mxu0
        %v4011 = vadd.f32 %v3910, %v4010
        %v4012 = vpop.f32.mrf.mxu0
        %v4013 = vpop.f32.mrf.mxu0
        %v4014 = vadd.f32 %v3910, %v4013
        %v4015 = vpop.f32.mrf.mxu0
        %4016 = vmatprep.mubr.bf16.mxu0 0
        %4017 = vmatmul.mubr.bf16.gmra.mxu0 %v3876
        %v4018 = vpop.f32.mrf.mxu0
        %v4019 = vadd.f32 %v3910, %v4018
        %v4020 = vpop.f32.mrf.mxu0
        %v4021 = vpop.f32.mrf.mxu0
        %v4022 = vadd.f32 %v3910, %v4021
        %v4023 = vpop.f32.mrf.mxu0
        %4024 = vmatprep.mubr.bf16.mxu0 0
        %4025 = vmatmul.mubr.bf16.gmra.mxu0 %v3877
        %v4026 = vpop.f32.mrf.mxu0
        %v4027 = vadd.f32 %v3910, %v4026
        %v4028 = vpop.f32.mrf.mxu0
        %v4029 = vpop.f32.mrf.mxu0
        %v4030 = vadd.f32 %v3910, %v4029
        %v4031 = vpop.f32.mrf.mxu0
        %4032 = vmatprep.mubr.bf16.mxu0 0
        %4033 = vmatmul.mubr.bf16.gmra.mxu0 %v3878
        %v4034 = vpop.f32.mrf.mxu0
        %v4035 = vadd.f32 %v3910, %v4034
        %v4036 = vpop.f32.mrf.mxu0
        %v4037 = vpop.f32.mrf.mxu0
        %v4038 = vadd.f32 %v3910, %v4037
        %v4039 = vpop.f32.mrf.mxu0
        %4040 = vmatprep.mubr.bf16.mxu0 0
        %4041 = vmatmul.mubr.bf16.gmra.mxu0 %v3879
        %v4042 = vpop.f32.mrf.mxu0
        %v4043 = vadd.f32 %v3910, %v4042
        %v4044 = vpop.f32.mrf.mxu0
        %v4045 = vpop.f32.mrf.mxu0
        %v4046 = vadd.f32 %v3910, %v4045
        %v4047 = vpop.f32.mrf.mxu0
        %4048 = vmatprep.mubr.bf16.mxu0 0
        %4049 = vmatmul.mubr.bf16.gmra.mxu0 %v3880
        %v4050 = vpop.f32.mrf.mxu0
        %v4051 = vadd.f32 %v3910, %v4050
        %v4052 = vpop.f32.mrf.mxu0
        %v4053 = vpop.f32.mrf.mxu0
        %v4054 = vadd.f32 %v3910, %v4053
        %v4055 = vpop.f32.mrf.mxu0
        %4056 = vmatprep.mubr.bf16.mxu0 0
        %4057 = vmatmul.mubr.bf16.gmra.mxu0 %v3881
        %v4058 = vpop.f32.mrf.mxu0
        %v4059 = vadd.f32 %v3910, %v4058
        %v4060 = vpop.f32.mrf.mxu0
        %v4061 = vpop.f32.mrf.mxu0
        %v4062 = vadd.f32 %v3910, %v4061
        %v4063 = vpop.f32.mrf.mxu0
        %4064 = vmatprep.mubr.bf16.mxu0 0
        %4065 = vmatmul.mubr.bf16.gmra.mxu0 %v3882
        %v4066 = vpop.f32.mrf.mxu0
        %v4067 = vadd.f32 %v3910, %v4066
        %v4068 = vpop.f32.mrf.mxu0
        %v4069 = vpop.f32.mrf.mxu0
        %v4070 = vadd.f32 %v3910, %v4069
        %v4071 = vpop.f32.mrf.mxu0
        %4072 = vmatprep.mubr.bf16.mxu0 0
        %4073 = vmatmul.mubr.bf16.gmra.mxu0 %v3883
        %v4074 = vpop.f32.mrf.mxu0
        %v4075 = vadd.f32 %v3910, %v4074
        %v4076 = vpop.f32.mrf.mxu0
        %v4077 = vpop.f32.mrf.mxu0
        %v4078 = vadd.f32 %v3910, %v4077
        %v4079 = vpop.f32.mrf.mxu0
        %4080 = vmatprep.mubr.bf16.mxu0 0
        %4081 = vmatmul.mubr.bf16.gmra.mxu0 %v3884
        %v4082 = vpop.f32.mrf.mxu0
        %v4083 = vadd.f32 %v3910, %v4082
        %v4084 = vpop.f32.mrf.mxu0
        %v4085 = vpop.f32.mrf.mxu0
        %v4086 = vadd.f32 %v3910, %v4085
        %v4087 = vpop.f32.mrf.mxu0
        %4088 = vmatprep.mubr.bf16.mxu0 0
        %4089 = vmatmul.mubr.bf16.gmra.mxu0 %v3885
        %v4090 = vpop.f32.mrf.mxu0
        %v4091 = vadd.f32 %v3910, %v4090
        %v4092 = vpop.f32.mrf.mxu0
        %v4093 = vpop.f32.mrf.mxu0
        %v4094 = vadd.f32 %v3910, %v4093
        %v4095 = vpop.f32.mrf.mxu0
        %4096 = vmatprep.mubr.bf16.mxu0 0
        %4097 = vmatmul.mubr.bf16.gmra.mxu0 %v3886
        %v4098 = vpop.f32.mrf.mxu0
        %v4099 = vadd.f32 %v3910, %v4098
        %v4100 = vpop.f32.mrf.mxu0
        %v4101 = vpop.f32.mrf.mxu0
        %v4102 = vadd.f32 %v3910, %v4101
        %v4103 = vpop.f32.mrf.mxu0
        %4104 = vmatprep.mubr.bf16.mxu0 0
        %4105 = vmatmul.mubr.bf16.gmra.mxu0 %v3887
        %v4106 = vpop.f32.mrf.mxu0
        %v4107 = vadd.f32 %v3910, %v4106
        %v4108 = vpop.f32.mrf.mxu0
        %v4109 = vpop.f32.mrf.mxu0
        %v4110 = vadd.f32 %v3910, %v4109
        %v4111 = vpop.f32.mrf.mxu0
        %4112 = vmatprep.mubr.bf16.mxu0 0
        %4113 = vmatmul.mubr.bf16.gmra.mxu0 %v3888
        %v4114 = vpop.f32.mrf.mxu0
        %v4115 = vadd.f32 %v3910, %v4114
        %v4116 = vpop.f32.mrf.mxu0
        %v4117 = vpop.f32.mrf.mxu0
        %v4118 = vadd.f32 %v3910, %v4117
        %v4119 = vpop.f32.mrf.mxu0
        %4120 = vdwg.mxu0
        %v4121 = vadd.f32 %v3995, %v3998
        %v4122 = vadd.f32 %v4121, %v4003
        %v4123 = vadd.f32 %v4122, %v4006
        %v4124 = vadd.f32 %v4123, %v4011
        %v4125 = vadd.f32 %v4124, %v4014
        %v4126 = vadd.f32 %v4125, %v4019
        %v4127 = vadd.f32 %v4126, %v4022
        %v4128 = vadd.f32 %v4127, %v4027
        %v4129 = vadd.f32 %v4128, %v4030
        %v4130 = vadd.f32 %v4129, %v4035
        %v4131 = vadd.f32 %v4130, %v4038
        %v4132 = vadd.f32 %v4131, %v4043
        %v4133 = vadd.f32 %v4132, %v4046
        %v4134 = vadd.f32 %v4133, %v4051
        %v4135 = vadd.f32 %v4134, %v4054
        %v4136 = vadd.f32 %v4135, %v4059
        %v4137 = vadd.f32 %v4136, %v4062
        %v4138 = vadd.f32 %v4137, %v4067
        %v4139 = vadd.f32 %v4138, %v4070
        %v4140 = vadd.f32 %v4139, %v4075
        %v4141 = vadd.f32 %v4140, %v4078
        %v4142 = vadd.f32 %v4141, %v4083
        %v4143 = vadd.f32 %v4142, %v4086
        %v4144 = vadd.f32 %v4143, %v4091
        %v4145 = vadd.f32 %v4144, %v4094
        %v4146 = vadd.f32 %v4145, %v4099
        %v4147 = vadd.f32 %v4146, %v4102
        %v4148 = vadd.f32 %v4147, %v4107
        %v4149 = vadd.f32 %v4148, %v4110
        %v4150 = vadd.f32 %v4149, %v4115
        %v4151 = vadd.f32 %v4150, %v4118
        %v4152 = vrot.slane %v4151, 4
        %v4153 = vadd.f32 %v4151, %v4152
        %v4154 = vrot.slane %v4153, 2
        %v4155 = vadd.f32 %v4153, %v4154
        %v4156 = vrot.slane %v4155, 1
        %v4157 = vadd.f32 %v4155, %v4156
        %v4158 = vrcp.pop 256.0
        %v4159 = vmul.f32 %v4157, %v4158
        %v4160 = vpack.c.bf16 %v4159, %v4159
        %v4161 = vld [vmem:[#allocation11] sm:$0xf]
        %v4162 = vld [vmem:[#allocation11 + $0x4] sm:$0xf]
        %v4163 = vld [vmem:[#allocation11 + $0x8] sm:$0xf]
        %v4164 = vld [vmem:[#allocation11 + $0xc] sm:$0xf]
        %v4165 = vld [vmem:[#allocation11 + $0x10] sm:$0xf]
        %v4166 = vld [vmem:[#allocation11 + $0x14] sm:$0xf]
        %v4167 = vld [vmem:[#allocation11 + $0x18] sm:$0xf]
        %v4168 = vld [vmem:[#allocation11 + $0x1c] sm:$0xf]
        %v4169 = vld [vmem:[#allocation11 + $0x20] sm:$0xf]
        %v4170 = vld [vmem:[#allocation11 + $0x24] sm:$0xf]
        %v4171 = vld [vmem:[#allocation11 + $0x28] sm:$0xf]
        %v4172 = vld [vmem:[#allocation11 + $0x2c] sm:$0xf]
        %v4173 = vld [vmem:[#allocation11 + $0x30] sm:$0xf]
        %v4174 = vld [vmem:[#allocation11 + $0x34] sm:$0xf]
        %v4175 = vld [vmem:[#allocation11 + $0x38] sm:$0xf]
        %v4176 = vld [vmem:[#allocation11 + $0x3c] sm:$0xf]
        %v4193 = vunpack.c.l.b16 %v4161
        %v4194 = vunpack.c.l.b16 %v4162
        %v4195 = vunpack.c.l.b16 %v4163
        %v4196 = vunpack.c.l.b16 %v4164
        %v4197 = vunpack.c.l.b16 %v4165
        %v4198 = vunpack.c.l.b16 %v4166
        %v4199 = vunpack.c.l.b16 %v4167
        %v4200 = vunpack.c.l.b16 %v4168
        %v4201 = vunpack.c.l.b16 %v4169
        %v4202 = vunpack.c.l.b16 %v4170
        %v4203 = vunpack.c.l.b16 %v4171
        %v4204 = vunpack.c.l.b16 %v4172
        %v4205 = vunpack.c.l.b16 %v4173
        %v4206 = vunpack.c.l.b16 %v4174
        %v4207 = vunpack.c.l.b16 %v4175
        %v4208 = vunpack.c.l.b16 %v4176
        %v4209 = vpack.c.b16 %v4194, %v4193
        %v4210 = vpack.c.b16 %v4196, %v4195
        %v4211 = vpack.c.b16 %v4198, %v4197
        %v4212 = vpack.c.b16 %v4200, %v4199
        %v4213 = vpack.c.b16 %v4202, %v4201
        %v4214 = vpack.c.b16 %v4204, %v4203
        %v4215 = vpack.c.b16 %v4206, %v4205
        %v4216 = vpack.c.b16 %v4208, %v4207
        %4225 = vmatprep.subr.bf16.mxu0 0
        %4226 = vmatpush1.bf16.msra.mxu0 %v4216
        %4227 = vmatprep.subr.bf16.mxu0 0
        %4228 = vmatpush1.bf16.msra.mxu0 %v4215
        %4229 = vmatprep.subr.bf16.mxu0 0
        %4230 = vmatpush1.bf16.msra.mxu0 %v4214
        %4231 = vmatprep.subr.bf16.mxu0 0
        %4232 = vmatpush1.bf16.msra.mxu0 %v4213
        %4233 = vmatprep.subr.bf16.mxu0 0
        %4234 = vmatpush1.bf16.msra.mxu0 %v4212
        %4235 = vmatprep.subr.bf16.mxu0 0
        %4236 = vmatpush1.bf16.msra.mxu0 %v4211
        %4237 = vmatprep.subr.bf16.mxu0 0
        %4238 = vmatpush1.bf16.msra.mxu0 %v4210
        %4239 = vmatprep.subr.bf16.mxu0 0
        %4240 = vmatpush1.bf16.msra.mxu0 %v4209
        %4241 = vmatprep.subr.bf16.mxu0 0
        %4242 = vmatpush2.bf16.msra.mxu0 0
        %4243 = vmatprep.subr.bf16.mxu0 0
        %4244 = vmatpush2.bf16.msra.mxu0 0
        %4245 = vmatprep.subr.bf16.mxu0 0
        %4246 = vmatpush2.bf16.msra.mxu0 0
        %4247 = vmatprep.subr.bf16.mxu0 0
        %4248 = vmatpush2.bf16.msra.mxu0 0
        %4249 = vmatprep.subr.bf16.mxu0 0
        %4250 = vmatpush2.bf16.msra.mxu0 0
        %4251 = vmatprep.subr.bf16.mxu0 0
        %4252 = vmatpush2.bf16.msra.mxu0 0
        %4253 = vmatprep.subr.bf16.mxu0 0
        %4254 = vmatpush2.bf16.msra.mxu0 0
        %4255 = vmatprep.subr.bf16.mxu0 0
        %4256 = vmatpush2.bf16.msra.mxu0 0
        %4257 = vmatprep.mubr.bf16.mxu0 0
        %4258 = vmatmul.mubr.bf16.gmra.mxu0 %v4160
        %v4259 = vpop.f32.mrf.mxu0
        %v4260 = vadd.f32 0.0, %v4259
        %v4261 = vpop.f32.mrf.mxu0
        %v4262 = vpop.f32.mrf.mxu0
        %v4263 = vpop.f32.mrf.mxu0
        %4264 = vdwg.mxu0
        %v4265 = vmax.f32 %v4260, 0.0
        %v4266 = vpack.c.bf16 %v4265, %v4265
        %v4267 = vld [vmem:[#allocation12] sm:$0xf]
        %v4268 = vld [vmem:[#allocation12 + $0x4] sm:$0xf]
        %v4269 = vld [vmem:[#allocation12 + $0x8] sm:$0xf]
        %v4270 = vld [vmem:[#allocation12 + $0xc] sm:$0xf]
        %v4271 = vld [vmem:[#allocation12 + $0x10] sm:$0xf]
        %v4272 = vld [vmem:[#allocation12 + $0x14] sm:$0xf]
        %v4273 = vld [vmem:[#allocation12 + $0x18] sm:$0xf]
        %v4274 = vld [vmem:[#allocation12 + $0x1c] sm:$0xf]
        %v4275 = vld [vmem:[#allocation12 + $0x20] sm:$0xf]
        %v4276 = vld [vmem:[#allocation12 + $0x24] sm:$0xf]
        %v4277 = vld [vmem:[#allocation12 + $0x28] sm:$0xf]
        %v4278 = vld [vmem:[#allocation12 + $0x2c] sm:$0xf]
        %v4279 = vld [vmem:[#allocation12 + $0x30] sm:$0xf]
        %v4280 = vld [vmem:[#allocation12 + $0x34] sm:$0xf]
        %v4281 = vld [vmem:[#allocation12 + $0x38] sm:$0xf]
        %v4282 = vld [vmem:[#allocation12 + $0x3c] sm:$0xf]
        %v4299 = vunpack.c.l.b16 %v4267
        %v4300 = vunpack.c.l.b16 %v4268
        %v4301 = vunpack.c.l.b16 %v4269
        %v4302 = vunpack.c.l.b16 %v4270
        %v4303 = vunpack.c.l.b16 %v4271
        %v4304 = vunpack.c.l.b16 %v4272
        %v4305 = vunpack.c.l.b16 %v4273
        %v4306 = vunpack.c.l.b16 %v4274
        %v4307 = vunpack.c.l.b16 %v4275
        %v4308 = vunpack.c.l.b16 %v4276
        %v4309 = vunpack.c.l.b16 %v4277
        %v4310 = vunpack.c.l.b16 %v4278
        %v4311 = vunpack.c.l.b16 %v4279
        %v4312 = vunpack.c.l.b16 %v4280
        %v4313 = vunpack.c.l.b16 %v4281
        %v4314 = vunpack.c.l.b16 %v4282
        %v4315 = vpack.c.b16 %v4300, %v4299
        %v4316 = vpack.c.b16 %v4302, %v4301
        %v4317 = vpack.c.b16 %v4304, %v4303
        %v4318 = vpack.c.b16 %v4306, %v4305
        %v4319 = vpack.c.b16 %v4308, %v4307
        %v4320 = vpack.c.b16 %v4310, %v4309
        %v4321 = vpack.c.b16 %v4312, %v4311
        %v4322 = vpack.c.b16 %v4314, %v4313
        %4331 = vmatprep.subr.bf16.mxu0 0
        %4332 = vmatpush1.bf16.msra.mxu0 %v4322
        %4333 = vmatprep.subr.bf16.mxu0 0
        %4334 = vmatpush1.bf16.msra.mxu0 %v4321
        %4335 = vmatprep.subr.bf16.mxu0 0
        %4336 = vmatpush1.bf16.msra.mxu0 %v4320
        %4337 = vmatprep.subr.bf16.mxu0 0
        %4338 = vmatpush1.bf16.msra.mxu0 %v4319
        %4339 = vmatprep.subr.bf16.mxu0 0
        %4340 = vmatpush1.bf16.msra.mxu0 %v4318
        %4341 = vmatprep.subr.bf16.mxu0 0
        %4342 = vmatpush1.bf16.msra.mxu0 %v4317
        %4343 = vmatprep.subr.bf16.mxu0 0
        %4344 = vmatpush1.bf16.msra.mxu0 %v4316
        %4345 = vmatprep.subr.bf16.mxu0 0
        %4346 = vmatpush1.bf16.msra.mxu0 %v4315
        %4347 = vmatprep.subr.bf16.mxu0 0
        %4348 = vmatpush2.bf16.msra.mxu0 0
        %4349 = vmatprep.subr.bf16.mxu0 0
        %4350 = vmatpush2.bf16.msra.mxu0 0
        %4351 = vmatprep.subr.bf16.mxu0 0
        %4352 = vmatpush2.bf16.msra.mxu0 0
        %4353 = vmatprep.subr.bf16.mxu0 0
        %4354 = vmatpush2.bf16.msra.mxu0 0
        %4355 = vmatprep.subr.bf16.mxu0 0
        %4356 = vmatpush2.bf16.msra.mxu0 0
        %4357 = vmatprep.subr.bf16.mxu0 0
        %4358 = vmatpush2.bf16.msra.mxu0 0
        %4359 = vmatprep.subr.bf16.mxu0 0
        %4360 = vmatpush2.bf16.msra.mxu0 0
        %4361 = vmatprep.subr.bf16.mxu0 0
        %4362 = vmatpush2.bf16.msra.mxu0 0
        %4363 = vmatprep.mubr.bf16.mxu0 0
        %4364 = vmatmul.mubr.bf16.gmra.mxu0 %v4266
        %v4365 = vpop.f32.mrf.mxu0
        %v4366 = vadd.f32 0.0, %v4365
        %v4367 = vpop.f32.mrf.mxu0
        %v4368 = vpop.f32.mrf.mxu0
        %v4369 = vpop.f32.mrf.mxu0
        %4370 = vdwg.mxu0
        %v4371 = vxor.u32 %v4366, 2147483648
        %v4372 = vmul.f32 %v4371, 1.442695
        %v4373 = vpow.pop %v4372
        %v4374 = vadd.f32 %v4373, 1.0
        %v4375 = vrcp.pop %v4374
        %v4376 = vmul.f32 1.0, %v4375
        %v4377 = vunpack.c.l.bf16 %v425
        %v4378 = vunpack.c.l.bf16 %v426
        %v4379 = vunpack.c.l.bf16 %v427
        %v4380 = vunpack.c.l.bf16 %v428
        %v4381 = vunpack.c.l.bf16 %v429
        %v4382 = vunpack.c.l.bf16 %v430
        %v4383 = vunpack.c.l.bf16 %v431
        %v4384 = vunpack.c.l.bf16 %v432
        %v4385 = vunpack.c.l.bf16 %v433
        %v4386 = vunpack.c.l.bf16 %v434
        %v4387 = vunpack.c.l.bf16 %v435
        %v4388 = vunpack.c.l.bf16 %v436
        %v4389 = vunpack.c.l.bf16 %v437
        %v4390 = vunpack.c.l.bf16 %v438
        %v4391 = vunpack.c.l.bf16 %v439
        %v4392 = vunpack.c.l.bf16 %v440
        %v4393 = vunpack.c.l.bf16 %v441
        %v4394 = vunpack.c.l.bf16 %v442
        %v4395 = vunpack.c.l.bf16 %v443
        %v4396 = vunpack.c.l.bf16 %v444
        %v4397 = vunpack.c.l.bf16 %v445
        %v4398 = vunpack.c.l.bf16 %v446
        %v4399 = vunpack.c.l.bf16 %v447
        %v4400 = vunpack.c.l.bf16 %v448
        %v4401 = vunpack.c.l.bf16 %v449
        %v4402 = vunpack.c.l.bf16 %v450
        %v4403 = vunpack.c.l.bf16 %v451
        %v4404 = vunpack.c.l.bf16 %v452
        %v4405 = vunpack.c.l.bf16 %v453
        %v4406 = vunpack.c.l.bf16 %v454
        %v4407 = vunpack.c.l.bf16 %v455
        %v4408 = vunpack.c.l.bf16 %v456
        %v4409 = vlaneseq
        %v4410 = vshrl.u32 %v4409, 7
        %v4411 = vsub.s32 0, %v4410
        %v4412 = vrot.slane %v4376, %v4411
        %v4413 = vmul.f32 %v3995, %v4412
        %v4414 = vmul.f32 %v3998, %v4412
        %v4415 = vmul.f32 %v4003, %v4412
        %v4416 = vmul.f32 %v4006, %v4412
        %v4417 = vmul.f32 %v4011, %v4412
        %v4418 = vmul.f32 %v4014, %v4412
        %v4419 = vmul.f32 %v4019, %v4412
        %v4420 = vmul.f32 %v4022, %v4412
        %v4421 = vmul.f32 %v4027, %v4412
        %v4422 = vmul.f32 %v4030, %v4412
        %v4423 = vmul.f32 %v4035, %v4412
        %v4424 = vmul.f32 %v4038, %v4412
        %v4425 = vmul.f32 %v4043, %v4412
        %v4426 = vmul.f32 %v4046, %v4412
        %v4427 = vmul.f32 %v4051, %v4412
        %v4428 = vmul.f32 %v4054, %v4412
        %v4429 = vmul.f32 %v4059, %v4412
        %v4430 = vmul.f32 %v4062, %v4412
        %v4431 = vmul.f32 %v4067, %v4412
        %v4432 = vmul.f32 %v4070, %v4412
        %v4433 = vmul.f32 %v4075, %v4412
        %v4434 = vmul.f32 %v4078, %v4412
        %v4435 = vmul.f32 %v4083, %v4412
        %v4436 = vmul.f32 %v4086, %v4412
        %v4437 = vmul.f32 %v4091, %v4412
        %v4438 = vmul.f32 %v4094, %v4412
        %v4439 = vmul.f32 %v4099, %v4412
        %v4440 = vmul.f32 %v4102, %v4412
        %v4441 = vmul.f32 %v4107, %v4412
        %v4442 = vmul.f32 %v4110, %v4412
        %v4443 = vmul.f32 %v4115, %v4412
        %v4444 = vmul.f32 %v4118, %v4412
        %v4445 = vadd.f32 %v4413, %v4377
        %v4446 = vadd.f32 %v4414, %v4378
        %v4447 = vadd.f32 %v4415, %v4379
        %v4448 = vadd.f32 %v4416, %v4380
        %v4449 = vadd.f32 %v4417, %v4381
        %v4450 = vadd.f32 %v4418, %v4382
        %v4451 = vadd.f32 %v4419, %v4383
        %v4452 = vadd.f32 %v4420, %v4384
        %v4453 = vadd.f32 %v4421, %v4385
        %v4454 = vadd.f32 %v4422, %v4386
        %v4455 = vadd.f32 %v4423, %v4387
        %v4456 = vadd.f32 %v4424, %v4388
        %v4457 = vadd.f32 %v4425, %v4389
        %v4458 = vadd.f32 %v4426, %v4390
        %v4459 = vadd.f32 %v4427, %v4391
        %v4460 = vadd.f32 %v4428, %v4392
        %v4461 = vadd.f32 %v4429, %v4393
        %v4462 = vadd.f32 %v4430, %v4394
        %v4463 = vadd.f32 %v4431, %v4395
        %v4464 = vadd.f32 %v4432, %v4396
        %v4465 = vadd.f32 %v4433, %v4397
        %v4466 = vadd.f32 %v4434, %v4398
        %v4467 = vadd.f32 %v4435, %v4399
        %v4468 = vadd.f32 %v4436, %v4400
        %v4469 = vadd.f32 %v4437, %v4401
        %v4470 = vadd.f32 %v4438, %v4402
        %v4471 = vadd.f32 %v4439, %v4403
        %v4472 = vadd.f32 %v4440, %v4404
        %v4473 = vadd.f32 %v4441, %v4405
        %v4474 = vadd.f32 %v4442, %v4406
        %v4475 = vadd.f32 %v4443, %v4407
        %v4476 = vadd.f32 %v4444, %v4408
        %v4477 = vmax.f32 %v4445, 0.0
        %v4478 = vmax.f32 %v4446, 0.0
        %v4479 = vmax.f32 %v4447, 0.0
        %v4480 = vmax.f32 %v4448, 0.0
        %v4481 = vmax.f32 %v4449, 0.0
        %v4482 = vmax.f32 %v4450, 0.0
        %v4483 = vmax.f32 %v4451, 0.0
        %v4484 = vmax.f32 %v4452, 0.0
        %v4485 = vmax.f32 %v4453, 0.0
        %v4486 = vmax.f32 %v4454, 0.0
        %v4487 = vmax.f32 %v4455, 0.0
        %v4488 = vmax.f32 %v4456, 0.0
        %v4489 = vmax.f32 %v4457, 0.0
        %v4490 = vmax.f32 %v4458, 0.0
        %v4491 = vmax.f32 %v4459, 0.0
        %v4492 = vmax.f32 %v4460, 0.0
        %v4493 = vmax.f32 %v4461, 0.0
        %v4494 = vmax.f32 %v4462, 0.0
        %v4495 = vmax.f32 %v4463, 0.0
        %v4496 = vmax.f32 %v4464, 0.0
        %v4497 = vmax.f32 %v4465, 0.0
        %v4498 = vmax.f32 %v4466, 0.0
        %v4499 = vmax.f32 %v4467, 0.0
        %v4500 = vmax.f32 %v4468, 0.0
        %v4501 = vmax.f32 %v4469, 0.0
        %v4502 = vmax.f32 %v4470, 0.0
        %v4503 = vmax.f32 %v4471, 0.0
        %v4504 = vmax.f32 %v4472, 0.0
        %v4505 = vmax.f32 %v4473, 0.0
        %v4506 = vmax.f32 %v4474, 0.0
        %v4507 = vmax.f32 %v4475, 0.0
        %v4508 = vmax.f32 %v4476, 0.0
        %v4509 = vpack.c.bf16 %v4478, %v4477
        %v4510 = vpack.c.bf16 %v4480, %v4479
        %v4511 = vpack.c.bf16 %v4482, %v4481
        %v4512 = vpack.c.bf16 %v4484, %v4483
        %v4513 = vpack.c.bf16 %v4486, %v4485
        %v4514 = vpack.c.bf16 %v4488, %v4487
        %v4515 = vpack.c.bf16 %v4490, %v4489
        %v4516 = vpack.c.bf16 %v4492, %v4491
        %v4517 = vpack.c.bf16 %v4494, %v4493
        %v4518 = vpack.c.bf16 %v4496, %v4495
        %v4519 = vpack.c.bf16 %v4498, %v4497
        %v4520 = vpack.c.bf16 %v4500, %v4499
        %v4521 = vpack.c.bf16 %v4502, %v4501
        %v4522 = vpack.c.bf16 %v4504, %v4503
        %v4523 = vpack.c.bf16 %v4506, %v4505
        %v4524 = vpack.c.bf16 %v4508, %v4507
        %v4541 = vunpack.c.l.b16 %v4509
        %v4542 = vunpack.c.h.b16 %v4509
        %v4543 = vunpack.c.l.b16 %v4510
        %v4544 = vunpack.c.h.b16 %v4510
        %v4545 = vunpack.c.l.b16 %v4511
        %v4546 = vunpack.c.h.b16 %v4511
        %v4547 = vunpack.c.l.b16 %v4512
        %v4548 = vunpack.c.h.b16 %v4512
        %v4549 = vunpack.c.l.b16 %v4513
        %v4550 = vunpack.c.h.b16 %v4513
        %v4551 = vunpack.c.l.b16 %v4514
        %v4552 = vunpack.c.h.b16 %v4514
        %v4553 = vunpack.c.l.b16 %v4515
        %v4554 = vunpack.c.h.b16 %v4515
        %v4555 = vunpack.c.l.b16 %v4516
        %v4556 = vunpack.c.h.b16 %v4516
        %v4557 = vunpack.c.l.b16 %v4517
        %v4558 = vunpack.c.h.b16 %v4517
        %v4559 = vunpack.c.l.b16 %v4518
        %v4560 = vunpack.c.h.b16 %v4518
        %v4561 = vunpack.c.l.b16 %v4519
        %v4562 = vunpack.c.h.b16 %v4519
        %v4563 = vunpack.c.l.b16 %v4520
        %v4564 = vunpack.c.h.b16 %v4520
        %v4565 = vunpack.c.l.b16 %v4521
        %v4566 = vunpack.c.h.b16 %v4521
        %v4567 = vunpack.c.l.b16 %v4522
        %v4568 = vunpack.c.h.b16 %v4522
        %v4569 = vunpack.c.l.b16 %v4523
        %v4570 = vunpack.c.h.b16 %v4523
        %v4571 = vunpack.c.l.b16 %v4524
        %v4572 = vunpack.c.h.b16 %v4524
        %v4573 = vpack.c.b16 %v4541, %v4541
        %v4574 = vpack.c.b16 %v4542, %v4542
        %v4575 = vpack.c.b16 %v4543, %v4543
        %v4576 = vpack.c.b16 %v4544, %v4544
        %v4577 = vpack.c.b16 %v4545, %v4545
        %v4578 = vpack.c.b16 %v4546, %v4546
        %v4579 = vpack.c.b16 %v4547, %v4547
        %v4580 = vpack.c.b16 %v4548, %v4548
        %v4581 = vpack.c.b16 %v4549, %v4549
        %v4582 = vpack.c.b16 %v4550, %v4550
        %v4583 = vpack.c.b16 %v4551, %v4551
        %v4584 = vpack.c.b16 %v4552, %v4552
        %v4585 = vpack.c.b16 %v4553, %v4553
        %v4586 = vpack.c.b16 %v4554, %v4554
        %v4587 = vpack.c.b16 %v4555, %v4555
        %v4588 = vpack.c.b16 %v4556, %v4556
        %v4589 = vpack.c.b16 %v4557, %v4557
        %v4590 = vpack.c.b16 %v4558, %v4558
        %v4591 = vpack.c.b16 %v4559, %v4559
        %v4592 = vpack.c.b16 %v4560, %v4560
        %v4593 = vpack.c.b16 %v4561, %v4561
        %v4594 = vpack.c.b16 %v4562, %v4562
        %v4595 = vpack.c.b16 %v4563, %v4563
        %v4596 = vpack.c.b16 %v4564, %v4564
        %v4597 = vpack.c.b16 %v4565, %v4565
        %v4598 = vpack.c.b16 %v4566, %v4566
        %v4599 = vpack.c.b16 %v4567, %v4567
        %v4600 = vpack.c.b16 %v4568, %v4568
        %v4601 = vpack.c.b16 %v4569, %v4569
        %v4602 = vpack.c.b16 %v4570, %v4570
        %v4603 = vpack.c.b16 %v4571, %v4571
        %v4604 = vpack.c.b16 %v4572, %v4572
        %4637 = vst [vmem:[%s423] sm:$0xf] %v4573
        %4638 = vst [vmem:[%s423 + $0x4] sm:$0xf] %v4574
        %4639 = vst [vmem:[%s423 + $0x8] sm:$0xf] %v4575
        %4640 = vst [vmem:[%s423 + $0xc] sm:$0xf] %v4576
        %4641 = vst [vmem:[%s423 + $0x10] sm:$0xf] %v4577
        %4642 = vst [vmem:[%s423 + $0x14] sm:$0xf] %v4578
        %4643 = vst [vmem:[%s423 + $0x18] sm:$0xf] %v4579
        %4644 = vst [vmem:[%s423 + $0x1c] sm:$0xf] %v4580
        %4645 = vst [vmem:[%s423 + $0x20] sm:$0xf] %v4581
        %4646 = vst [vmem:[%s423 + $0x24] sm:$0xf] %v4582
        %4647 = vst [vmem:[%s423 + $0x28] sm:$0xf] %v4583
        %4648 = vst [vmem:[%s423 + $0x2c] sm:$0xf] %v4584
        %4649 = vst [vmem:[%s423 + $0x30] sm:$0xf] %v4585
        %4650 = vst [vmem:[%s423 + $0x34] sm:$0xf] %v4586
        %4651 = vst [vmem:[%s423 + $0x38] sm:$0xf] %v4587
        %4652 = vst [vmem:[%s423 + $0x3c] sm:$0xf] %v4588
        %4653 = vst [vmem:[%s423 + $0x40] sm:$0xf] %v4589
        %4654 = vst [vmem:[%s423 + $0x44] sm:$0xf] %v4590
        %4655 = vst [vmem:[%s423 + $0x48] sm:$0xf] %v4591
        %4656 = vst [vmem:[%s423 + $0x4c] sm:$0xf] %v4592
        %4657 = vst [vmem:[%s423 + $0x50] sm:$0xf] %v4593
        %4658 = vst [vmem:[%s423 + $0x54] sm:$0xf] %v4594
        %4659 = vst [vmem:[%s423 + $0x58] sm:$0xf] %v4595
        %4660 = vst [vmem:[%s423 + $0x5c] sm:$0xf] %v4596
        %4661 = vst [vmem:[%s423 + $0x60] sm:$0xf] %v4597
        %4662 = vst [vmem:[%s423 + $0x64] sm:$0xf] %v4598
        %4663 = vst [vmem:[%s423 + $0x68] sm:$0xf] %v4599
        %4664 = vst [vmem:[%s423 + $0x6c] sm:$0xf] %v4600
        %4665 = vst [vmem:[%s423 + $0x70] sm:$0xf] %v4601
        %4666 = vst [vmem:[%s423 + $0x74] sm:$0xf] %v4602
        %4667 = vst [vmem:[%s423 + $0x78] sm:$0xf] %v4603
        %4668 = vst [vmem:[%s423 + $0x7c] sm:$0xf] %v4604
        %s4669 = sand.u32 %s231, 1
        %s4670 = scalar_lea.sflag [#allocation5], %s4669
        %s4671 = sand.u32 %s231, 1
        %s4672 = smul.addr %s4671, 128
        %s4673 = scalar_lea.vmem [#allocation14], %s4672
        // Predicated region
        $region81: #{tpu_custom_call.1} parent=55 // pred_check
          %p4674 = pneg %p241
        $region82: #{tpu_custom_call.1} parent=55 // pred_check_branch
          %4676 = sbr.rel (%p4674) target = $region84
        $region83: #{tpu_custom_call.1} parent=55 // pred_region
          %s4678 = ssub.s32 2048, 2048
          %4679 = vsyncadd %s4670, %s4678
          %s4680 = smul.addr %s29, 32
          %s4681 = smul.addr %s4680, 64
          %s4682 = scalar_lea.hbm %s9, %s4681
          %s4683 = sshll.u32 %s4673, 4
          %s4684 = int_to_ptr.vmem [resolvable:$true] %s4683
          %4689 = dma.vmem_to_hbm [thread:$0]  %s4684, 2048, %s4682, %s4670, 64, 64, 4
        $region84: #{tpu_custom_call.1} parent=55 // pred_fallthru
          _
      $region56: #{tpu_custom_call.1} parent=5 // pred_fallthru
        _
      %p4690 = scmp.le.s32.totalorder 2, %s24
      // Predicated region
      $region85: #{tpu_custom_call.1} parent=5 // pred_check
        %p4691 = pneg %p4690
      $region86: #{tpu_custom_call.1} parent=5 // pred_check_branch
        %4693 = sbr.rel (%p4691) target = $region88
      $region87: #{tpu_custom_call.1} parent=5 // pred_region
        %s4694 = ssub.s32 %s24, 2
        // Predicated region
        $region89: #{tpu_custom_call.1} parent=87 // pred_check
          %p4695 = pneg %p247
        $region90: #{tpu_custom_call.1} parent=87 // pred_check_branch
          %4697 = sbr.rel (%p4695) target = $region92
        $region91: #{tpu_custom_call.1} parent=87 // pred_region
          %s4698 = sand.u32 %s232, 1
          %s4699 = scalar_lea.sflag [#allocation5], %s4698
          %s4700 = sand.u32 %s232, 1
          %s4701 = smul.addr %s4700, 128
          %s4702 = scalar_lea.vmem [#allocation14], %s4701
          %4703 = dma.done %s4699, 2048
        $region92: #{tpu_custom_call.1} parent=87 // pred_fallthru
          _
      $region88: #{tpu_custom_call.1} parent=5 // pred_fallthru
        _
    $region6: #{tpu_custom_call.1} parent=1 // loop_footer
      %s28 = sadd.s32 1, %s24
    $region7: #{tpu_custom_call.1} parent=1 // loop_footer_branch
      %23 = sbr.rel target = $region3
    $region8: #{tpu_custom_call.1} parent=1 // loop_exit
      _
    %4704 = vsyncpa [#allocation4], 1
    %s4705 = scalar_lea.sflag [#allocation4], 1
    %4706 = vsyncpa %s4705, 1
    %4707 = vsyncpa [#allocation7], 1
    %4708 = vsyncpa [#allocation10], 1
    %4709 = vsyncpa [#allocation13], 1
    %4710 = vsyncpa [#allocation5], 1
    %s4711 = scalar_lea.sflag [#allocation5], 1
    %4712 = vsyncpa %s4711, 1

</llo_original>
